<compile_context>
chip_gen: v6e
topology: v6e:2x2x1
jax: 0.10.0
libtpu: 0.0.40
codegen_flags: <defaults>
</compile_context>

<pallas_src>
import functools

import jax
import jax.numpy as jnp
from jax import lax
from jax.experimental import pallas as pl
from jax.experimental.pallas import tpu as pltpu


# Sublane-aligned column offset of the pad-scratch interior (bf16 tile = (16, 128)).
_PAD_COL_OFF = 16


def _vmem_limit_bytes():
    # Generation-aware scoped-VMEM limit: leave >= 16 MiB headroom on v7x
    # (64 MiB physical VMEM), cap at 64 MiB on v5e/v6e (128 MiB physical).
    try:
        cap = int(getattr(pltpu.get_tpu_info(), "vmem_capacity_bytes",
                          128 * 1024 * 1024))
    except Exception:
        cap = 128 * 1024 * 1024
    return max(32 * 1024 * 1024, min(cap - 16 * 1024 * 1024, 64 * 1024 * 1024))


_VMEM_LIMIT = _vmem_limit_bytes()


# ----------------------------- Pallas kernel --------------------------------

def asff3_kernel(x1_ref, x2_ref, x3_ref,
                 w1_ref, b1_ref, w2_ref, b2_ref, w3_ref, b3_ref,
                 wl_ref, bl_ref, wc_ref, bc_ref,
                 out_ref, pad_ref):
    # x*_ref : (1, H, W, C)  bf16   whole image, resident across the row-tile axis
    # w1/2/3 : (C, CC) bf16         b1/2/3 : (1, CC) f32
    # wl     : (3*CC, 3) f32        bl     : (1, 3)  f32
    # wc     : (9*C, C) bf16        bc     : (1, C)  f32
    # out_ref: (1, TH, W, C)        one row tile of the output
    # pad_ref: (TH+2, W+2*S, C) bf16 scratch; interior at column offset S
    _, H, W, C = x1_ref.shape
    CC = w1_ref.shape[1]
    TH = out_ref.shape[1]
    S = (pad_ref.shape[1] - W) // 2            # sublane-aligned interior offset
    bf = jnp.bfloat16

    t = pl.program_id(1)
    NT = pl.num_programs(1)
    r0 = t * TH                                # first image row of this tile

    w1 = w1_ref[...]; w2 = w2_ref[...]; w3 = w3_ref[...]
    b1 = b1_ref[...]; b2 = b2_ref[...]; b3 = b3_ref[...]
    wl = wl_ref[...]; bl = bl_ref[...]

    def fused_rows(start, nrows):
        """Adaptive fusion for image rows [start, start+nrows).

        1x1 compress convs (BN folded) + ReLU, 3-way softmax over the level
        logits, softmax-weighted sum of the three inputs.
        Returns (nrows*W, C) bf16.
        """
        rw = nrows * W
        x1 = x1_ref[0, pl.ds(start, nrows)].reshape(rw, C)     # bf16
        x2 = x2_ref[0, pl.ds(start, nrows)].reshape(rw, C)
        x3 = x3_ref[0, pl.ds(start, nrows)].reshape(rw, C)

        # bf16 MXU operands, f32 accumulation.
        v1 = jnp.maximum(
            jnp.dot(x1, w1, preferred_element_type=jnp.float32) + b1, 0.0)
        v2 = jnp.maximum(
            jnp.dot(x2, w2, preferred_element_type=jnp.float32) + b2, 0.0)
        v3 = jnp.maximum(
            jnp.dot(x3, w3, preferred_element_type=jnp.float32) + b3, 0.0)

        # weight_levels: 1x1 conv on concat(v1,v2,v3) == sum of 3 partial dots.
        # Tiny (K=CC=8, N=3): kept in f32 so the (3*CC,3) weight slices stay on
        # the aligned f32 sublane tiling; negligible FLOPs.
        logits = (jnp.dot(v1, wl[0:CC, :], preferred_element_type=jnp.float32)
                  + jnp.dot(v2, wl[CC:2 * CC, :], preferred_element_type=jnp.float32)
                  + jnp.dot(v3, wl[2 * CC:3 * CC, :], preferred_element_type=jnp.float32)
                  + bl)                                         # (rw, 3) f32

        # 3-way softmax with elementwise column ops (VPU); exact reciprocal —
        # it is off the critical MXU path and essentially free.
        l0 = logits[:, 0:1]
        l1 = logits[:, 1:2]
        l2 = logits[:, 2:3]
        m = jnp.maximum(l0, jnp.maximum(l1, l2))
        e0 = jnp.exp(l0 - m)
        e1 = jnp.exp(l1 - m)
        e2 = jnp.exp(l2 - m)
        inv = pl.reciprocal(e0 + e1 + e2, approx=False)         # (rw, 1) f32

        # Adaptive fusion in bf16 (bf16 VALU on v6e/v7x; halves VPU op count
        # and the pad-scratch bandwidth).
        a0 = (e0 * inv).astype(bf)
        a1 = (e1 * inv).astype(bf)
        a2 = (e2 * inv).astype(bf)
        return x1 * a0 + x2 * a1 + x3 * a2                      # (rw, C) bf16

    # --- pad scratch for the 3x3 conv ---------------------------------------
    # Only the columns / rows actually read by the conv are (re)written every
    # step, so the scratch is correct regardless of how the (parallel) grid is
    # sharded across TensorCores.
    zero_col = jnp.zeros((TH + 2, 1, C), bf)
    pad_ref[:, S - 1:S, :] = zero_col                 # left  1-pixel halo column
    pad_ref[:, S + W:S + W + 1, :] = zero_col         # right 1-pixel halo column

    # Interior rows: fused features of this tile (sublane-aligned column offset S).
    pad_ref[1:TH + 1, S:S + W, :] = fused_rows(r0, TH).reshape(TH, W, C)

    # Top / bottom halo rows: recompute one neighbouring row, or zero at the
    # image boundary (2 extra rows of 1x1-conv work per tile — negligible).
    zero_row = jnp.zeros((1, W, C), bf)

    @pl.when(t == 0)
    def _():
        pad_ref[0:1, S:S + W, :] = zero_row

    @pl.when(t > 0)
    def _():
        pad_ref[0:1, S:S + W, :] = fused_rows(r0 - 1, 1).reshape(1, W, C)

    @pl.when(t == NT - 1)
    def _():
        pad_ref[TH + 1:TH + 2, S:S + W, :] = zero_row

    @pl.when(t < NT - 1)
    def _():
        pad_ref[TH + 1:TH + 2, S:S + W, :] = fused_rows(r0 + TH, 1).reshape(1, W, C)

    # --- 3x3 conv (pad=1) + folded BN + ReLU via 9 shifted matmuls ----------
    # dj (W shift) outer: 3 slab loads (1 aligned + 2 offset); di (H shift)
    # inner: free leading-dim slice.  Accumulator is initialized from the
    # first tap (no zero-fill + add pass).
    acc = None
    for dj in range(3):
        slab = pad_ref[:, S - 1 + dj:S - 1 + dj + W, :]          # (TH+2, W, C) bf16
        for di in range(3):
            patch = slab[di:di + TH].reshape(TH * W, C)          # leading-dim slice
            tap = wc_ref[(di * 3 + dj) * C:(di * 3 + dj + 1) * C, :]   # (C, C) bf16
            part = jnp.dot(patch, tap, preferred_element_type=jnp.float32)
            acc = part if acc is None else acc + part

    out = jnp.maximum(acc + bc_ref[...], 0.0)
    out_ref[...] = out.reshape(1, TH, W, C).astype(out_ref.dtype)


# ----------------------------- wrapper ---------------------------------------

@functools.partial(jax.jit, static_argnames=("tile_h",))
def asff3_pallas(x1, x2, x3, w1, b1, w2, b2, w3, b3, wl, bl, wc, bc, *, tile_h=8):
    N, H, W, C = x1.shape
    CC = w1.shape[1]
    if H % tile_h != 0:
        raise ValueError(f"H={H} must be divisible by tile_h={tile_h}")
    if W % 16 != 0:
        # Keeps the in-kernel (rows, W, C) <-> (rows*W, C) reshapes layout
        # no-ops for the bf16 (16, 128) tiling.
        raise ValueError(f"W={W} must be a multiple of 16")
    NT = H // tile_h
    out_dtype = x1.dtype

    # bf16 MXU / VPU operands; biases and the tiny wl stay f32.
    # NOTE(perf): in a full AFPN pipeline the producer should emit bf16
    # directly (no extra cast pass); the wrapper-side cast here keeps the
    # whole-image-resident input blocks at 2 B/elem of VMEM (v7x budget).
    bf = jnp.bfloat16
    x1b, x2b, x3b = x1.astype(bf), x2.astype(bf), x3.astype(bf)
    w1b, w2b, w3b = w1.astype(bf), w2.astype(bf), w3.astype(bf)
    wcb = wc.astype(bf)

    img = pl.BlockSpec((1, H, W, C), lambda b, t: (b, 0, 0, 0))       # resident per batch
    const2d = lambda shape: pl.BlockSpec(shape, lambda b, t: (0, 0))  # constant blocks
    out_spec = pl.BlockSpec((1, tile_h, W, C), lambda b, t: (b, t, 0, 0))

    grid_spec = pltpu.PrefetchScalarGridSpec(
        num_scalar_prefetch=0,
        grid=(N, NT),
        in_specs=[
            img, img, img,
            const2d((C, CC)), const2d((1, CC)),
            const2d((C, CC)), const2d((1, CC)),
            const2d((C, CC)), const2d((1, CC)),
            const2d((3 * CC, 3)), const2d((1, 3)),
            const2d((9 * C, C)), const2d((1, C)),
        ],
        out_specs=out_spec,
        scratch_shapes=[
            pltpu.VMEM((tile_h + 2, W + 2 * _PAD_COL_OFF, C), jnp.bfloat16)],
    )

    return pl.pallas_call(
        asff3_kernel,
        out_shape=jax.ShapeDtypeStruct((N, H, W, C), out_dtype),
        grid_spec=grid_spec,
        compiler_params=pltpu.CompilerParams(
            # Batch and row-tile steps are fully independent (each step writes
            # a disjoint output block and fully initializes what it reads of
            # the pad scratch) -> both axes can be megacore-sharded.
            dimension_semantics=("parallel", "parallel"),
            vmem_limit_bytes=_VMEM_LIMIT,
        ),
    )(x1b, x2b, x3b, w1b, b1, w2b, b2, w3b, b3, wl, bl, wcb, bc)


# ------------------------ parameter construction -----------------------------

def fold_bn(w, gamma, beta, mean, var, eps=1e-5):
    """Fold BatchNorm (eval) into a bias-free conv: y = (x*W)*s + (beta - mean*s)."""
    scale = gamma / jnp.sqrt(var + eps)           # (C_out,)
    return w * scale, beta - mean * scale         # scale broadcasts over last (C_out) axis


def make_params(key, inter_dim, compress_c):
    ks = jax.random.split(key, 16)
    i = iter(range(16))

    def bn(k, c):
        k1, k2, k3, k4 = jax.random.split(k, 4)
        gamma = 1.0 + 0.1 * jax.random.normal(k1, (c,), jnp.float32)
        beta = 0.1 * jax.random.normal(k2, (c,), jnp.float32)
        mean = 0.1 * jax.random.normal(k3, (c,), jnp.float32)
        var = jax.random.uniform(k4, (c,), jnp.float32, 0.5, 1.5)
        return gamma, beta, mean, var

    # weight_level_{1,2,3}: 1x1 conv inter_dim->compress_c, no bias, + BN
    def compress_branch():
        w = 0.2 * jax.random.normal(ks[next(i)], (inter_dim, compress_c), jnp.float32)
        return fold_bn(w, *bn(ks[next(i)], compress_c))

    w1, b1 = compress_branch()
    w2, b2 = compress_branch()
    w3, b3 = compress_branch()

    # weight_levels: 1x1 conv (3*compress_c)->3, with bias, no BN
    wl = 0.2 * jax.random.normal(ks[next(i)], (3 * compress_c, 3), jnp.float32)
    bl = 0.1 * jax.random.normal(ks[next(i)], (3,), jnp.float32)

    # final conv: 3x3 conv inter_dim->inter_dim, no bias, + BN  (HWIO layout)
    wc3 = (0.1 / 3.0) * jax.random.normal(
        ks[next(i)], (3, 3, inter_dim, inter_dim), jnp.float32)
    wc3, bc = fold_bn(wc3, *bn(ks[next(i)], inter_dim))

    return dict(
        w1=w1, b1=b1.reshape(1, -1),
        w2=w2, b2=b2.reshape(1, -1),
        w3=w3, b3=b3.reshape(1, -1),
        wl=wl, bl=bl.reshape(1, -1),
        wc3=wc3, wc=wc3.reshape(9 * inter_dim, inter_dim), bc=bc.reshape(1, -1),
    )


# ------------------------ pure-JAX reference ----------------------------------

def asff3_reference(x1, x2, x3, p):
    def conv1x1_relu(x, w, b):
        return jnp.maximum(jnp.einsum('nhwc,cd->nhwd', x, w) + b[0], 0.0)

    v1 = conv1x1_relu(x1, p['w1'], p['b1'])
    v2 = conv1x1_relu(x2, p['w2'], p['b2'])
    v3 = conv1x1_relu(x3, p['w3'], p['b3'])
    cat = jnp.concatenate([v1, v2, v3], axis=-1)
    logits = jnp.einsum('nhwc,cd->nhwd', cat, p['wl']) + p['bl'][0]
    sm = jax.nn.softmax(logits, axis=-1)
    fused = x1 * sm[..., 0:1] + x2 * sm[..., 1:2] + x3 * sm[..., 2:3]
    y = lax.conv_general_dilated(
        fused, p['wc3'], window_strides=(1, 1), padding='SAME',
        dimension_numbers=('NHWC', 'HWIO', 'NHWC'))
    return jnp.maximum(y + p['bc'][0], 0.0)


# ------------------------------- main -----------------------------------------

if __name__ == "__main__":
    N, H, W = 2, 16, 16
    INTER_DIM = 128         # small stand-in for the default 512; multiple of 128
                            # keeps the output lane dimension dense
    COMPRESS_C = 8
    TILE_H = 4              # 4 row tiles -> exercises boundary AND interior halos

    key = jax.random.PRNGKey(0)
    k1, k2, k3, kp = jax.random.split(key, 4)
    x1 = jax.random.normal(k1, (N, H, W, INTER_DIM), jnp.float32)
    x2 = jax.random.normal(k2, (N, H, W, INTER_DIM), jnp.float32)
    x3 = jax.random.normal(k3, (N, H, W, INTER_DIM), jnp.float32)

    p = make_params(kp, INTER_DIM, COMPRESS_C)

    out = asff3_pallas(x1, x2, x3,
                       p['w1'], p['b1'], p['w2'], p['b2'], p['w3'], p['b3'],
                       p['wl'], p['bl'], p['wc'], p['bc'],
                       tile_h=TILE_H)
    out = jax.block_until_ready(out)

    ref = jax.block_until_ready(asff3_reference(x1, x2, x3, p))
    assert out.shape == (N, H, W, INTER_DIM)
    err = float(jnp.max(jnp.abs(out - ref)))
    # bf16 MXU operands with 9*C (=1152) term accumulations vs. an all-f32
    # reference -> slightly looser absolute tolerance.
    assert jnp.allclose(out, ref, rtol=5e-2, atol=8e-2), err

    print("KERNEL_OK")
</pallas_src>

<mosaic_0001>
module attributes {stable_mosaic.version = 11 : i64} {
  func.func @asff3_kernel(%arg0: i32, %arg1: i32, %arg2: memref<1x16x16x128xbf16, #tpu.memory_space<vmem>>, %arg3: memref<1x16x16x128xbf16, #tpu.memory_space<vmem>>, %arg4: memref<1x16x16x128xbf16, #tpu.memory_space<vmem>>, %arg5: memref<128x8xbf16, #tpu.memory_space<vmem>>, %arg6: memref<1x8xf32, #tpu.memory_space<vmem>>, %arg7: memref<128x8xbf16, #tpu.memory_space<vmem>>, %arg8: memref<1x8xf32, #tpu.memory_space<vmem>>, %arg9: memref<128x8xbf16, #tpu.memory_space<vmem>>, %arg10: memref<1x8xf32, #tpu.memory_space<vmem>>, %arg11: memref<24x3xf32, #tpu.memory_space<vmem>>, %arg12: memref<1x3xf32, #tpu.memory_space<vmem>>, %arg13: memref<1152x128xbf16, #tpu.memory_space<vmem>>, %arg14: memref<1x128xf32, #tpu.memory_space<vmem>>, %arg15: memref<1x4x16x128xf32, #tpu.memory_space<vmem>>, %arg16: memref<6x48x128xbf16, #tpu.memory_space<vmem>>) attributes {dimension_semantics = [#tpu.dimension_semantics<parallel>, #tpu.dimension_semantics<parallel>], iteration_bounds = array<i64: 2, 4>, scalar_prefetch = 0 : i64, scratch_operands = 1 : i64, tpu.core_type = #tpu.core_type<tc>, window_params = [{transform_indices = @transform_0, window_bounds = array<i64: 1, 16, 16, 128>}, {transform_indices = @transform_1, window_bounds = array<i64: 1, 16, 16, 128>}, {transform_indices = @transform_2, window_bounds = array<i64: 1, 16, 16, 128>}, {pipeline_mode = #tpu.pipeline_mode<synchronous>, transform_indices = @transform_3, window_bounds = array<i64: 128, 8>}, {pipeline_mode = #tpu.pipeline_mode<synchronous>, transform_indices = @transform_4, window_bounds = array<i64: 1, 8>}, {pipeline_mode = #tpu.pipeline_mode<synchronous>, transform_indices = @transform_5, window_bounds = array<i64: 128, 8>}, {pipeline_mode = #tpu.pipeline_mode<synchronous>, transform_indices = @transform_6, window_bounds = array<i64: 1, 8>}, {pipeline_mode = #tpu.pipeline_mode<synchronous>, transform_indices = @transform_7, window_bounds = array<i64: 128, 8>}, {pipeline_mode = #tpu.pipeline_mode<synchronous>, transform_indices = @transform_8, window_bounds = array<i64: 1, 8>}, {pipeline_mode = #tpu.pipeline_mode<synchronous>, transform_indices = @transform_9, window_bounds = array<i64: 24, 3>}, {pipeline_mode = #tpu.pipeline_mode<synchronous>, transform_indices = @transform_10, window_bounds = array<i64: 1, 3>}, {pipeline_mode = #tpu.pipeline_mode<synchronous>, transform_indices = @transform_11, window_bounds = array<i64: 1152, 128>}, {pipeline_mode = #tpu.pipeline_mode<synchronous>, transform_indices = @transform_12, window_bounds = array<i64: 1, 128>}, {transform_indices = @transform_13, window_bounds = array<i64: 1, 4, 16, 128>}]} {
    %c4_i32 = arith.constant 4 : i32
    %0 = arith.muli %arg1, %c4_i32 : i32
    %c0 = arith.constant 0 : index
    %c0_0 = arith.constant 0 : index
    %1 = vector.load %arg5[%c0, %c0_0] : memref<128x8xbf16, #tpu.memory_space<vmem>>, vector<128x8xbf16>
    %c0_1 = arith.constant 0 : index
    %c0_2 = arith.constant 0 : index
    %2 = vector.load %arg7[%c0_1, %c0_2] : memref<128x8xbf16, #tpu.memory_space<vmem>>, vector<128x8xbf16>
    %c0_3 = arith.constant 0 : index
    %c0_4 = arith.constant 0 : index
    %3 = vector.load %arg9[%c0_3, %c0_4] : memref<128x8xbf16, #tpu.memory_space<vmem>>, vector<128x8xbf16>
    %c0_5 = arith.constant 0 : index
    %c0_6 = arith.constant 0 : index
    %4 = vector.load %arg6[%c0_5, %c0_6] : memref<1x8xf32, #tpu.memory_space<vmem>>, vector<1x8xf32>
    %c0_7 = arith.constant 0 : index
    %c0_8 = arith.constant 0 : index
    %5 = vector.load %arg8[%c0_7, %c0_8] : memref<1x8xf32, #tpu.memory_space<vmem>>, vector<1x8xf32>
    %c0_9 = arith.constant 0 : index
    %c0_10 = arith.constant 0 : index
    %6 = vector.load %arg10[%c0_9, %c0_10] : memref<1x8xf32, #tpu.memory_space<vmem>>, vector<1x8xf32>
    %c0_11 = arith.constant 0 : index
    %c0_12 = arith.constant 0 : index
    %7 = vector.load %arg11[%c0_11, %c0_12] : memref<24x3xf32, #tpu.memory_space<vmem>>, vector<24x3xf32>
    %c0_13 = arith.constant 0 : index
    %c0_14 = arith.constant 0 : index
    %8 = vector.load %arg12[%c0_13, %c0_14] : memref<1x3xf32, #tpu.memory_space<vmem>>, vector<1x3xf32>
    %cst = arith.constant 0.000000e+00 : bf16
    %9 = vector.broadcast %cst : bf16 to vector<6x1x128xbf16>
    %c0_15 = arith.constant 0 : index
    %c15 = arith.constant 15 : index
    %c0_16 = arith.constant 0 : index
    %10 = vector.load %arg16[%c0_15, %c15, %c0_16] : memref<6x48x128xbf16, #tpu.memory_space<vmem>>, vector<6x1x128xbf16>
    tpu.vector_store %arg16[%c0_15, %c15, %c0_16], %9 {strides = array<i32>} : memref<6x48x128xbf16, #tpu.memory_space<vmem>>, vector<6x1x128xbf16>,
    %c0_17 = arith.constant 0 : index
    %c32 = arith.constant 32 : index
    %c0_18 = arith.constant 0 : index
    %11 = vector.load %arg16[%c0_17, %c32, %c0_18] : memref<6x48x128xbf16, #tpu.memory_space<vmem>>, vector<6x1x128xbf16>
    tpu.vector_store %arg16[%c0_17, %c32, %c0_18], %9 {strides = array<i32>} : memref<6x48x128xbf16, #tpu.memory_space<vmem>>, vector<6x1x128xbf16>,
    %c0_19 = arith.constant 0 : index
    %12 = arith.index_cast %0 : i32 to index
    %c0_20 = arith.constant 0 : index
    %c0_21 = arith.constant 0 : index
    %13 = vector.load %arg2[%c0_19, %12, %c0_20, %c0_21] : memref<1x16x16x128xbf16, #tpu.memory_space<vmem>>, vector<1x4x16x128xbf16>
    %14 = vector.shape_cast %13 : vector<1x4x16x128xbf16> to vector<4x16x128xbf16>
    %15 = vector.shape_cast %14 : vector<4x16x128xbf16> to vector<64x128xbf16>
    %c0_22 = arith.constant 0 : index
    %16 = arith.index_cast %0 : i32 to index
    %c0_23 = arith.constant 0 : index
    %c0_24 = arith.constant 0 : index
    %17 = vector.load %arg3[%c0_22, %16, %c0_23, %c0_24] : memref<1x16x16x128xbf16, #tpu.memory_space<vmem>>, vector<1x4x16x128xbf16>
    %18 = vector.shape_cast %17 : vector<1x4x16x128xbf16> to vector<4x16x128xbf16>
    %19 = vector.shape_cast %18 : vector<4x16x128xbf16> to vector<64x128xbf16>
    %c0_25 = arith.constant 0 : index
    %20 = arith.index_cast %0 : i32 to index
    %c0_26 = arith.constant 0 : index
    %c0_27 = arith.constant 0 : index
    %21 = vector.load %arg4[%c0_25, %20, %c0_26, %c0_27] : memref<1x16x16x128xbf16, #tpu.memory_space<vmem>>, vector<1x4x16x128xbf16>
    %22 = vector.shape_cast %21 : vector<1x4x16x128xbf16> to vector<4x16x128xbf16>
    %23 = vector.shape_cast %22 : vector<4x16x128xbf16> to vector<64x128xbf16>
    %cst_28 = arith.constant dense<0.000000e+00> : vector<64x8xf32>
    %24 = tpu.matmul %15, %1, %cst_28 {dimension_numbers = #tpu.dot_dimension_numbers<[1], [0], [0], [1], [0, 0, 1, 1], [], []>} : vector<64x128xbf16>, vector<128x8xbf16>, vector<64x8xf32> -> vector<64x8xf32>
    %25 = vector.broadcast %4 : vector<1x8xf32> to vector<64x8xf32>
    %26 = arith.addf %24, %25 : vector<64x8xf32>
    %cst_29 = arith.constant 0.000000e+00 : f32
    %27 = vector.broadcast %cst_29 : f32 to vector<64x8xf32>
    %28 = arith.maximumf %26, %27 : vector<64x8xf32>
    %cst_30 = arith.constant dense<0.000000e+00> : vector<64x8xf32>
    %29 = tpu.matmul %19, %2, %cst_30 {dimension_numbers = #tpu.dot_dimension_numbers<[1], [0], [0], [1], [0, 0, 1, 1], [], []>} : vector<64x128xbf16>, vector<128x8xbf16>, vector<64x8xf32> -> vector<64x8xf32>
    %30 = vector.broadcast %5 : vector<1x8xf32> to vector<64x8xf32>
    %31 = arith.addf %29, %30 : vector<64x8xf32>
    %cst_31 = arith.constant 0.000000e+00 : f32
    %32 = vector.broadcast %cst_31 : f32 to vector<64x8xf32>
    %33 = arith.maximumf %31, %32 : vector<64x8xf32>
    %cst_32 = arith.constant dense<0.000000e+00> : vector<64x8xf32>
    %34 = tpu.matmul %23, %3, %cst_32 {dimension_numbers = #tpu.dot_dimension_numbers<[1], [0], [0], [1], [0, 0, 1, 1], [], []>} : vector<64x128xbf16>, vector<128x8xbf16>, vector<64x8xf32> -> vector<64x8xf32>
    %35 = vector.broadcast %6 : vector<1x8xf32> to vector<64x8xf32>
    %36 = arith.addf %34, %35 : vector<64x8xf32>
    %cst_33 = arith.constant 0.000000e+00 : f32
    %37 = vector.broadcast %cst_33 : f32 to vector<64x8xf32>
    %38 = arith.maximumf %36, %37 : vector<64x8xf32>
    %39 = vector.extract_strided_slice %7 {offsets = [0, 0], sizes = [8, 3], strides = [1, 1]} : vector<24x3xf32> to vector<8x3xf32>
    %cst_34 = arith.constant dense<0.000000e+00> : vector<64x3xf32>
    %40 = tpu.matmul %28, %39, %cst_34 {dimension_numbers = #tpu.dot_dimension_numbers<[1], [0], [0], [1], [0, 0, 1, 1], [], []>} : vector<64x8xf32>, vector<8x3xf32>, vector<64x3xf32> -> vector<64x3xf32>
    %41 = vector.extract_strided_slice %7 {offsets = [8, 0], sizes = [8, 3], strides = [1, 1]} : vector<24x3xf32> to vector<8x3xf32>
    %cst_35 = arith.constant dense<0.000000e+00> : vector<64x3xf32>
    %42 = tpu.matmul %33, %41, %cst_35 {dimension_numbers = #tpu.dot_dimension_numbers<[1], [0], [0], [1], [0, 0, 1, 1], [], []>} : vector<64x8xf32>, vector<8x3xf32>, vector<64x3xf32> -> vector<64x3xf32>
    %43 = arith.addf %40, %42 : vector<64x3xf32>
    %44 = vector.extract_strided_slice %7 {offsets = [16, 0], sizes = [8, 3], strides = [1, 1]} : vector<24x3xf32> to vector<8x3xf32>
    %cst_36 = arith.constant dense<0.000000e+00> : vector<64x3xf32>
    %45 = tpu.matmul %38, %44, %cst_36 {dimension_numbers = #tpu.dot_dimension_numbers<[1], [0], [0], [1], [0, 0, 1, 1], [], []>} : vector<64x8xf32>, vector<8x3xf32>, vector<64x3xf32> -> vector<64x3xf32>
    %46 = arith.addf %43, %45 : vector<64x3xf32>
    %47 = vector.broadcast %8 : vector<1x3xf32> to vector<64x3xf32>
    %48 = arith.addf %46, %47 : vector<64x3xf32>
    %49 = vector.extract_strided_slice %48 {offsets = [0, 0], sizes = [64, 1], strides = [1, 1]} : vector<64x3xf32> to vector<64x1xf32>
    %50 = vector.extract_strided_slice %48 {offsets = [0, 1], sizes = [64, 1], strides = [1, 1]} : vector<64x3xf32> to vector<64x1xf32>
    %51 = vector.extract_strided_slice %48 {offsets = [0, 2], sizes = [64, 1], strides = [1, 1]} : vector<64x3xf32> to vector<64x1xf32>
    %52 = arith.maximumf %50, %51 : vector<64x1xf32>
    %53 = arith.maximumf %49, %52 : vector<64x1xf32>
    %54 = arith.subf %49, %53 : vector<64x1xf32>
    %55 = math.exp %54 : vector<64x1xf32>
    %56 = arith.subf %50, %53 : vector<64x1xf32>
    %57 = math.exp %56 : vector<64x1xf32>
    %58 = arith.subf %51, %53 : vector<64x1xf32>
    %59 = math.exp %58 : vector<64x1xf32>
    %60 = arith.addf %55, %57 : vector<64x1xf32>
    %61 = arith.addf %60, %59 : vector<64x1xf32>
    %62 = tpu.reciprocal %61 : vector<64x1xf32> -> vector<64x1xf32>
    %63 = arith.mulf %55, %62 : vector<64x1xf32>
    %64 = arith.truncf %63 : vector<64x1xf32> to vector<64x1xbf16>
    %65 = arith.mulf %57, %62 : vector<64x1xf32>
    %66 = arith.truncf %65 : vector<64x1xf32> to vector<64x1xbf16>
    %67 = arith.mulf %59, %62 : vector<64x1xf32>
    %68 = arith.truncf %67 : vector<64x1xf32> to vector<64x1xbf16>
    %69 = vector.broadcast %64 : vector<64x1xbf16> to vector<64x128xbf16>
    %70 = arith.mulf %15, %69 : vector<64x128xbf16>
    %71 = vector.broadcast %66 : vector<64x1xbf16> to vector<64x128xbf16>
    %72 = arith.mulf %19, %71 : vector<64x128xbf16>
    %73 = arith.addf %70, %72 : vector<64x128xbf16>
    %74 = vector.broadcast %68 : vector<64x1xbf16> to vector<64x128xbf16>
    %75 = arith.mulf %23, %74 : vector<64x128xbf16>
    %76 = arith.addf %73, %75 : vector<64x128xbf16>
    %77 = vector.shape_cast %76 : vector<64x128xbf16> to vector<4x16x128xbf16>
    %c1 = arith.constant 1 : index
    %c16 = arith.constant 16 : index
    %c0_37 = arith.constant 0 : index
    %78 = vector.load %arg16[%c1, %c16, %c0_37] : memref<6x48x128xbf16, #tpu.memory_space<vmem>>, vector<4x16x128xbf16>
    tpu.vector_store %arg16[%c1, %c16, %c0_37], %77 {strides = array<i32>} : memref<6x48x128xbf16, #tpu.memory_space<vmem>>, vector<4x16x128xbf16>,
    %cst_38 = arith.constant 0.000000e+00 : bf16
    %79 = vector.broadcast %cst_38 : bf16 to vector<1x16x128xbf16>
    %c0_i32 = arith.constant 0 : i32
    %80 = arith.cmpi eq, %arg1, %c0_i32 : i32
    %81 = arith.extui %80 : i1 to i32
    %c0_i32_39 = arith.constant 0 : i32
    %82 = arith.cmpi ne, %81, %c0_i32_39 : i32
    scf.if %82 {
      %c0_79 = arith.constant 0 : index
      %c16_80 = arith.constant 16 : index
      %c0_81 = arith.constant 0 : index
      %146 = vector.load %arg16[%c0_79, %c16_80, %c0_81] : memref<6x48x128xbf16, #tpu.memory_space<vmem>>, vector<1x16x128xbf16>
      tpu.vector_store %arg16[%c0_79, %c16_80, %c0_81], %79 {strides = array<i32>} : memref<6x48x128xbf16, #tpu.memory_space<vmem>>, vector<1x16x128xbf16>,
    } else {
    }
    %c0_i32_40 = arith.constant 0 : i32
    %83 = arith.cmpi sgt, %arg1, %c0_i32_40 : i32
    %84 = arith.extui %83 : i1 to i32
    %c0_i32_41 = arith.constant 0 : i32
    %85 = arith.cmpi ne, %84, %c0_i32_41 : i32
    scf.if %85 {
      %c1_i32 = arith.constant 1 : i32
      %146 = arith.subi %0, %c1_i32 : i32
      %c0_79 = arith.constant 0 : index
      %147 = arith.index_cast %146 : i32 to index
      %c0_80 = arith.constant 0 : index
      %c0_81 = arith.constant 0 : index
      %148 = vector.load %arg2[%c0_79, %147, %c0_80, %c0_81] : memref<1x16x16x128xbf16, #tpu.memory_space<vmem>>, vector<1x1x16x128xbf16>
      %149 = vector.shape_cast %148 : vector<1x1x16x128xbf16> to vector<1x16x128xbf16>
      %150 = vector.shape_cast %149 : vector<1x16x128xbf16> to vector<16x128xbf16>
      %c0_82 = arith.constant 0 : index
      %151 = arith.index_cast %146 : i32 to index
      %c0_83 = arith.constant 0 : index
      %c0_84 = arith.constant 0 : index
      %152 = vector.load %arg3[%c0_82, %151, %c0_83, %c0_84] : memref<1x16x16x128xbf16, #tpu.memory_space<vmem>>, vector<1x1x16x128xbf16>
      %153 = vector.shape_cast %152 : vector<1x1x16x128xbf16> to vector<1x16x128xbf16>
      %154 = vector.shape_cast %153 : vector<1x16x128xbf16> to vector<16x128xbf16>
      %c0_85 = arith.constant 0 : index
      %155 = arith.index_cast %146 : i32 to index
      %c0_86 = arith.constant 0 : index
      %c0_87 = arith.constant 0 : index
      %156 = vector.load %arg4[%c0_85, %155, %c0_86, %c0_87] : memref<1x16x16x128xbf16, #tpu.memory_space<vmem>>, vector<1x1x16x128xbf16>
      %157 = vector.shape_cast %156 : vector<1x1x16x128xbf16> to vector<1x16x128xbf16>
      %158 = vector.shape_cast %157 : vector<1x16x128xbf16> to vector<16x128xbf16>
      %cst_88 = arith.constant dense<0.000000e+00> : vector<16x8xf32>
      %159 = tpu.matmul %150, %1, %cst_88 {dimension_numbers = #tpu.dot_dimension_numbers<[1], [0], [0], [1], [0, 0, 1, 1], [], []>} : vector<16x128xbf16>, vector<128x8xbf16>, vector<16x8xf32> -> vector<16x8xf32>
      %160 = vector.broadcast %4 : vector<1x8xf32> to vector<16x8xf32>
      %161 = arith.addf %159, %160 : vector<16x8xf32>
      %cst_89 = arith.constant 0.000000e+00 : f32
      %162 = vector.broadcast %cst_89 : f32 to vector<16x8xf32>
      %163 = arith.maximumf %161, %162 : vector<16x8xf32>
      %cst_90 = arith.constant dense<0.000000e+00> : vector<16x8xf32>
      %164 = tpu.matmul %154, %2, %cst_90 {dimension_numbers = #tpu.dot_dimension_numbers<[1], [0], [0], [1], [0, 0, 1, 1], [], []>} : vector<16x128xbf16>, vector<128x8xbf16>, vector<16x8xf32> -> vector<16x8xf32>
      %165 = vector.broadcast %5 : vector<1x8xf32> to vector<16x8xf32>
      %166 = arith.addf %164, %165 : vector<16x8xf32>
      %cst_91 = arith.constant 0.000000e+00 : f32
      %167 = vector.broadcast %cst_91 : f32 to vector<16x8xf32>
      %168 = arith.maximumf %166, %167 : vector<16x8xf32>
      %cst_92 = arith.constant dense<0.000000e+00> : vector<16x8xf32>
      %169 = tpu.matmul %158, %3, %cst_92 {dimension_numbers = #tpu.dot_dimension_numbers<[1], [0], [0], [1], [0, 0, 1, 1], [], []>} : vector<16x128xbf16>, vector<128x8xbf16>, vector<16x8xf32> -> vector<16x8xf32>
      %170 = vector.broadcast %6 : vector<1x8xf32> to vector<16x8xf32>
      %171 = arith.addf %169, %170 : vector<16x8xf32>
      %cst_93 = arith.constant 0.000000e+00 : f32
      %172 = vector.broadcast %cst_93 : f32 to vector<16x8xf32>
      %173 = arith.maximumf %171, %172 : vector<16x8xf32>
      %174 = vector.extract_strided_slice %7 {offsets = [0, 0], sizes = [8, 3], strides = [1, 1]} : vector<24x3xf32> to vector<8x3xf32>
      %cst_94 = arith.constant dense<0.000000e+00> : vector<16x3xf32>
      %175 = tpu.matmul %163, %174, %cst_94 {dimension_numbers = #tpu.dot_dimension_numbers<[1], [0], [0], [1], [0, 0, 1, 1], [], []>} : vector<16x8xf32>, vector<8x3xf32>, vector<16x3xf32> -> vector<16x3xf32>
      %176 = vector.extract_strided_slice %7 {offsets = [8, 0], sizes = [8, 3], strides = [1, 1]} : vector<24x3xf32> to vector<8x3xf32>
      %cst_95 = arith.constant dense<0.000000e+00> : vector<16x3xf32>
      %177 = tpu.matmul %168, %176, %cst_95 {dimension_numbers = #tpu.dot_dimension_numbers<[1], [0], [0], [1], [0, 0, 1, 1], [], []>} : vector<16x8xf32>, vector<8x3xf32>, vector<16x3xf32> -> vector<16x3xf32>
      %178 = arith.addf %175, %177 : vector<16x3xf32>
      %179 = vector.extract_strided_slice %7 {offsets = [16, 0], sizes = [8, 3], strides = [1, 1]} : vector<24x3xf32> to vector<8x3xf32>
      %cst_96 = arith.constant dense<0.000000e+00> : vector<16x3xf32>
      %180 = tpu.matmul %173, %179, %cst_96 {dimension_numbers = #tpu.dot_dimension_numbers<[1], [0], [0], [1], [0, 0, 1, 1], [], []>} : vector<16x8xf32>, vector<8x3xf32>, vector<16x3xf32> -> vector<16x3xf32>
      %181 = arith.addf %178, %180 : vector<16x3xf32>
      %182 = vector.broadcast %8 : vector<1x3xf32> to vector<16x3xf32>
      %183 = arith.addf %181, %182 : vector<16x3xf32>
      %184 = vector.extract_strided_slice %183 {offsets = [0, 0], sizes = [16, 1], strides = [1, 1]} : vector<16x3xf32> to vector<16x1xf32>
      %185 = vector.extract_strided_slice %183 {offsets = [0, 1], sizes = [16, 1], strides = [1, 1]} : vector<16x3xf32> to vector<16x1xf32>
      %186 = vector.extract_strided_slice %183 {offsets = [0, 2], sizes = [16, 1], strides = [1, 1]} : vector<16x3xf32> to vector<16x1xf32>
      %187 = arith.maximumf %185, %186 : vector<16x1xf32>
      %188 = arith.maximumf %184, %187 : vector<16x1xf32>
      %189 = arith.subf %184, %188 : vector<16x1xf32>
      %190 = math.exp %189 : vector<16x1xf32>
      %191 = arith.subf %185, %188 : vector<16x1xf32>
      %192 = math.exp %191 : vector<16x1xf32>
      %193 = arith.subf %186, %188 : vector<16x1xf32>
      %194 = math.exp %193 : vector<16x1xf32>
      %195 = arith.addf %190, %192 : vector<16x1xf32>
      %196 = arith.addf %195, %194 : vector<16x1xf32>
      %197 = tpu.reciprocal %196 : vector<16x1xf32> -> vector<16x1xf32>
      %198 = arith.mulf %190, %197 : vector<16x1xf32>
      %199 = arith.truncf %198 : vector<16x1xf32> to vector<16x1xbf16>
      %200 = arith.mulf %192, %197 : vector<16x1xf32>
      %201 = arith.truncf %200 : vector<16x1xf32> to vector<16x1xbf16>
      %202 = arith.mulf %194, %197 : vector<16x1xf32>
      %203 = arith.truncf %202 : vector<16x1xf32> to vector<16x1xbf16>
      %204 = vector.broadcast %199 : vector<16x1xbf16> to vector<16x128xbf16>
      %205 = arith.mulf %150, %204 : vector<16x128xbf16>
      %206 = vector.broadcast %201 : vector<16x1xbf16> to vector<16x128xbf16>
      %207 = arith.mulf %154, %206 : vector<16x128xbf16>
      %208 = arith.addf %205, %207 : vector<16x128xbf16>
      %209 = vector.broadcast %203 : vector<16x1xbf16> to vector<16x128xbf16>
      %210 = arith.mulf %158, %209 : vector<16x128xbf16>
      %211 = arith.addf %208, %210 : vector<16x128xbf16>
      %212 = vector.shape_cast %211 : vector<16x128xbf16> to vector<1x16x128xbf16>
      %c0_97 = arith.constant 0 : index
      %c16_98 = arith.constant 16 : index
      %c0_99 = arith.constant 0 : index
      %213 = vector.load %arg16[%c0_97, %c16_98, %c0_99] : memref<6x48x128xbf16, #tpu.memory_space<vmem>>, vector<1x16x128xbf16>
      tpu.vector_store %arg16[%c0_97, %c16_98, %c0_99], %212 {strides = array<i32>} : memref<6x48x128xbf16, #tpu.memory_space<vmem>>, vector<1x16x128xbf16>,
    } else {
    }
    %c3_i32 = arith.constant 3 : i32
    %86 = arith.cmpi eq, %arg1, %c3_i32 : i32
    %87 = arith.extui %86 : i1 to i32
    %c0_i32_42 = arith.constant 0 : i32
    %88 = arith.cmpi ne, %87, %c0_i32_42 : i32
    scf.if %88 {
      %c5 = arith.constant 5 : index
      %c16_79 = arith.constant 16 : index
      %c0_80 = arith.constant 0 : index
      %146 = vector.load %arg16[%c5, %c16_79, %c0_80] : memref<6x48x128xbf16, #tpu.memory_space<vmem>>, vector<1x16x128xbf16>
      tpu.vector_store %arg16[%c5, %c16_79, %c0_80], %79 {strides = array<i32>} : memref<6x48x128xbf16, #tpu.memory_space<vmem>>, vector<1x16x128xbf16>,
    } else {
    }
    %c3_i32_43 = arith.constant 3 : i32
    %89 = arith.cmpi slt, %arg1, %c3_i32_43 : i32
    %90 = arith.extui %89 : i1 to i32
    %c0_i32_44 = arith.constant 0 : i32
    %91 = arith.cmpi ne, %90, %c0_i32_44 : i32
    scf.if %91 {
      %c4_i32_79 = arith.constant 4 : i32
      %146 = arith.addi %0, %c4_i32_79 : i32
      %c0_80 = arith.constant 0 : index
      %147 = arith.index_cast %146 : i32 to index
      %c0_81 = arith.constant 0 : index
      %c0_82 = arith.constant 0 : index
      %148 = vector.load %arg2[%c0_80, %147, %c0_81, %c0_82] : memref<1x16x16x128xbf16, #tpu.memory_space<vmem>>, vector<1x1x16x128xbf16>
      %149 = vector.shape_cast %148 : vector<1x1x16x128xbf16> to vector<1x16x128xbf16>
      %150 = vector.shape_cast %149 : vector<1x16x128xbf16> to vector<16x128xbf16>
      %c0_83 = arith.constant 0 : index
      %151 = arith.index_cast %146 : i32 to index
      %c0_84 = arith.constant 0 : index
      %c0_85 = arith.constant 0 : index
      %152 = vector.load %arg3[%c0_83, %151, %c0_84, %c0_85] : memref<1x16x16x128xbf16, #tpu.memory_space<vmem>>, vector<1x1x16x128xbf16>
      %153 = vector.shape_cast %152 : vector<1x1x16x128xbf16> to vector<1x16x128xbf16>
      %154 = vector.shape_cast %153 : vector<1x16x128xbf16> to vector<16x128xbf16>
      %c0_86 = arith.constant 0 : index
      %155 = arith.index_cast %146 : i32 to index
      %c0_87 = arith.constant 0 : index
      %c0_88 = arith.constant 0 : index
      %156 = vector.load %arg4[%c0_86, %155, %c0_87, %c0_88] : memref<1x16x16x128xbf16, #tpu.memory_space<vmem>>, vector<1x1x16x128xbf16>
      %157 = vector.shape_cast %156 : vector<1x1x16x128xbf16> to vector<1x16x128xbf16>
      %158 = vector.shape_cast %157 : vector<1x16x128xbf16> to vector<16x128xbf16>
      %cst_89 = arith.constant dense<0.000000e+00> : vector<16x8xf32>
      %159 = tpu.matmul %150, %1, %cst_89 {dimension_numbers = #tpu.dot_dimension_numbers<[1], [0], [0], [1], [0, 0, 1, 1], [], []>} : vector<16x128xbf16>, vector<128x8xbf16>, vector<16x8xf32> -> vector<16x8xf32>
      %160 = vector.broadcast %4 : vector<1x8xf32> to vector<16x8xf32>
      %161 = arith.addf %159, %160 : vector<16x8xf32>
      %cst_90 = arith.constant 0.000000e+00 : f32
      %162 = vector.broadcast %cst_90 : f32 to vector<16x8xf32>
      %163 = arith.maximumf %161, %162 : vector<16x8xf32>
      %cst_91 = arith.constant dense<0.000000e+00> : vector<16x8xf32>
      %164 = tpu.matmul %154, %2, %cst_91 {dimension_numbers = #tpu.dot_dimension_numbers<[1], [0], [0], [1], [0, 0, 1, 1], [], []>} : vector<16x128xbf16>, vector<128x8xbf16>, vector<16x8xf32> -> vector<16x8xf32>
      %165 = vector.broadcast %5 : vector<1x8xf32> to vector<16x8xf32>
      %166 = arith.addf %164, %165 : vector<16x8xf32>
      %cst_92 = arith.constant 0.000000e+00 : f32
      %167 = vector.broadcast %cst_92 : f32 to vector<16x8xf32>
      %168 = arith.maximumf %166, %167 : vector<16x8xf32>
      %cst_93 = arith.constant dense<0.000000e+00> : vector<16x8xf32>
      %169 = tpu.matmul %158, %3, %cst_93 {dimension_numbers = #tpu.dot_dimension_numbers<[1], [0], [0], [1], [0, 0, 1, 1], [], []>} : vector<16x128xbf16>, vector<128x8xbf16>, vector<16x8xf32> -> vector<16x8xf32>
      %170 = vector.broadcast %6 : vector<1x8xf32> to vector<16x8xf32>
      %171 = arith.addf %169, %170 : vector<16x8xf32>
      %cst_94 = arith.constant 0.000000e+00 : f32
      %172 = vector.broadcast %cst_94 : f32 to vector<16x8xf32>
      %173 = arith.maximumf %171, %172 : vector<16x8xf32>
      %174 = vector.extract_strided_slice %7 {offsets = [0, 0], sizes = [8, 3], strides = [1, 1]} : vector<24x3xf32> to vector<8x3xf32>
      %cst_95 = arith.constant dense<0.000000e+00> : vector<16x3xf32>
      %175 = tpu.matmul %163, %174, %cst_95 {dimension_numbers = #tpu.dot_dimension_numbers<[1], [0], [0], [1], [0, 0, 1, 1], [], []>} : vector<16x8xf32>, vector<8x3xf32>, vector<16x3xf32> -> vector<16x3xf32>
      %176 = vector.extract_strided_slice %7 {offsets = [8, 0], sizes = [8, 3], strides = [1, 1]} : vector<24x3xf32> to vector<8x3xf32>
      %cst_96 = arith.constant dense<0.000000e+00> : vector<16x3xf32>
      %177 = tpu.matmul %168, %176, %cst_96 {dimension_numbers = #tpu.dot_dimension_numbers<[1], [0], [0], [1], [0, 0, 1, 1], [], []>} : vector<16x8xf32>, vector<8x3xf32>, vector<16x3xf32> -> vector<16x3xf32>
      %178 = arith.addf %175, %177 : vector<16x3xf32>
      %179 = vector.extract_strided_slice %7 {offsets = [16, 0], sizes = [8, 3], strides = [1, 1]} : vector<24x3xf32> to vector<8x3xf32>
      %cst_97 = arith.constant dense<0.000000e+00> : vector<16x3xf32>
      %180 = tpu.matmul %173, %179, %cst_97 {dimension_numbers = #tpu.dot_dimension_numbers<[1], [0], [0], [1], [0, 0, 1, 1], [], []>} : vector<16x8xf32>, vector<8x3xf32>, vector<16x3xf32> -> vector<16x3xf32>
      %181 = arith.addf %178, %180 : vector<16x3xf32>
      %182 = vector.broadcast %8 : vector<1x3xf32> to vector<16x3xf32>
      %183 = arith.addf %181, %182 : vector<16x3xf32>
      %184 = vector.extract_strided_slice %183 {offsets = [0, 0], sizes = [16, 1], strides = [1, 1]} : vector<16x3xf32> to vector<16x1xf32>
      %185 = vector.extract_strided_slice %183 {offsets = [0, 1], sizes = [16, 1], strides = [1, 1]} : vector<16x3xf32> to vector<16x1xf32>
      %186 = vector.extract_strided_slice %183 {offsets = [0, 2], sizes = [16, 1], strides = [1, 1]} : vector<16x3xf32> to vector<16x1xf32>
      %187 = arith.maximumf %185, %186 : vector<16x1xf32>
      %188 = arith.maximumf %184, %187 : vector<16x1xf32>
      %189 = arith.subf %184, %188 : vector<16x1xf32>
      %190 = math.exp %189 : vector<16x1xf32>
      %191 = arith.subf %185, %188 : vector<16x1xf32>
      %192 = math.exp %191 : vector<16x1xf32>
      %193 = arith.subf %186, %188 : vector<16x1xf32>
      %194 = math.exp %193 : vector<16x1xf32>
      %195 = arith.addf %190, %192 : vector<16x1xf32>
      %196 = arith.addf %195, %194 : vector<16x1xf32>
      %197 = tpu.reciprocal %196 : vector<16x1xf32> -> vector<16x1xf32>
      %198 = arith.mulf %190, %197 : vector<16x1xf32>
      %199 = arith.truncf %198 : vector<16x1xf32> to vector<16x1xbf16>
      %200 = arith.mulf %192, %197 : vector<16x1xf32>
      %201 = arith.truncf %200 : vector<16x1xf32> to vector<16x1xbf16>
      %202 = arith.mulf %194, %197 : vector<16x1xf32>
      %203 = arith.truncf %202 : vector<16x1xf32> to vector<16x1xbf16>
      %204 = vector.broadcast %199 : vector<16x1xbf16> to vector<16x128xbf16>
      %205 = arith.mulf %150, %204 : vector<16x128xbf16>
      %206 = vector.broadcast %201 : vector<16x1xbf16> to vector<16x128xbf16>
      %207 = arith.mulf %154, %206 : vector<16x128xbf16>
      %208 = arith.addf %205, %207 : vector<16x128xbf16>
      %209 = vector.broadcast %203 : vector<16x1xbf16> to vector<16x128xbf16>
      %210 = arith.mulf %158, %209 : vector<16x128xbf16>
      %211 = arith.addf %208, %210 : vector<16x128xbf16>
      %212 = vector.shape_cast %211 : vector<16x128xbf16> to vector<1x16x128xbf16>
      %c5 = arith.constant 5 : index
      %c16_98 = arith.constant 16 : index
      %c0_99 = arith.constant 0 : index
      %213 = vector.load %arg16[%c5, %c16_98, %c0_99] : memref<6x48x128xbf16, #tpu.memory_space<vmem>>, vector<1x16x128xbf16>
      tpu.vector_store %arg16[%c5, %c16_98, %c0_99], %212 {strides = array<i32>} : memref<6x48x128xbf16, #tpu.memory_space<vmem>>, vector<1x16x128xbf16>,
    } else {
    }
    %c0_45 = arith.constant 0 : index
    %c15_46 = arith.constant 15 : index
    %c0_47 = arith.constant 0 : index
    %92 = vector.load %arg16[%c0_45, %c15_46, %c0_47] : memref<6x48x128xbf16, #tpu.memory_space<vmem>>, vector<6x16x128xbf16>
    %93 = vector.extract_strided_slice %92 {offsets = [0, 0, 0], sizes = [4, 16, 128], strides = [1, 1, 1]} : vector<6x16x128xbf16> to vector<4x16x128xbf16>
    %94 = vector.shape_cast %93 : vector<4x16x128xbf16> to vector<64x128xbf16>
    %c0_48 = arith.constant 0 : index
    %c0_49 = arith.constant 0 : index
    %95 = vector.load %arg13[%c0_48, %c0_49] : memref<1152x128xbf16, #tpu.memory_space<vmem>>, vector<128x128xbf16>
    %cst_50 = arith.constant dense<0.000000e+00> : vector<64x128xf32>
    %96 = tpu.matmul %94, %95, %cst_50 {dimension_numbers = #tpu.dot_dimension_numbers<[1], [0], [0], [1], [0, 0, 1, 1], [], []>} : vector<64x128xbf16>, vector<128x128xbf16>, vector<64x128xf32> -> vector<64x128xf32>
    %97 = vector.extract_strided_slice %92 {offsets = [1, 0, 0], sizes = [4, 16, 128], strides = [1, 1, 1]} : vector<6x16x128xbf16> to vector<4x16x128xbf16>
    %98 = vector.shape_cast %97 : vector<4x16x128xbf16> to vector<64x128xbf16>
    %c384 = arith.constant 384 : index
    %c0_51 = arith.constant 0 : index
    %99 = vector.load %arg13[%c384, %c0_51] : memref<1152x128xbf16, #tpu.memory_space<vmem>>, vector<128x128xbf16>
    %cst_52 = arith.constant dense<0.000000e+00> : vector<64x128xf32>
    %100 = tpu.matmul %98, %99, %cst_52 {dimension_numbers = #tpu.dot_dimension_numbers<[1], [0], [0], [1], [0, 0, 1, 1], [], []>} : vector<64x128xbf16>, vector<128x128xbf16>, vector<64x128xf32> -> vector<64x128xf32>
    %101 = arith.addf %96, %100 : vector<64x128xf32>
    %102 = vector.extract_strided_slice %92 {offsets = [2, 0, 0], sizes = [4, 16, 128], strides = [1, 1, 1]} : vector<6x16x128xbf16> to vector<4x16x128xbf16>
    %103 = vector.shape_cast %102 : vector<4x16x128xbf16> to vector<64x128xbf16>
    %c768 = arith.constant 768 : index
    %c0_53 = arith.constant 0 : index
    %104 = vector.load %arg13[%c768, %c0_53] : memref<1152x128xbf16, #tpu.memory_space<vmem>>, vector<128x128xbf16>
    %cst_54 = arith.constant dense<0.000000e+00> : vector<64x128xf32>
    %105 = tpu.matmul %103, %104, %cst_54 {dimension_numbers = #tpu.dot_dimension_numbers<[1], [0], [0], [1], [0, 0, 1, 1], [], []>} : vector<64x128xbf16>, vector<128x128xbf16>, vector<64x128xf32> -> vector<64x128xf32>
    %106 = arith.addf %101, %105 : vector<64x128xf32>
    %c0_55 = arith.constant 0 : index
    %c16_56 = arith.constant 16 : index
    %c0_57 = arith.constant 0 : index
    %107 = vector.load %arg16[%c0_55, %c16_56, %c0_57] : memref<6x48x128xbf16, #tpu.memory_space<vmem>>, vector<6x16x128xbf16>
    %108 = vector.extract_strided_slice %107 {offsets = [0, 0, 0], sizes = [4, 16, 128], strides = [1, 1, 1]} : vector<6x16x128xbf16> to vector<4x16x128xbf16>
    %109 = vector.shape_cast %108 : vector<4x16x128xbf16> to vector<64x128xbf16>
    %c128 = arith.constant 128 : index
    %c0_58 = arith.constant 0 : index
    %110 = vector.load %arg13[%c128, %c0_58] : memref<1152x128xbf16, #tpu.memory_space<vmem>>, vector<128x128xbf16>
    %cst_59 = arith.constant dense<0.000000e+00> : vector<64x128xf32>
    %111 = tpu.matmul %109, %110, %cst_59 {dimension_numbers = #tpu.dot_dimension_numbers<[1], [0], [0], [1], [0, 0, 1, 1], [], []>} : vector<64x128xbf16>, vector<128x128xbf16>, vector<64x128xf32> -> vector<64x128xf32>
    %112 = arith.addf %106, %111 : vector<64x128xf32>
    %113 = vector.extract_strided_slice %107 {offsets = [1, 0, 0], sizes = [4, 16, 128], strides = [1, 1, 1]} : vector<6x16x128xbf16> to vector<4x16x128xbf16>
    %114 = vector.shape_cast %113 : vector<4x16x128xbf16> to vector<64x128xbf16>
    %c512 = arith.constant 512 : index
    %c0_60 = arith.constant 0 : index
    %115 = vector.load %arg13[%c512, %c0_60] : memref<1152x128xbf16, #tpu.memory_space<vmem>>, vector<128x128xbf16>
    %cst_61 = arith.constant dense<0.000000e+00> : vector<64x128xf32>
    %116 = tpu.matmul %114, %115, %cst_61 {dimension_numbers = #tpu.dot_dimension_numbers<[1], [0], [0], [1], [0, 0, 1, 1], [], []>} : vector<64x128xbf16>, vector<128x128xbf16>, vector<64x128xf32> -> vector<64x128xf32>
    %117 = arith.addf %112, %116 : vector<64x128xf32>
    %118 = vector.extract_strided_slice %107 {offsets = [2, 0, 0], sizes = [4, 16, 128], strides = [1, 1, 1]} : vector<6x16x128xbf16> to vector<4x16x128xbf16>
    %119 = vector.shape_cast %118 : vector<4x16x128xbf16> to vector<64x128xbf16>
    %c896 = arith.constant 896 : index
    %c0_62 = arith.constant 0 : index
    %120 = vector.load %arg13[%c896, %c0_62] : memref<1152x128xbf16, #tpu.memory_space<vmem>>, vector<128x128xbf16>
    %cst_63 = arith.constant dense<0.000000e+00> : vector<64x128xf32>
    %121 = tpu.matmul %119, %120, %cst_63 {dimension_numbers = #tpu.dot_dimension_numbers<[1], [0], [0], [1], [0, 0, 1, 1], [], []>} : vector<64x128xbf16>, vector<128x128xbf16>, vector<64x128xf32> -> vector<64x128xf32>
    %122 = arith.addf %117, %121 : vector<64x128xf32>
    %c0_64 = arith.constant 0 : index
    %c17 = arith.constant 17 : index
    %c0_65 = arith.constant 0 : index
    %123 = vector.load %arg16[%c0_64, %c17, %c0_65] : memref<6x48x128xbf16, #tpu.memory_space<vmem>>, vector<6x16x128xbf16>
    %124 = vector.extract_strided_slice %123 {offsets = [0, 0, 0], sizes = [4, 16, 128], strides = [1, 1, 1]} : vector<6x16x128xbf16> to vector<4x16x128xbf16>
    %125 = vector.shape_cast %124 : vector<4x16x128xbf16> to vector<64x128xbf16>
    %c256 = arith.constant 256 : index
    %c0_66 = arith.constant 0 : index
    %126 = vector.load %arg13[%c256, %c0_66] : memref<1152x128xbf16, #tpu.memory_space<vmem>>, vector<128x128xbf16>
    %cst_67 = arith.constant dense<0.000000e+00> : vector<64x128xf32>
    %127 = tpu.matmul %125, %126, %cst_67 {dimension_numbers = #tpu.dot_dimension_numbers<[1], [0], [0], [1], [0, 0, 1, 1], [], []>} : vector<64x128xbf16>, vector<128x128xbf16>, vector<64x128xf32> -> vector<64x128xf32>
    %128 = arith.addf %122, %127 : vector<64x128xf32>
    %129 = vector.extract_strided_slice %123 {offsets = [1, 0, 0], sizes = [4, 16, 128], strides = [1, 1, 1]} : vector<6x16x128xbf16> to vector<4x16x128xbf16>
    %130 = vector.shape_cast %129 : vector<4x16x128xbf16> to vector<64x128xbf16>
    %c640 = arith.constant 640 : index
    %c0_68 = arith.constant 0 : index
    %131 = vector.load %arg13[%c640, %c0_68] : memref<1152x128xbf16, #tpu.memory_space<vmem>>, vector<128x128xbf16>
    %cst_69 = arith.constant dense<0.000000e+00> : vector<64x128xf32>
    %132 = tpu.matmul %130, %131, %cst_69 {dimension_numbers = #tpu.dot_dimension_numbers<[1], [0], [0], [1], [0, 0, 1, 1], [], []>} : vector<64x128xbf16>, vector<128x128xbf16>, vector<64x128xf32> -> vector<64x128xf32>
    %133 = arith.addf %128, %132 : vector<64x128xf32>
    %134 = vector.extract_strided_slice %123 {offsets = [2, 0, 0], sizes = [4, 16, 128], strides = [1, 1, 1]} : vector<6x16x128xbf16> to vector<4x16x128xbf16>
    %135 = vector.shape_cast %134 : vector<4x16x128xbf16> to vector<64x128xbf16>
    %c1024 = arith.constant 1024 : index
    %c0_70 = arith.constant 0 : index
    %136 = vector.load %arg13[%c1024, %c0_70] : memref<1152x128xbf16, #tpu.memory_space<vmem>>, vector<128x128xbf16>
    %cst_71 = arith.constant dense<0.000000e+00> : vector<64x128xf32>
    %137 = tpu.matmul %135, %136, %cst_71 {dimension_numbers = #tpu.dot_dimension_numbers<[1], [0], [0], [1], [0, 0, 1, 1], [], []>} : vector<64x128xbf16>, vector<128x128xbf16>, vector<64x128xf32> -> vector<64x128xf32>
    %138 = arith.addf %133, %137 : vector<64x128xf32>
    %c0_72 = arith.constant 0 : index
    %c0_73 = arith.constant 0 : index
    %139 = vector.load %arg14[%c0_72, %c0_73] : memref<1x128xf32, #tpu.memory_space<vmem>>, vector<1x128xf32>
    %140 = vector.broadcast %139 : vector<1x128xf32> to vector<64x128xf32>
    %141 = arith.addf %138, %140 : vector<64x128xf32>
    %cst_74 = arith.constant 0.000000e+00 : f32
    %142 = vector.broadcast %cst_74 : f32 to vector<64x128xf32>
    %143 = arith.maximumf %141, %142 : vector<64x128xf32>
    %144 = vector.shape_cast %143 : vector<64x128xf32> to vector<1x4x16x128xf32>
    %c0_75 = arith.constant 0 : index
    %c0_76 = arith.constant 0 : index
    %c0_77 = arith.constant 0 : index
    %c0_78 = arith.constant 0 : index
    %145 = vector.load %arg15[%c0_75, %c0_76, %c0_77, %c0_78] : memref<1x4x16x128xf32, #tpu.memory_space<vmem>>, vector<1x4x16x128xf32>
    tpu.vector_store %arg15[%c0_75, %c0_76, %c0_77, %c0_78], %144 {strides = array<i32>} : memref<1x4x16x128xf32, #tpu.memory_space<vmem>>, vector<1x4x16x128xf32>,
    return
  }
  func.func @transform_0(%arg0: i32, %arg1: i32) -> (i32, i32, i32, i32) {
    %c0_i32 = arith.constant 0 : i32
    %c0_i32_0 = arith.constant 0 : i32
    %c0_i32_1 = arith.constant 0 : i32
    %c0_i32_2 = arith.constant 0 : i32
    return %arg0, %c0_i32, %c0_i32_0, %c0_i32_1 : i32, i32, i32, i32
  }
  func.func @transform_1(%arg0: i32, %arg1: i32) -> (i32, i32, i32, i32) {
    %c0_i32 = arith.constant 0 : i32
    %c0_i32_0 = arith.constant 0 : i32
    %c0_i32_1 = arith.constant 0 : i32
    %c0_i32_2 = arith.constant 0 : i32
    return %arg0, %c0_i32, %c0_i32_0, %c0_i32_1 : i32, i32, i32, i32
  }
  func.func @transform_2(%arg0: i32, %arg1: i32) -> (i32, i32, i32, i32) {
    %c0_i32 = arith.constant 0 : i32
    %c0_i32_0 = arith.constant 0 : i32
    %c0_i32_1 = arith.constant 0 : i32
    %c0_i32_2 = arith.constant 0 : i32
    return %arg0, %c0_i32, %c0_i32_0, %c0_i32_1 : i32, i32, i32, i32
  }
  func.func @transform_3(%arg0: i32, %arg1: i32) -> (i32, i32) {
    %c0_i32 = arith.constant 0 : i32
    %c0_i32_0 = arith.constant 0 : i32
    %c0_i32_1 = arith.constant 0 : i32
    return %c0_i32, %c0_i32_0 : i32, i32
  }
  func.func @transform_4(%arg0: i32, %arg1: i32) -> (i32, i32) {
    %c0_i32 = arith.constant 0 : i32
    %c0_i32_0 = arith.constant 0 : i32
    %c0_i32_1 = arith.constant 0 : i32
    return %c0_i32, %c0_i32_0 : i32, i32
  }
  func.func @transform_5(%arg0: i32, %arg1: i32) -> (i32, i32) {
    %c0_i32 = arith.constant 0 : i32
    %c0_i32_0 = arith.constant 0 : i32
    %c0_i32_1 = arith.constant 0 : i32
    return %c0_i32, %c0_i32_0 : i32, i32
  }
  func.func @transform_6(%arg0: i32, %arg1: i32) -> (i32, i32) {
    %c0_i32 = arith.constant 0 : i32
    %c0_i32_0 = arith.constant 0 : i32
    %c0_i32_1 = arith.constant 0 : i32
    return %c0_i32, %c0_i32_0 : i32, i32
  }
  func.func @transform_7(%arg0: i32, %arg1: i32) -> (i32, i32) {
    %c0_i32 = arith.constant 0 : i32
    %c0_i32_0 = arith.constant 0 : i32
    %c0_i32_1 = arith.constant 0 : i32
    return %c0_i32, %c0_i32_0 : i32, i32
  }
  func.func @transform_8(%arg0: i32, %arg1: i32) -> (i32, i32) {
    %c0_i32 = arith.constant 0 : i32
    %c0_i32_0 = arith.constant 0 : i32
    %c0_i32_1 = arith.constant 0 : i32
    return %c0_i32, %c0_i32_0 : i32, i32
  }
  func.func @transform_9(%arg0: i32, %arg1: i32) -> (i32, i32) {
    %c0_i32 = arith.constant 0 : i32
    %c0_i32_0 = arith.constant 0 : i32
    %c0_i32_1 = arith.constant 0 : i32
    return %c0_i32, %c0_i32_0 : i32, i32
  }
  func.func @transform_10(%arg0: i32, %arg1: i32) -> (i32, i32) {
    %c0_i32 = arith.constant 0 : i32
    %c0_i32_0 = arith.constant 0 : i32
    %c0_i32_1 = arith.constant 0 : i32
    return %c0_i32, %c0_i32_0 : i32, i32
  }
  func.func @transform_11(%arg0: i32, %arg1: i32) -> (i32, i32) {
    %c0_i32 = arith.constant 0 : i32
    %c0_i32_0 = arith.constant 0 : i32
    %c0_i32_1 = arith.constant 0 : i32
    return %c0_i32, %c0_i32_0 : i32, i32
  }
  func.func @transform_12(%arg0: i32, %arg1: i32) -> (i32, i32) {
    %c0_i32 = arith.constant 0 : i32
    %c0_i32_0 = arith.constant 0 : i32
    %c0_i32_1 = arith.constant 0 : i32
    return %c0_i32, %c0_i32_0 : i32, i32
  }
  func.func @transform_13(%arg0: i32, %arg1: i32) -> (i32, i32, i32, i32) {
    %c0_i32 = arith.constant 0 : i32
    %c0_i32_0 = arith.constant 0 : i32
    %c0_i32_1 = arith.constant 0 : i32
    return %arg0, %arg1, %c0_i32, %c0_i32_0 : i32, i32, i32, i32
  }
}

</mosaic_0001>

<llo_original>
// kernel: asff3_pallas.1
$region0: #{asff3_pallas.1}
  #allocation0 [shape = 'u32[]', space=smem, size = 0x4, offset = 0x4, fixed_abs, tag = 'smem constant byte address 0x4 - core index']
  #allocation1 [shape = 'u32[144,128]{1,0:T(1,128)}', space=vmem, size = 0x12000, scoped, tag = 'internal scratch']
  #allocation2 [shape = 'bf16[6,48,128]{2,1,0:T(8,128)(2,1)}', space=vmem, size = 0x12000, scoped, tag = 'scratch operand']
  %s0 = inlined_call_operand.vmem [shape: bf16[2,16,16,128], index: 0, kind: input, shape index: {}]
  %s1 = inlined_call_operand.vmem [shape: bf16[2,16,16,128], index: 1, kind: input, shape index: {}]
  %s2 = inlined_call_operand.vmem [shape: bf16[2,16,16,128], index: 2, kind: input, shape index: {}]
  %s3 = inlined_call_operand.vmem [shape: bf16[128,8], index: 3, kind: input, shape index: {}]
  %s4 = inlined_call_operand.vmem [shape: f32[1,8], index: 4, kind: input, shape index: {}]
  %s5 = inlined_call_operand.vmem [shape: bf16[128,8], index: 5, kind: input, shape index: {}]
  %s6 = inlined_call_operand.vmem [shape: f32[1,8], index: 6, kind: input, shape index: {}]
  %s7 = inlined_call_operand.vmem [shape: bf16[128,8], index: 7, kind: input, shape index: {}]
  %s8 = inlined_call_operand.vmem [shape: f32[1,8], index: 8, kind: input, shape index: {}]
  %s9 = inlined_call_operand.vmem [shape: f32[24,3], index: 9, kind: input, shape index: {}]
  %s10 = inlined_call_operand.vmem [shape: f32[1,3], index: 10, kind: input, shape index: {}]
  %s11 = inlined_call_operand.vmem [shape: bf16[1152,128], index: 11, kind: input, shape index: {}]
  %s12 = inlined_call_operand.vmem [shape: f32[1,128], index: 12, kind: input, shape index: {}]
  %s13 = inlined_call_operand.hbm [shape: f32[2,16,16,128], index: 13, kind: output, shape index: {}]
  %s14 = sld [smem:[#allocation0]]
  $region101: #{asff3_pallas.1} parent=0
    _
  %s16 = ssub.s32 1, %s14
  %s17 = scalar_select 0, %s16, %s14
  $region1: #{asff3_pallas.1} parent=0
    #allocation3 [shape = 'u8[65536]{0}', space=vmem, size = 0x10000, scoped, tag = 'output window, operand 0']
    #allocation4 [shape = 's32[2]{0}', space=sflag, size = 0x8, scoped, tag = 'scoped memory for asff3_pallas.1']
    %18 = vsyncpa [#allocation4], 0
    %s19 = scalar_lea.sflag [#allocation4], 1
    %20 = vsyncpa %s19, 0
    loop: start=0, step=1, limit=10
    $region2: #{asff3_pallas.1} parent=1 // loop_pre_header
      _
    $region3: #{asff3_pallas.1} parent=1 // loop_header
      %s22 = sphi 0, %s26
      %p23 = scmp.ge.s32.totalorder %s22, 10
      %s29 = sphi 0, %s41
      %s30 = sphi 0, %s37
      %s31 = sphi 0, %s29
      %s32 = sphi 0, %s30
      %s33 = sphi 0, %s31
      %s34 = sphi 0, %s32
      %s44 = sphi 0, %s46
      %s47 = sphi 0, %s44
      %s48 = sphi 0, %s47
      %s64 = sphi 0, %s48
      %s70 = sphi 0, %s72
      %s73 = sphi 0, %s70
      %s74 = sphi 0, %s73
      %s90 = sphi 0, %s74
      %s96 = sphi 0, %s98
      %s99 = sphi 0, %s96
      %s100 = sphi 0, %s99
      %s116 = sphi 0, %s100
      %s120 = sphi 0, %s120
      %s122 = sphi 0, %s120
      %s123 = sphi 0, %s122
      %s137 = sphi 0, %s123
      %s141 = sphi 0, %s141
      %s143 = sphi 0, %s141
      %s144 = sphi 0, %s143
      %s158 = sphi 0, %s144
      %s162 = sphi 0, %s162
      %s164 = sphi 0, %s162
      %s165 = sphi 0, %s164
      %s179 = sphi 0, %s165
      %s183 = sphi 0, %s183
      %s185 = sphi 0, %s183
      %s186 = sphi 0, %s185
      %s200 = sphi 0, %s186
      %s204 = sphi 0, %s204
      %s206 = sphi 0, %s204
      %s207 = sphi 0, %s206
      %s221 = sphi 0, %s207
      %s225 = sphi 0, %s225
      %s227 = sphi 0, %s225
      %s228 = sphi 0, %s227
      %s242 = sphi 0, %s228
      %s246 = sphi 0, %s246
      %s248 = sphi 0, %s246
      %s249 = sphi 0, %s248
      %s263 = sphi 0, %s249
      %s267 = sphi 0, %s267
      %s269 = sphi 0, %s267
      %s270 = sphi 0, %s269
      %s284 = sphi 0, %s270
      %s288 = sphi 0, %s288
      %s290 = sphi 0, %s288
      %s291 = sphi 0, %s290
      %s305 = sphi 0, %s291
      %s309 = sphi 0, %s309
      %s311 = sphi 0, %s309
      %s312 = sphi 0, %s311
      %s326 = sphi 0, %s312
      %s334 = sphi 0, %s336
      %s337 = sphi 0, %s334
      %s338 = sphi 0, %s337
      %s354 = sphi 0, %s338
    $region4: #{asff3_pallas.1} parent=1 // loop_header_branch
      %25 = sbr.rel (%p23) target = $region8
    $region5: #{asff3_pallas.1} parent=1 // loop_body
      %s27 = ssub.s32 %s22, 1
      %s28 = ssub.s32 %s22, 2
      %s35 = sadd.s32 1, %s30
      %p36 = scmp.ge.s32.totalorder %s35, 4
      %s37 = scalar_select %p36, 0, %s35
      %s38 = sadd.s32 1, %s29
      %s39 = scalar_select %p36, %s38, %s29
      %p40 = scmp.ge.s32.totalorder %s39, 2
      %s41 = scalar_select %p40, 0, %s39
      %s42 = ssub.s32 %s29, %s41
      %p43 = scmp.eq.s32.totalorder %s42, 0
      %s45 = sadd.s32 %s44, 1
      %s46 = scalar_select %p43, %s44, %s45
      %p49 = pneg %p43
      %p50 = scmp.eq.s32.totalorder %s22, 7
      %p51 = por %p49, %p50
      %p52 = scmp.ne.s32.totalorder %s44, %s47
      %p53 = scmp.eq.s32.totalorder %s22, 0
      %p54 = por %p52, %p53
      %p55 = scmp.ne.s32.totalorder %s44, %s47
      %p56 = scmp.eq.s32.totalorder %s27, 7
      %p57 = por %p55, %p56
      %p58 = scmp.ne.s32.totalorder %s47, %s48
      %p59 = scmp.eq.s32.totalorder %s27, 0
      %p60 = por %p58, %p59
      %p61 = scmp.ne.s32.totalorder %s47, %s48
      %p62 = scmp.eq.s32.totalorder %s28, 7
      %p63 = por %p61, %p62
      %p65 = scmp.ne.s32.totalorder %s48, %s64
      %p66 = scmp.eq.s32.totalorder %s28, 0
      %p67 = por %p65, %p66
      %s68 = ssub.s32 %s29, %s41
      %p69 = scmp.eq.s32.totalorder %s68, 0
      %s71 = sadd.s32 %s70, 1
      %s72 = scalar_select %p69, %s70, %s71
      %p75 = pneg %p69
      %p76 = scmp.eq.s32.totalorder %s22, 7
      %p77 = por %p75, %p76
      %p78 = scmp.ne.s32.totalorder %s70, %s73
      %p79 = scmp.eq.s32.totalorder %s22, 0
      %p80 = por %p78, %p79
      %p81 = scmp.ne.s32.totalorder %s70, %s73
      %p82 = scmp.eq.s32.totalorder %s27, 7
      %p83 = por %p81, %p82
      %p84 = scmp.ne.s32.totalorder %s73, %s74
      %p85 = scmp.eq.s32.totalorder %s27, 0
      %p86 = por %p84, %p85
      %p87 = scmp.ne.s32.totalorder %s73, %s74
      %p88 = scmp.eq.s32.totalorder %s28, 7
      %p89 = por %p87, %p88
      %p91 = scmp.ne.s32.totalorder %s74, %s90
      %p92 = scmp.eq.s32.totalorder %s28, 0
      %p93 = por %p91, %p92
      %s94 = ssub.s32 %s29, %s41
      %p95 = scmp.eq.s32.totalorder %s94, 0
      %s97 = sadd.s32 %s96, 1
      %s98 = scalar_select %p95, %s96, %s97
      %p101 = pneg %p95
      %p102 = scmp.eq.s32.totalorder %s22, 7
      %p103 = por %p101, %p102
      %p104 = scmp.ne.s32.totalorder %s96, %s99
      %p105 = scmp.eq.s32.totalorder %s22, 0
      %p106 = por %p104, %p105
      %p107 = scmp.ne.s32.totalorder %s96, %s99
      %p108 = scmp.eq.s32.totalorder %s27, 7
      %p109 = por %p107, %p108
      %p110 = scmp.ne.s32.totalorder %s99, %s100
      %p111 = scmp.eq.s32.totalorder %s27, 0
      %p112 = por %p110, %p111
      %p113 = scmp.ne.s32.totalorder %s99, %s100
      %p114 = scmp.eq.s32.totalorder %s28, 7
      %p115 = por %p113, %p114
      %p117 = scmp.ne.s32.totalorder %s100, %s116
      %p118 = scmp.eq.s32.totalorder %s28, 0
      %p119 = por %p117, %p118
      %s121 = sadd.s32 %s120, 1
      %p124 = scmp.eq.s32.totalorder %s22, 7
      %p125 = scmp.ne.s32.totalorder %s120, %s122
      %p126 = scmp.eq.s32.totalorder %s22, 0
      %p127 = por %p125, %p126
      %p128 = scmp.ne.s32.totalorder %s120, %s122
      %p129 = scmp.eq.s32.totalorder %s27, 7
      %p130 = por %p128, %p129
      %p131 = scmp.ne.s32.totalorder %s122, %s123
      %p132 = scmp.eq.s32.totalorder %s27, 0
      %p133 = por %p131, %p132
      %p134 = scmp.ne.s32.totalorder %s122, %s123
      %p135 = scmp.eq.s32.totalorder %s28, 7
      %p136 = por %p134, %p135
      %p138 = scmp.ne.s32.totalorder %s123, %s137
      %p139 = scmp.eq.s32.totalorder %s28, 0
      %p140 = por %p138, %p139
      %s142 = sadd.s32 %s141, 1
      %p145 = scmp.eq.s32.totalorder %s22, 7
      %p146 = scmp.ne.s32.totalorder %s141, %s143
      %p147 = scmp.eq.s32.totalorder %s22, 0
      %p148 = por %p146, %p147
      %p149 = scmp.ne.s32.totalorder %s141, %s143
      %p150 = scmp.eq.s32.totalorder %s27, 7
      %p151 = por %p149, %p150
      %p152 = scmp.ne.s32.totalorder %s143, %s144
      %p153 = scmp.eq.s32.totalorder %s27, 0
      %p154 = por %p152, %p153
      %p155 = scmp.ne.s32.totalorder %s143, %s144
      %p156 = scmp.eq.s32.totalorder %s28, 7
      %p157 = por %p155, %p156
      %p159 = scmp.ne.s32.totalorder %s144, %s158
      %p160 = scmp.eq.s32.totalorder %s28, 0
      %p161 = por %p159, %p160
      %s163 = sadd.s32 %s162, 1
      %p166 = scmp.eq.s32.totalorder %s22, 7
      %p167 = scmp.ne.s32.totalorder %s162, %s164
      %p168 = scmp.eq.s32.totalorder %s22, 0
      %p169 = por %p167, %p168
      %p170 = scmp.ne.s32.totalorder %s162, %s164
      %p171 = scmp.eq.s32.totalorder %s27, 7
      %p172 = por %p170, %p171
      %p173 = scmp.ne.s32.totalorder %s164, %s165
      %p174 = scmp.eq.s32.totalorder %s27, 0
      %p175 = por %p173, %p174
      %p176 = scmp.ne.s32.totalorder %s164, %s165
      %p177 = scmp.eq.s32.totalorder %s28, 7
      %p178 = por %p176, %p177
      %p180 = scmp.ne.s32.totalorder %s165, %s179
      %p181 = scmp.eq.s32.totalorder %s28, 0
      %p182 = por %p180, %p181
      %s184 = sadd.s32 %s183, 1
      %p187 = scmp.eq.s32.totalorder %s22, 7
      %p188 = scmp.ne.s32.totalorder %s183, %s185
      %p189 = scmp.eq.s32.totalorder %s22, 0
      %p190 = por %p188, %p189
      %p191 = scmp.ne.s32.totalorder %s183, %s185
      %p192 = scmp.eq.s32.totalorder %s27, 7
      %p193 = por %p191, %p192
      %p194 = scmp.ne.s32.totalorder %s185, %s186
      %p195 = scmp.eq.s32.totalorder %s27, 0
      %p196 = por %p194, %p195
      %p197 = scmp.ne.s32.totalorder %s185, %s186
      %p198 = scmp.eq.s32.totalorder %s28, 7
      %p199 = por %p197, %p198
      %p201 = scmp.ne.s32.totalorder %s186, %s200
      %p202 = scmp.eq.s32.totalorder %s28, 0
      %p203 = por %p201, %p202
      %s205 = sadd.s32 %s204, 1
      %p208 = scmp.eq.s32.totalorder %s22, 7
      %p209 = scmp.ne.s32.totalorder %s204, %s206
      %p210 = scmp.eq.s32.totalorder %s22, 0
      %p211 = por %p209, %p210
      %p212 = scmp.ne.s32.totalorder %s204, %s206
      %p213 = scmp.eq.s32.totalorder %s27, 7
      %p214 = por %p212, %p213
      %p215 = scmp.ne.s32.totalorder %s206, %s207
      %p216 = scmp.eq.s32.totalorder %s27, 0
      %p217 = por %p215, %p216
      %p218 = scmp.ne.s32.totalorder %s206, %s207
      %p219 = scmp.eq.s32.totalorder %s28, 7
      %p220 = por %p218, %p219
      %p222 = scmp.ne.s32.totalorder %s207, %s221
      %p223 = scmp.eq.s32.totalorder %s28, 0
      %p224 = por %p222, %p223
      %s226 = sadd.s32 %s225, 1
      %p229 = scmp.eq.s32.totalorder %s22, 7
      %p230 = scmp.ne.s32.totalorder %s225, %s227
      %p231 = scmp.eq.s32.totalorder %s22, 0
      %p232 = por %p230, %p231
      %p233 = scmp.ne.s32.totalorder %s225, %s227
      %p234 = scmp.eq.s32.totalorder %s27, 7
      %p235 = por %p233, %p234
      %p236 = scmp.ne.s32.totalorder %s227, %s228
      %p237 = scmp.eq.s32.totalorder %s27, 0
      %p238 = por %p236, %p237
      %p239 = scmp.ne.s32.totalorder %s227, %s228
      %p240 = scmp.eq.s32.totalorder %s28, 7
      %p241 = por %p239, %p240
      %p243 = scmp.ne.s32.totalorder %s228, %s242
      %p244 = scmp.eq.s32.totalorder %s28, 0
      %p245 = por %p243, %p244
      %s247 = sadd.s32 %s246, 1
      %p250 = scmp.eq.s32.totalorder %s22, 7
      %p251 = scmp.ne.s32.totalorder %s246, %s248
      %p252 = scmp.eq.s32.totalorder %s22, 0
      %p253 = por %p251, %p252
      %p254 = scmp.ne.s32.totalorder %s246, %s248
      %p255 = scmp.eq.s32.totalorder %s27, 7
      %p256 = por %p254, %p255
      %p257 = scmp.ne.s32.totalorder %s248, %s249
      %p258 = scmp.eq.s32.totalorder %s27, 0
      %p259 = por %p257, %p258
      %p260 = scmp.ne.s32.totalorder %s248, %s249
      %p261 = scmp.eq.s32.totalorder %s28, 7
      %p262 = por %p260, %p261
      %p264 = scmp.ne.s32.totalorder %s249, %s263
      %p265 = scmp.eq.s32.totalorder %s28, 0
      %p266 = por %p264, %p265
      %s268 = sadd.s32 %s267, 1
      %p271 = scmp.eq.s32.totalorder %s22, 7
      %p272 = scmp.ne.s32.totalorder %s267, %s269
      %p273 = scmp.eq.s32.totalorder %s22, 0
      %p274 = por %p272, %p273
      %p275 = scmp.ne.s32.totalorder %s267, %s269
      %p276 = scmp.eq.s32.totalorder %s27, 7
      %p277 = por %p275, %p276
      %p278 = scmp.ne.s32.totalorder %s269, %s270
      %p279 = scmp.eq.s32.totalorder %s27, 0
      %p280 = por %p278, %p279
      %p281 = scmp.ne.s32.totalorder %s269, %s270
      %p282 = scmp.eq.s32.totalorder %s28, 7
      %p283 = por %p281, %p282
      %p285 = scmp.ne.s32.totalorder %s270, %s284
      %p286 = scmp.eq.s32.totalorder %s28, 0
      %p287 = por %p285, %p286
      %s289 = sadd.s32 %s288, 1
      %p292 = scmp.eq.s32.totalorder %s22, 7
      %p293 = scmp.ne.s32.totalorder %s288, %s290
      %p294 = scmp.eq.s32.totalorder %s22, 0
      %p295 = por %p293, %p294
      %p296 = scmp.ne.s32.totalorder %s288, %s290
      %p297 = scmp.eq.s32.totalorder %s27, 7
      %p298 = por %p296, %p297
      %p299 = scmp.ne.s32.totalorder %s290, %s291
      %p300 = scmp.eq.s32.totalorder %s27, 0
      %p301 = por %p299, %p300
      %p302 = scmp.ne.s32.totalorder %s290, %s291
      %p303 = scmp.eq.s32.totalorder %s28, 7
      %p304 = por %p302, %p303
      %p306 = scmp.ne.s32.totalorder %s291, %s305
      %p307 = scmp.eq.s32.totalorder %s28, 0
      %p308 = por %p306, %p307
      %s310 = sadd.s32 %s309, 1
      %p313 = scmp.eq.s32.totalorder %s22, 7
      %p314 = scmp.ne.s32.totalorder %s309, %s311
      %p315 = scmp.eq.s32.totalorder %s22, 0
      %p316 = por %p314, %p315
      %p317 = scmp.ne.s32.totalorder %s309, %s311
      %p318 = scmp.eq.s32.totalorder %s27, 7
      %p319 = por %p317, %p318
      %p320 = scmp.ne.s32.totalorder %s311, %s312
      %p321 = scmp.eq.s32.totalorder %s27, 0
      %p322 = por %p320, %p321
      %p323 = scmp.ne.s32.totalorder %s311, %s312
      %p324 = scmp.eq.s32.totalorder %s28, 7
      %p325 = por %p323, %p324
      %p327 = scmp.ne.s32.totalorder %s312, %s326
      %p328 = scmp.eq.s32.totalorder %s28, 0
      %p329 = por %p327, %p328
      %s330 = ssub.s32 %s29, %s41
      %s331 = ssub.s32 %s30, %s37
      %s332 = sor.u32 %s330, %s331
      %p333 = scmp.eq.s32.totalorder %s332, 0
      %s335 = sadd.s32 %s334, 1
      %s336 = scalar_select %p333, %s334, %s335
      %p339 = pneg %p333
      %p340 = scmp.eq.s32.totalorder %s22, 7
      %p341 = por %p339, %p340
      %p342 = scmp.ne.s32.totalorder %s334, %s337
      %p343 = scmp.eq.s32.totalorder %s22, 0
      %p344 = por %p342, %p343
      %p345 = scmp.ne.s32.totalorder %s334, %s337
      %p346 = scmp.eq.s32.totalorder %s27, 7
      %p347 = por %p345, %p346
      %p348 = scmp.ne.s32.totalorder %s337, %s338
      %p349 = scmp.eq.s32.totalorder %s27, 0
      %p350 = por %p348, %p349
      %p351 = scmp.ne.s32.totalorder %s337, %s338
      %p352 = scmp.eq.s32.totalorder %s28, 7
      %p353 = por %p351, %p352
      %p355 = scmp.ne.s32.totalorder %s338, %s354
      %p356 = scmp.eq.s32.totalorder %s28, 0
      %p357 = por %p355, %p356
      %p358 = scmp.le.s32.totalorder 1, %s22
      %p359 = scmp.lt.s32.totalorder %s22, 9
      %p360 = pnand %p358, %p359
      %p361 = pneg %p360
      // Predicated region
      $region9: #{asff3_pallas.1} parent=5 // pred_check
        _
      $region10: #{asff3_pallas.1} parent=5 // pred_check_branch
        %363 = sbr.rel (%p360) target = $region12
      $region11: #{asff3_pallas.1} parent=5 // pred_region
        %s364 = ssub.s32 %s22, 1
        // Predicated region
        $region13: #{asff3_pallas.1} parent=11 // pred_check
          %p365 = pneg %p133
        $region14: #{asff3_pallas.1} parent=11 // pred_check_branch
          %367 = sbr.rel (%p365) target = $region16
        $region15: #{asff3_pallas.1} parent=11 // pred_region
          _
        $region16: #{asff3_pallas.1} parent=11 // pred_fallthru
          _
        // Predicated region
        $region17: #{asff3_pallas.1} parent=11 // pred_check
          %p368 = pneg %p154
        $region18: #{asff3_pallas.1} parent=11 // pred_check_branch
          %370 = sbr.rel (%p368) target = $region20
        $region19: #{asff3_pallas.1} parent=11 // pred_region
          _
        $region20: #{asff3_pallas.1} parent=11 // pred_fallthru
          _
        // Predicated region
        $region21: #{asff3_pallas.1} parent=11 // pred_check
          %p371 = pneg %p175
        $region22: #{asff3_pallas.1} parent=11 // pred_check_branch
          %373 = sbr.rel (%p371) target = $region24
        $region23: #{asff3_pallas.1} parent=11 // pred_region
          _
        $region24: #{asff3_pallas.1} parent=11 // pred_fallthru
          _
        // Predicated region
        $region25: #{asff3_pallas.1} parent=11 // pred_check
          %p374 = pneg %p196
        $region26: #{asff3_pallas.1} parent=11 // pred_check_branch
          %376 = sbr.rel (%p374) target = $region28
        $region27: #{asff3_pallas.1} parent=11 // pred_region
          _
        $region28: #{asff3_pallas.1} parent=11 // pred_fallthru
          _
        // Predicated region
        $region29: #{asff3_pallas.1} parent=11 // pred_check
          %p377 = pneg %p217
        $region30: #{asff3_pallas.1} parent=11 // pred_check_branch
          %379 = sbr.rel (%p377) target = $region32
        $region31: #{asff3_pallas.1} parent=11 // pred_region
          _
        $region32: #{asff3_pallas.1} parent=11 // pred_fallthru
          _
        // Predicated region
        $region33: #{asff3_pallas.1} parent=11 // pred_check
          %p380 = pneg %p238
        $region34: #{asff3_pallas.1} parent=11 // pred_check_branch
          %382 = sbr.rel (%p380) target = $region36
        $region35: #{asff3_pallas.1} parent=11 // pred_region
          _
        $region36: #{asff3_pallas.1} parent=11 // pred_fallthru
          _
        // Predicated region
        $region37: #{asff3_pallas.1} parent=11 // pred_check
          %p383 = pneg %p259
        $region38: #{asff3_pallas.1} parent=11 // pred_check_branch
          %385 = sbr.rel (%p383) target = $region40
        $region39: #{asff3_pallas.1} parent=11 // pred_region
          _
        $region40: #{asff3_pallas.1} parent=11 // pred_fallthru
          _
        // Predicated region
        $region41: #{asff3_pallas.1} parent=11 // pred_check
          %p386 = pneg %p280
        $region42: #{asff3_pallas.1} parent=11 // pred_check_branch
          %388 = sbr.rel (%p386) target = $region44
        $region43: #{asff3_pallas.1} parent=11 // pred_region
          _
        $region44: #{asff3_pallas.1} parent=11 // pred_fallthru
          _
        // Predicated region
        $region45: #{asff3_pallas.1} parent=11 // pred_check
          %p389 = pneg %p301
        $region46: #{asff3_pallas.1} parent=11 // pred_check_branch
          %391 = sbr.rel (%p389) target = $region48
        $region47: #{asff3_pallas.1} parent=11 // pred_region
          _
        $region48: #{asff3_pallas.1} parent=11 // pred_fallthru
          _
        // Predicated region
        $region49: #{asff3_pallas.1} parent=11 // pred_check
          %p392 = pneg %p322
        $region50: #{asff3_pallas.1} parent=11 // pred_check_branch
          %394 = sbr.rel (%p392) target = $region52
        $region51: #{asff3_pallas.1} parent=11 // pred_region
          _
        $region52: #{asff3_pallas.1} parent=11 // pred_fallthru
          _
      $region12: #{asff3_pallas.1} parent=5 // pred_fallthru
        _
      %p395 = scmp.lt.s32.totalorder %s22, 8
      // Predicated region
      $region53: #{asff3_pallas.1} parent=5 // pred_check
        %p396 = pneg %p395
      $region54: #{asff3_pallas.1} parent=5 // pred_check_branch
        %398 = sbr.rel (%p396) target = $region56
      $region55: #{asff3_pallas.1} parent=5 // pred_region
        // Predicated region
        $region57: #{asff3_pallas.1} parent=55 // pred_check
          %p399 = pneg %p54
        $region58: #{asff3_pallas.1} parent=55 // pred_check_branch
          %401 = sbr.rel (%p399) target = $region60
        $region59: #{asff3_pallas.1} parent=55 // pred_region
          %p402 = scmp.lt.s32.totalorder %s29, 1
          %s403 = scalar_select %p402, %s29, 1
          %s404 = smul.addr %s403, 32
          %s405 = smul.addr %s404, 4
          %s406 = scalar_lea.vmem %s0, %s405
        $region60: #{asff3_pallas.1} parent=55 // pred_fallthru
          _
        // Predicated region
        $region61: #{asff3_pallas.1} parent=55 // pred_check
          %p407 = pneg %p80
        $region62: #{asff3_pallas.1} parent=55 // pred_check_branch
          %409 = sbr.rel (%p407) target = $region64
        $region63: #{asff3_pallas.1} parent=55 // pred_region
          %p410 = scmp.lt.s32.totalorder %s29, 1
          %s411 = scalar_select %p410, %s29, 1
          %s412 = smul.addr %s411, 32
          %s413 = smul.addr %s412, 4
          %s414 = scalar_lea.vmem %s1, %s413
        $region64: #{asff3_pallas.1} parent=55 // pred_fallthru
          _
        // Predicated region
        $region65: #{asff3_pallas.1} parent=55 // pred_check
          %p415 = pneg %p106
        $region66: #{asff3_pallas.1} parent=55 // pred_check_branch
          %417 = sbr.rel (%p415) target = $region68
        $region67: #{asff3_pallas.1} parent=55 // pred_region
          %p418 = scmp.lt.s32.totalorder %s29, 1
          %s419 = scalar_select %p418, %s29, 1
          %s420 = smul.addr %s419, 32
          %s421 = smul.addr %s420, 4
          %s422 = scalar_lea.vmem %s2, %s421
        $region68: #{asff3_pallas.1} parent=55 // pred_fallthru
          _
      $region56: #{asff3_pallas.1} parent=5 // pred_fallthru
        _
      %p423 = scmp.le.s32.totalorder 1, %s22
      %p424 = scmp.lt.s32.totalorder %s22, 9
      %p425 = pnand %p423, %p424
      %p426 = pneg %p425
      // Predicated region
      $region69: #{asff3_pallas.1} parent=5 // pred_check
        _
      $region70: #{asff3_pallas.1} parent=5 // pred_check_branch
        %428 = sbr.rel (%p425) target = $region72
      $region71: #{asff3_pallas.1} parent=5 // pred_region
        %s429 = ssub.s32 %s22, 1
        %p430 = scmp.lt.s32.totalorder %s31, 1
        %s431 = scalar_select %p430, %s31, 1
        %s432 = smul.addr %s431, 32
        %s433 = smul.addr %s432, 4
        %s434 = scalar_lea.vmem %s0, %s433
        %p435 = pneg %p60
        %p436 = pneg %p57
        %p437 = scmp.lt.s32.totalorder %s31, 1
        %s438 = scalar_select %p437, %s31, 1
        %s439 = smul.addr %s438, 32
        %s440 = smul.addr %s439, 4
        %s441 = scalar_lea.vmem %s1, %s440
        %p442 = pneg %p86
        %p443 = pneg %p83
        %p444 = scmp.lt.s32.totalorder %s31, 1
        %s445 = scalar_select %p444, %s31, 1
        %s446 = smul.addr %s445, 32
        %s447 = smul.addr %s446, 4
        %s448 = scalar_lea.vmem %s2, %s447
        %p449 = pneg %p112
        %p450 = pneg %p109
        %p451 = pneg %p133
        %p452 = pneg %p130
        %p453 = pneg %p154
        %p454 = pneg %p151
        %p455 = pneg %p175
        %p456 = pneg %p172
        %p457 = pneg %p196
        %p458 = pneg %p193
        %p459 = pneg %p217
        %p460 = pneg %p214
        %p461 = pneg %p238
        %p462 = pneg %p235
        %p463 = pneg %p259
        %p464 = pneg %p256
        %p465 = pneg %p280
        %p466 = pneg %p277
        %p467 = pneg %p301
        %p468 = pneg %p298
        %p469 = pneg %p322
        %p470 = pneg %p319
        %p471 = pneg %p350
        %p472 = pneg %p347
        %s473 = sand.u32 %s337, 1
        %s474 = scalar_lea.sflag [#allocation4], %s473
        %s475 = sand.u32 %s337, 1
        %s476 = smul.addr %s475, 64
        %s477 = scalar_lea.vmem [#allocation3], %s476
        %p478 = scmp.lt.s32.totalorder %s31, 1
        %s479 = scalar_select %p478, %s31, 1
        %s480 = smul.addr %s479, 32
        %s481 = smul.addr %s480, 4
        %s482 = scalar_lea.vmem %s0, %s481
        %p483 = scmp.lt.s32.totalorder %s31, 1
        %s484 = scalar_select %p483, %s31, 1
        %s485 = smul.addr %s484, 32
        %s486 = smul.addr %s485, 4
        %s487 = scalar_lea.vmem %s1, %s486
        %p488 = scmp.lt.s32.totalorder %s31, 1
        %s489 = scalar_select %p488, %s31, 1
        %s490 = smul.addr %s489, 32
        %s491 = smul.addr %s490, 4
        %s492 = scalar_lea.vmem %s2, %s491
        %s493 = smul.u32 4, %s32
        %s495 = smul.u32 %s32, 4
        %v496 = vld [vmem:[%s3] sm:$0xf]
        %v497 = vld [vmem:[%s3 + $0x4] sm:$0xf]
        %v498 = vld [vmem:[%s3 + $0x8] sm:$0xf]
        %v499 = vld [vmem:[%s3 + $0xc] sm:$0xf]
        %v500 = vld [vmem:[%s3 + $0x10] sm:$0xf]
        %v501 = vld [vmem:[%s3 + $0x14] sm:$0xf]
        %v502 = vld [vmem:[%s3 + $0x18] sm:$0xf]
        %v503 = vld [vmem:[%s3 + $0x1c] sm:$0xf]
        %v504 = vld [vmem:[%s3 + $0x20] sm:$0xf]
        %v505 = vld [vmem:[%s3 + $0x24] sm:$0xf]
        %v506 = vld [vmem:[%s3 + $0x28] sm:$0xf]
        %v507 = vld [vmem:[%s3 + $0x2c] sm:$0xf]
        %v508 = vld [vmem:[%s3 + $0x30] sm:$0xf]
        %v509 = vld [vmem:[%s3 + $0x34] sm:$0xf]
        %v510 = vld [vmem:[%s3 + $0x38] sm:$0xf]
        %v511 = vld [vmem:[%s3 + $0x3c] sm:$0xf]
        %v512 = vld [vmem:[%s5] sm:$0xf]
        %v513 = vld [vmem:[%s5 + $0x4] sm:$0xf]
        %v514 = vld [vmem:[%s5 + $0x8] sm:$0xf]
        %v515 = vld [vmem:[%s5 + $0xc] sm:$0xf]
        %v516 = vld [vmem:[%s5 + $0x10] sm:$0xf]
        %v517 = vld [vmem:[%s5 + $0x14] sm:$0xf]
        %v518 = vld [vmem:[%s5 + $0x18] sm:$0xf]
        %v519 = vld [vmem:[%s5 + $0x1c] sm:$0xf]
        %v520 = vld [vmem:[%s5 + $0x20] sm:$0xf]
        %v521 = vld [vmem:[%s5 + $0x24] sm:$0xf]
        %v522 = vld [vmem:[%s5 + $0x28] sm:$0xf]
        %v523 = vld [vmem:[%s5 + $0x2c] sm:$0xf]
        %v524 = vld [vmem:[%s5 + $0x30] sm:$0xf]
        %v525 = vld [vmem:[%s5 + $0x34] sm:$0xf]
        %v526 = vld [vmem:[%s5 + $0x38] sm:$0xf]
        %v527 = vld [vmem:[%s5 + $0x3c] sm:$0xf]
        %v528 = vld [vmem:[%s7] sm:$0xf]
        %v529 = vld [vmem:[%s7 + $0x4] sm:$0xf]
        %v530 = vld [vmem:[%s7 + $0x8] sm:$0xf]
        %v531 = vld [vmem:[%s7 + $0xc] sm:$0xf]
        %v532 = vld [vmem:[%s7 + $0x10] sm:$0xf]
        %v533 = vld [vmem:[%s7 + $0x14] sm:$0xf]
        %v534 = vld [vmem:[%s7 + $0x18] sm:$0xf]
        %v535 = vld [vmem:[%s7 + $0x1c] sm:$0xf]
        %v536 = vld [vmem:[%s7 + $0x20] sm:$0xf]
        %v537 = vld [vmem:[%s7 + $0x24] sm:$0xf]
        %v538 = vld [vmem:[%s7 + $0x28] sm:$0xf]
        %v539 = vld [vmem:[%s7 + $0x2c] sm:$0xf]
        %v540 = vld [vmem:[%s7 + $0x30] sm:$0xf]
        %v541 = vld [vmem:[%s7 + $0x34] sm:$0xf]
        %v542 = vld [vmem:[%s7 + $0x38] sm:$0xf]
        %v543 = vld [vmem:[%s7 + $0x3c] sm:$0xf]
        %v544 = vld [vmem:[%s4] sm:$0x1]
        %v545 = vld [vmem:[%s6] sm:$0x1]
        %v546 = vld [vmem:[%s8] sm:$0x1]
        %v547 = vld [vmem:[%s9] sm:$0xff]
        %v548 = vld [vmem:[%s9 + $0x8] sm:$0xff]
        %v549 = vld [vmem:[%s9 + $0x10] sm:$0xff]
        %v550 = vld [vmem:[%s10] sm:$0x1]
        %vm551 = vcmask 1043459
        %vm552 = vsmask.f32 7950
        %vm553 = vmand %vm551, %vm552
        %v554 = vld [vmem:[#allocation2 + $0x4] sm:$0x8]
        %v555 = vsel %vm553, 0, %v554
        %556 = vst [vmem:[#allocation2 + $0x4] sm:$0x8] %v555
        %v557 = vld [vmem:[#allocation2 + $0x1c] sm:$0x8]
        %v558 = vsel %vm553, 0, %v557
        %559 = vst [vmem:[#allocation2 + $0x1c] sm:$0x8] %v558
        %v560 = vld [vmem:[#allocation2 + $0x34] sm:$0x8]
        %v561 = vsel %vm553, 0, %v560
        %562 = vst [vmem:[#allocation2 + $0x34] sm:$0x8] %v561
        %v563 = vld [vmem:[#allocation2 + $0x4c] sm:$0x8]
        %v564 = vsel %vm553, 0, %v563
        %565 = vst [vmem:[#allocation2 + $0x4c] sm:$0x8] %v564
        %v566 = vld [vmem:[#allocation2 + $0x64] sm:$0x8]
        %v567 = vsel %vm553, 0, %v566
        %568 = vst [vmem:[#allocation2 + $0x64] sm:$0x8] %v567
        %v569 = vld [vmem:[#allocation2 + $0x7c] sm:$0x8]
        %v570 = vsel %vm553, 0, %v569
        %571 = vst [vmem:[#allocation2 + $0x7c] sm:$0x8] %v570
        %vm572 = vcmask 1040384
        %vm573 = vsmask.f32 256
        %vm574 = vmand %vm572, %vm573
        %v575 = vld [vmem:[#allocation2 + $0x10] sm:$0x1]
        %v576 = vsel %vm574, 0, %v575
        %577 = vst [vmem:[#allocation2 + $0x10] sm:$0x1] %v576
        %v578 = vld [vmem:[#allocation2 + $0x28] sm:$0x1]
        %v579 = vsel %vm574, 0, %v578
        %580 = vst [vmem:[#allocation2 + $0x28] sm:$0x1] %v579
        %v581 = vld [vmem:[#allocation2 + $0x40] sm:$0x1]
        %v582 = vsel %vm574, 0, %v581
        %583 = vst [vmem:[#allocation2 + $0x40] sm:$0x1] %v582
        %v584 = vld [vmem:[#allocation2 + $0x58] sm:$0x1]
        %v585 = vsel %vm574, 0, %v584
        %586 = vst [vmem:[#allocation2 + $0x58] sm:$0x1] %v585
        %v587 = vld [vmem:[#allocation2 + $0x70] sm:$0x1]
        %v588 = vsel %vm574, 0, %v587
        %589 = vst [vmem:[#allocation2 + $0x70] sm:$0x1] %v588
        %v590 = vld [vmem:[#allocation2 + $0x88] sm:$0x1]
        %v591 = vsel %vm574, 0, %v590
        %592 = vst [vmem:[#allocation2 + $0x88] sm:$0x1] %v591
        %s593 = smul.u32 %s495, 2
        %s594 = smul.addr %s593, 4
        %s595 = scalar_lea.vmem %s482, %s594
        %v596 = vld [vmem:[%s595] sm:$0xf]
        %v597 = vld [vmem:[%s595 + $0x4] sm:$0xf]
        %v598 = vld [vmem:[%s595 + $0x8] sm:$0xf]
        %v599 = vld [vmem:[%s595 + $0xc] sm:$0xf]
        %v600 = vld [vmem:[%s595 + $0x10] sm:$0xf]
        %v601 = vld [vmem:[%s595 + $0x14] sm:$0xf]
        %v602 = vld [vmem:[%s595 + $0x18] sm:$0xf]
        %v603 = vld [vmem:[%s595 + $0x1c] sm:$0xf]
        %s604 = smul.addr %s593, 4
        %s605 = scalar_lea.vmem %s487, %s604
        %v606 = vld [vmem:[%s605] sm:$0xf]
        %v607 = vld [vmem:[%s605 + $0x4] sm:$0xf]
        %v608 = vld [vmem:[%s605 + $0x8] sm:$0xf]
        %v609 = vld [vmem:[%s605 + $0xc] sm:$0xf]
        %v610 = vld [vmem:[%s605 + $0x10] sm:$0xf]
        %v611 = vld [vmem:[%s605 + $0x14] sm:$0xf]
        %v612 = vld [vmem:[%s605 + $0x18] sm:$0xf]
        %v613 = vld [vmem:[%s605 + $0x1c] sm:$0xf]
        %s614 = smul.addr %s593, 4
        %s615 = scalar_lea.vmem %s492, %s614
        %v616 = vld [vmem:[%s615] sm:$0xf]
        %v617 = vld [vmem:[%s615 + $0x4] sm:$0xf]
        %v618 = vld [vmem:[%s615 + $0x8] sm:$0xf]
        %v619 = vld [vmem:[%s615 + $0xc] sm:$0xf]
        %v620 = vld [vmem:[%s615 + $0x10] sm:$0xf]
        %v621 = vld [vmem:[%s615 + $0x14] sm:$0xf]
        %v622 = vld [vmem:[%s615 + $0x18] sm:$0xf]
        %v623 = vld [vmem:[%s615 + $0x1c] sm:$0xf]
        %v625 = vlaneseq
        %v626 = vshrl.u32 %v625, 7
        %v627 = vsub.s32 0, %v626
        %v628 = vrot.slane %v544, %v627
        %v638 = vunpack.c.l.b16 %v596
        %v639 = vunpack.c.l.b16 %v597
        %v640 = vunpack.c.l.b16 %v598
        %v641 = vunpack.c.l.b16 %v599
        %v642 = vunpack.c.l.b16 %v600
        %v643 = vunpack.c.l.b16 %v601
        %v644 = vunpack.c.l.b16 %v602
        %v645 = vunpack.c.l.b16 %v603
        %v646 = vpack.c.b16 %v639, %v638
        %v647 = vpack.c.b16 %v641, %v640
        %v648 = vpack.c.b16 %v643, %v642
        %v649 = vpack.c.b16 %v645, %v644
        %v670 = vunpack.c.l.b16 %v496
        %v671 = vunpack.c.l.b16 %v497
        %v672 = vunpack.c.l.b16 %v498
        %v673 = vunpack.c.l.b16 %v499
        %v674 = vunpack.c.l.b16 %v500
        %v675 = vunpack.c.l.b16 %v501
        %v676 = vunpack.c.l.b16 %v502
        %v677 = vunpack.c.l.b16 %v503
        %v678 = vunpack.c.l.b16 %v504
        %v679 = vunpack.c.l.b16 %v505
        %v680 = vunpack.c.l.b16 %v506
        %v681 = vunpack.c.l.b16 %v507
        %v682 = vunpack.c.l.b16 %v508
        %v683 = vunpack.c.l.b16 %v509
        %v684 = vunpack.c.l.b16 %v510
        %v685 = vunpack.c.l.b16 %v511
        %v686 = vpack.c.b16 %v671, %v670
        %v687 = vpack.c.b16 %v673, %v672
        %v688 = vpack.c.b16 %v675, %v674
        %v689 = vpack.c.b16 %v677, %v676
        %v690 = vpack.c.b16 %v679, %v678
        %v691 = vpack.c.b16 %v681, %v680
        %v692 = vpack.c.b16 %v683, %v682
        %v693 = vpack.c.b16 %v685, %v684
        %702 = vmatprep.subr.bf16.mxu0 0
        %703 = vmatpush1.bf16.msra.mxu0 %v693
        %704 = vmatprep.subr.bf16.mxu0 0
        %705 = vmatpush1.bf16.msra.mxu0 %v692
        %706 = vmatprep.subr.bf16.mxu0 0
        %707 = vmatpush1.bf16.msra.mxu0 %v691
        %708 = vmatprep.subr.bf16.mxu0 0
        %709 = vmatpush1.bf16.msra.mxu0 %v690
        %710 = vmatprep.subr.bf16.mxu0 0
        %711 = vmatpush1.bf16.msra.mxu0 %v689
        %712 = vmatprep.subr.bf16.mxu0 0
        %713 = vmatpush1.bf16.msra.mxu0 %v688
        %714 = vmatprep.subr.bf16.mxu0 0
        %715 = vmatpush1.bf16.msra.mxu0 %v687
        %716 = vmatprep.subr.bf16.mxu0 0
        %717 = vmatpush1.bf16.msra.mxu0 %v686
        %718 = vmatprep.subr.bf16.mxu0 0
        %719 = vmatpush2.bf16.msra.mxu0 0
        %720 = vmatprep.subr.bf16.mxu0 0
        %721 = vmatpush2.bf16.msra.mxu0 0
        %722 = vmatprep.subr.bf16.mxu0 0
        %723 = vmatpush2.bf16.msra.mxu0 0
        %724 = vmatprep.subr.bf16.mxu0 0
        %725 = vmatpush2.bf16.msra.mxu0 0
        %726 = vmatprep.subr.bf16.mxu0 0
        %727 = vmatpush2.bf16.msra.mxu0 0
        %728 = vmatprep.subr.bf16.mxu0 0
        %729 = vmatpush2.bf16.msra.mxu0 0
        %730 = vmatprep.subr.bf16.mxu0 0
        %731 = vmatpush2.bf16.msra.mxu0 0
        %732 = vmatprep.subr.bf16.mxu0 0
        %733 = vmatpush2.bf16.msra.mxu0 0
        %734 = vmatprep.mubr.bf16.mxu0 0
        %735 = vmatmul.mubr.bf16.gmra.mxu0 %v646
        %v736 = vpop.f32.mrf.mxu0
        %v737 = vadd.f32 %v628, %v736
        %v738 = vpop.f32.mrf.mxu0
        %v739 = vpop.f32.mrf.mxu0
        %v740 = vadd.f32 %v628, %v739
        %v741 = vpop.f32.mrf.mxu0
        %742 = vmatprep.mubr.bf16.mxu0 0
        %743 = vmatmul.mubr.bf16.gmra.mxu0 %v647
        %v744 = vpop.f32.mrf.mxu0
        %v745 = vadd.f32 %v628, %v744
        %v746 = vpop.f32.mrf.mxu0
        %v747 = vpop.f32.mrf.mxu0
        %v748 = vadd.f32 %v628, %v747
        %v749 = vpop.f32.mrf.mxu0
        %750 = vmatprep.mubr.bf16.mxu0 0
        %751 = vmatmul.mubr.bf16.gmra.mxu0 %v648
        %v752 = vpop.f32.mrf.mxu0
        %v753 = vadd.f32 %v628, %v752
        %v754 = vpop.f32.mrf.mxu0
        %v755 = vpop.f32.mrf.mxu0
        %v756 = vadd.f32 %v628, %v755
        %v757 = vpop.f32.mrf.mxu0
        %758 = vmatprep.mubr.bf16.mxu0 0
        %759 = vmatmul.mubr.bf16.gmra.mxu0 %v649
        %v760 = vpop.f32.mrf.mxu0
        %v761 = vadd.f32 %v628, %v760
        %v762 = vpop.f32.mrf.mxu0
        %v763 = vpop.f32.mrf.mxu0
        %v764 = vadd.f32 %v628, %v763
        %v765 = vpop.f32.mrf.mxu0
        %766 = vdwg.mxu0
        %v767 = vmax.f32 %v737, 0.0
        %v768 = vmax.f32 %v740, 0.0
        %v769 = vmax.f32 %v745, 0.0
        %v770 = vmax.f32 %v748, 0.0
        %v771 = vmax.f32 %v753, 0.0
        %v772 = vmax.f32 %v756, 0.0
        %v773 = vmax.f32 %v761, 0.0
        %v774 = vmax.f32 %v764, 0.0
        %v776 = vlaneseq
        %v777 = vshrl.u32 %v776, 7
        %v778 = vsub.s32 0, %v777
        %v779 = vrot.slane %v545, %v778
        %v789 = vunpack.c.l.b16 %v606
        %v790 = vunpack.c.l.b16 %v607
        %v791 = vunpack.c.l.b16 %v608
        %v792 = vunpack.c.l.b16 %v609
        %v793 = vunpack.c.l.b16 %v610
        %v794 = vunpack.c.l.b16 %v611
        %v795 = vunpack.c.l.b16 %v612
        %v796 = vunpack.c.l.b16 %v613
        %v797 = vpack.c.b16 %v790, %v789
        %v798 = vpack.c.b16 %v792, %v791
        %v799 = vpack.c.b16 %v794, %v793
        %v800 = vpack.c.b16 %v796, %v795
        %v821 = vunpack.c.l.b16 %v512
        %v822 = vunpack.c.l.b16 %v513
        %v823 = vunpack.c.l.b16 %v514
        %v824 = vunpack.c.l.b16 %v515
        %v825 = vunpack.c.l.b16 %v516
        %v826 = vunpack.c.l.b16 %v517
        %v827 = vunpack.c.l.b16 %v518
        %v828 = vunpack.c.l.b16 %v519
        %v829 = vunpack.c.l.b16 %v520
        %v830 = vunpack.c.l.b16 %v521
        %v831 = vunpack.c.l.b16 %v522
        %v832 = vunpack.c.l.b16 %v523
        %v833 = vunpack.c.l.b16 %v524
        %v834 = vunpack.c.l.b16 %v525
        %v835 = vunpack.c.l.b16 %v526
        %v836 = vunpack.c.l.b16 %v527
        %v837 = vpack.c.b16 %v822, %v821
        %v838 = vpack.c.b16 %v824, %v823
        %v839 = vpack.c.b16 %v826, %v825
        %v840 = vpack.c.b16 %v828, %v827
        %v841 = vpack.c.b16 %v830, %v829
        %v842 = vpack.c.b16 %v832, %v831
        %v843 = vpack.c.b16 %v834, %v833
        %v844 = vpack.c.b16 %v836, %v835
        %853 = vmatprep.subr.bf16.mxu0 0
        %854 = vmatpush1.bf16.msra.mxu0 %v844
        %855 = vmatprep.subr.bf16.mxu0 0
        %856 = vmatpush1.bf16.msra.mxu0 %v843
        %857 = vmatprep.subr.bf16.mxu0 0
        %858 = vmatpush1.bf16.msra.mxu0 %v842
        %859 = vmatprep.subr.bf16.mxu0 0
        %860 = vmatpush1.bf16.msra.mxu0 %v841
        %861 = vmatprep.subr.bf16.mxu0 0
        %862 = vmatpush1.bf16.msra.mxu0 %v840
        %863 = vmatprep.subr.bf16.mxu0 0
        %864 = vmatpush1.bf16.msra.mxu0 %v839
        %865 = vmatprep.subr.bf16.mxu0 0
        %866 = vmatpush1.bf16.msra.mxu0 %v838
        %867 = vmatprep.subr.bf16.mxu0 0
        %868 = vmatpush1.bf16.msra.mxu0 %v837
        %869 = vmatprep.subr.bf16.mxu0 0
        %870 = vmatpush2.bf16.msra.mxu0 0
        %871 = vmatprep.subr.bf16.mxu0 0
        %872 = vmatpush2.bf16.msra.mxu0 0
        %873 = vmatprep.subr.bf16.mxu0 0
        %874 = vmatpush2.bf16.msra.mxu0 0
        %875 = vmatprep.subr.bf16.mxu0 0
        %876 = vmatpush2.bf16.msra.mxu0 0
        %877 = vmatprep.subr.bf16.mxu0 0
        %878 = vmatpush2.bf16.msra.mxu0 0
        %879 = vmatprep.subr.bf16.mxu0 0
        %880 = vmatpush2.bf16.msra.mxu0 0
        %881 = vmatprep.subr.bf16.mxu0 0
        %882 = vmatpush2.bf16.msra.mxu0 0
        %883 = vmatprep.subr.bf16.mxu0 0
        %884 = vmatpush2.bf16.msra.mxu0 0
        %885 = vmatprep.mubr.bf16.mxu0 0
        %886 = vmatmul.mubr.bf16.gmra.mxu0 %v797
        %v887 = vpop.f32.mrf.mxu0
        %v888 = vadd.f32 %v779, %v887
        %v889 = vpop.f32.mrf.mxu0
        %v890 = vpop.f32.mrf.mxu0
        %v891 = vadd.f32 %v779, %v890
        %v892 = vpop.f32.mrf.mxu0
        %893 = vmatprep.mubr.bf16.mxu0 0
        %894 = vmatmul.mubr.bf16.gmra.mxu0 %v798
        %v895 = vpop.f32.mrf.mxu0
        %v896 = vadd.f32 %v779, %v895
        %v897 = vpop.f32.mrf.mxu0
        %v898 = vpop.f32.mrf.mxu0
        %v899 = vadd.f32 %v779, %v898
        %v900 = vpop.f32.mrf.mxu0
        %901 = vmatprep.mubr.bf16.mxu0 0
        %902 = vmatmul.mubr.bf16.gmra.mxu0 %v799
        %v903 = vpop.f32.mrf.mxu0
        %v904 = vadd.f32 %v779, %v903
        %v905 = vpop.f32.mrf.mxu0
        %v906 = vpop.f32.mrf.mxu0
        %v907 = vadd.f32 %v779, %v906
        %v908 = vpop.f32.mrf.mxu0
        %909 = vmatprep.mubr.bf16.mxu0 0
        %910 = vmatmul.mubr.bf16.gmra.mxu0 %v800
        %v911 = vpop.f32.mrf.mxu0
        %v912 = vadd.f32 %v779, %v911
        %v913 = vpop.f32.mrf.mxu0
        %v914 = vpop.f32.mrf.mxu0
        %v915 = vadd.f32 %v779, %v914
        %v916 = vpop.f32.mrf.mxu0
        %917 = vdwg.mxu0
        %v918 = vmax.f32 %v888, 0.0
        %v919 = vmax.f32 %v891, 0.0
        %v920 = vmax.f32 %v896, 0.0
        %v921 = vmax.f32 %v899, 0.0
        %v922 = vmax.f32 %v904, 0.0
        %v923 = vmax.f32 %v907, 0.0
        %v924 = vmax.f32 %v912, 0.0
        %v925 = vmax.f32 %v915, 0.0
        %v927 = vlaneseq
        %v928 = vshrl.u32 %v927, 7
        %v929 = vsub.s32 0, %v928
        %v930 = vrot.slane %v546, %v929
        %v940 = vunpack.c.l.b16 %v616
        %v941 = vunpack.c.l.b16 %v617
        %v942 = vunpack.c.l.b16 %v618
        %v943 = vunpack.c.l.b16 %v619
        %v944 = vunpack.c.l.b16 %v620
        %v945 = vunpack.c.l.b16 %v621
        %v946 = vunpack.c.l.b16 %v622
        %v947 = vunpack.c.l.b16 %v623
        %v948 = vpack.c.b16 %v941, %v940
        %v949 = vpack.c.b16 %v943, %v942
        %v950 = vpack.c.b16 %v945, %v944
        %v951 = vpack.c.b16 %v947, %v946
        %v972 = vunpack.c.l.b16 %v528
        %v973 = vunpack.c.l.b16 %v529
        %v974 = vunpack.c.l.b16 %v530
        %v975 = vunpack.c.l.b16 %v531
        %v976 = vunpack.c.l.b16 %v532
        %v977 = vunpack.c.l.b16 %v533
        %v978 = vunpack.c.l.b16 %v534
        %v979 = vunpack.c.l.b16 %v535
        %v980 = vunpack.c.l.b16 %v536
        %v981 = vunpack.c.l.b16 %v537
        %v982 = vunpack.c.l.b16 %v538
        %v983 = vunpack.c.l.b16 %v539
        %v984 = vunpack.c.l.b16 %v540
        %v985 = vunpack.c.l.b16 %v541
        %v986 = vunpack.c.l.b16 %v542
        %v987 = vunpack.c.l.b16 %v543
        %v988 = vpack.c.b16 %v973, %v972
        %v989 = vpack.c.b16 %v975, %v974
        %v990 = vpack.c.b16 %v977, %v976
        %v991 = vpack.c.b16 %v979, %v978
        %v992 = vpack.c.b16 %v981, %v980
        %v993 = vpack.c.b16 %v983, %v982
        %v994 = vpack.c.b16 %v985, %v984
        %v995 = vpack.c.b16 %v987, %v986
        %1004 = vmatprep.subr.bf16.mxu0 0
        %1005 = vmatpush1.bf16.msra.mxu0 %v995
        %1006 = vmatprep.subr.bf16.mxu0 0
        %1007 = vmatpush1.bf16.msra.mxu0 %v994
        %1008 = vmatprep.subr.bf16.mxu0 0
        %1009 = vmatpush1.bf16.msra.mxu0 %v993
        %1010 = vmatprep.subr.bf16.mxu0 0
        %1011 = vmatpush1.bf16.msra.mxu0 %v992
        %1012 = vmatprep.subr.bf16.mxu0 0
        %1013 = vmatpush1.bf16.msra.mxu0 %v991
        %1014 = vmatprep.subr.bf16.mxu0 0
        %1015 = vmatpush1.bf16.msra.mxu0 %v990
        %1016 = vmatprep.subr.bf16.mxu0 0
        %1017 = vmatpush1.bf16.msra.mxu0 %v989
        %1018 = vmatprep.subr.bf16.mxu0 0
        %1019 = vmatpush1.bf16.msra.mxu0 %v988
        %1020 = vmatprep.subr.bf16.mxu0 0
        %1021 = vmatpush2.bf16.msra.mxu0 0
        %1022 = vmatprep.subr.bf16.mxu0 0
        %1023 = vmatpush2.bf16.msra.mxu0 0
        %1024 = vmatprep.subr.bf16.mxu0 0
        %1025 = vmatpush2.bf16.msra.mxu0 0
        %1026 = vmatprep.subr.bf16.mxu0 0
        %1027 = vmatpush2.bf16.msra.mxu0 0
        %1028 = vmatprep.subr.bf16.mxu0 0
        %1029 = vmatpush2.bf16.msra.mxu0 0
        %1030 = vmatprep.subr.bf16.mxu0 0
        %1031 = vmatpush2.bf16.msra.mxu0 0
        %1032 = vmatprep.subr.bf16.mxu0 0
        %1033 = vmatpush2.bf16.msra.mxu0 0
        %1034 = vmatprep.subr.bf16.mxu0 0
        %1035 = vmatpush2.bf16.msra.mxu0 0
        %1036 = vmatprep.mubr.bf16.mxu0 0
        %1037 = vmatmul.mubr.bf16.gmra.mxu0 %v948
        %v1038 = vpop.f32.mrf.mxu0
        %v1039 = vadd.f32 %v930, %v1038
        %v1040 = vpop.f32.mrf.mxu0
        %v1041 = vpop.f32.mrf.mxu0
        %v1042 = vadd.f32 %v930, %v1041
        %v1043 = vpop.f32.mrf.mxu0
        %1044 = vmatprep.mubr.bf16.mxu0 0
        %1045 = vmatmul.mubr.bf16.gmra.mxu0 %v949
        %v1046 = vpop.f32.mrf.mxu0
        %v1047 = vadd.f32 %v930, %v1046
        %v1048 = vpop.f32.mrf.mxu0
        %v1049 = vpop.f32.mrf.mxu0
        %v1050 = vadd.f32 %v930, %v1049
        %v1051 = vpop.f32.mrf.mxu0
        %1052 = vmatprep.mubr.bf16.mxu0 0
        %1053 = vmatmul.mubr.bf16.gmra.mxu0 %v950
        %v1054 = vpop.f32.mrf.mxu0
        %v1055 = vadd.f32 %v930, %v1054
        %v1056 = vpop.f32.mrf.mxu0
        %v1057 = vpop.f32.mrf.mxu0
        %v1058 = vadd.f32 %v930, %v1057
        %v1059 = vpop.f32.mrf.mxu0
        %1060 = vmatprep.mubr.bf16.mxu0 0
        %1061 = vmatmul.mubr.bf16.gmra.mxu0 %v951
        %v1062 = vpop.f32.mrf.mxu0
        %v1063 = vadd.f32 %v930, %v1062
        %v1064 = vpop.f32.mrf.mxu0
        %v1065 = vpop.f32.mrf.mxu0
        %v1066 = vadd.f32 %v930, %v1065
        %v1067 = vpop.f32.mrf.mxu0
        %1068 = vdwg.mxu0
        %v1069 = vmax.f32 %v1039, 0.0
        %v1070 = vmax.f32 %v1042, 0.0
        %v1071 = vmax.f32 %v1047, 0.0
        %v1072 = vmax.f32 %v1050, 0.0
        %v1073 = vmax.f32 %v1055, 0.0
        %v1074 = vmax.f32 %v1058, 0.0
        %v1075 = vmax.f32 %v1063, 0.0
        %v1076 = vmax.f32 %v1066, 0.0
        %vm1077 = vcmask 64512
        %v1079 = vsel %vm1077, %v918, 0
        %v1082 = vsel %vm1077, %v919, 0
        %v1085 = vsel %vm1077, %v920, 0
        %v1088 = vsel %vm1077, %v921, 0
        %v1091 = vsel %vm1077, %v922, 0
        %v1094 = vsel %vm1077, %v923, 0
        %v1097 = vsel %vm1077, %v924, 0
        %v1100 = vsel %vm1077, %v925, 0
        %1102 = vmatprep.subr.mxu0 0.0
        %1103 = vmatpush1.msra.mxu0 0.0
        %1104 = vmatprep.subr.mxu0 0.0
        %1105 = vmatpush1.msra.mxu0 0.0
        %1106 = vmatprep.subr.mxu0 0.0
        %1107 = vmatpush1.msra.mxu0 0.0
        %1108 = vmatprep.subr.mxu0 0.0
        %1109 = vmatpush1.msra.mxu0 0.0
        %1110 = vmatprep.subr.mxu0 0.0
        %1111 = vmatpush1.msra.mxu0 0.0
        %1112 = vmatprep.subr.mxu0 0.0
        %1113 = vmatpush1.msra.mxu0 0.0
        %1114 = vmatprep.subr.mxu0 0.0
        %1115 = vmatpush1.msra.mxu0 0.0
        %1116 = vmatprep.subr.mxu0 0.0
        %1117 = vmatpush1.msra.mxu0 0.0
        %1118 = vmatprep.subr.mxu0 0.0
        %1119 = vmatpush1.msra.mxu0 0.0
        %1120 = vmatprep.subr.mxu0 0.0
        %1121 = vmatpush1.msra.mxu0 0.0
        %1122 = vmatprep.subr.mxu0 0.0
        %1123 = vmatpush1.msra.mxu0 0.0
        %1124 = vmatprep.subr.mxu0 0.0
        %1125 = vmatpush1.msra.mxu0 0.0
        %1126 = vmatprep.subr.mxu0 0.0
        %1127 = vmatpush1.msra.mxu0 0.0
        %1128 = vmatprep.subr.mxu0 0.0
        %1129 = vmatpush1.msra.mxu0 0.0
        %1130 = vmatprep.subr.mxu0 0.0
        %1131 = vmatpush1.msra.mxu0 0.0
        %1132 = vmatprep.subr.mxu0 0.0
        %1133 = vmatpush1.msra.mxu0 %v548
        %1134 = vmatprep.subr.mxu0 0.0
        %1135 = vmatpush2.msra.mxu0 0.0
        %1136 = vmatprep.subr.mxu0 0.0
        %1137 = vmatpush2.msra.mxu0 0.0
        %1138 = vmatprep.subr.mxu0 0.0
        %1139 = vmatpush2.msra.mxu0 0.0
        %1140 = vmatprep.subr.mxu0 0.0
        %1141 = vmatpush2.msra.mxu0 0.0
        %1142 = vmatprep.subr.mxu0 0.0
        %1143 = vmatpush2.msra.mxu0 0.0
        %1144 = vmatprep.subr.mxu0 0.0
        %1145 = vmatpush2.msra.mxu0 0.0
        %1146 = vmatprep.subr.mxu0 0.0
        %1147 = vmatpush2.msra.mxu0 0.0
        %1148 = vmatprep.subr.mxu0 0.0
        %1149 = vmatpush2.msra.mxu0 0.0
        %1150 = vmatprep.subr.mxu0 0.0
        %1151 = vmatpush2.msra.mxu0 0.0
        %1152 = vmatprep.subr.mxu0 0.0
        %1153 = vmatpush2.msra.mxu0 0.0
        %1154 = vmatprep.subr.mxu0 0.0
        %1155 = vmatpush2.msra.mxu0 0.0
        %1156 = vmatprep.subr.mxu0 0.0
        %1157 = vmatpush2.msra.mxu0 0.0
        %1158 = vmatprep.subr.mxu0 0.0
        %1159 = vmatpush2.msra.mxu0 0.0
        %1160 = vmatprep.subr.mxu0 0.0
        %1161 = vmatpush2.msra.mxu0 0.0
        %1162 = vmatprep.subr.mxu0 0.0
        %1163 = vmatpush2.msra.mxu0 0.0
        %1164 = vmatprep.subr.mxu0 0.0
        %1165 = vmatpush2.msra.mxu0 0.0
        %1166 = vmatprep.mubr.f32.mxu0 0.0
        %1167 = vmatmul.mubr.f32.gmra.mxu0 %v1079
        %v1168 = vpop.f32.mrf.mxu0
        %v1169 = vadd.f32 0.0, %v1168
        %v1170 = vpop.f32.mrf.mxu0
        %1171 = vmatprep.mubr.f32.mxu0 0.0
        %1172 = vmatmul.mubr.f32.gmra.mxu0 %v1082
        %v1173 = vpop.f32.mrf.mxu0
        %v1174 = vadd.f32 0.0, %v1173
        %v1175 = vpop.f32.mrf.mxu0
        %1176 = vmatprep.mubr.f32.mxu0 0.0
        %1177 = vmatmul.mubr.f32.gmra.mxu0 %v1085
        %v1178 = vpop.f32.mrf.mxu0
        %v1179 = vadd.f32 0.0, %v1178
        %v1180 = vpop.f32.mrf.mxu0
        %1181 = vmatprep.mubr.f32.mxu0 0.0
        %1182 = vmatmul.mubr.f32.gmra.mxu0 %v1088
        %v1183 = vpop.f32.mrf.mxu0
        %v1184 = vadd.f32 0.0, %v1183
        %v1185 = vpop.f32.mrf.mxu0
        %1186 = vmatprep.mubr.f32.mxu0 0.0
        %1187 = vmatmul.mubr.f32.gmra.mxu0 %v1091
        %v1188 = vpop.f32.mrf.mxu0
        %v1189 = vadd.f32 0.0, %v1188
        %v1190 = vpop.f32.mrf.mxu0
        %1191 = vmatprep.mubr.f32.mxu0 0.0
        %1192 = vmatmul.mubr.f32.gmra.mxu0 %v1094
        %v1193 = vpop.f32.mrf.mxu0
        %v1194 = vadd.f32 0.0, %v1193
        %v1195 = vpop.f32.mrf.mxu0
        %1196 = vmatprep.mubr.f32.mxu0 0.0
        %1197 = vmatmul.mubr.f32.gmra.mxu0 %v1097
        %v1198 = vpop.f32.mrf.mxu0
        %v1199 = vadd.f32 0.0, %v1198
        %v1200 = vpop.f32.mrf.mxu0
        %1201 = vmatprep.mubr.f32.mxu0 0.0
        %1202 = vmatmul.mubr.f32.gmra.mxu0 %v1100
        %v1203 = vpop.f32.mrf.mxu0
        %v1204 = vadd.f32 0.0, %v1203
        %v1205 = vpop.f32.mrf.mxu0
        %1206 = vdwg.mxu0
        %v1208 = vsel %vm1077, %v767, 0
        %v1211 = vsel %vm1077, %v768, 0
        %v1214 = vsel %vm1077, %v769, 0
        %v1217 = vsel %vm1077, %v770, 0
        %v1220 = vsel %vm1077, %v771, 0
        %v1223 = vsel %vm1077, %v772, 0
        %v1226 = vsel %vm1077, %v773, 0
        %v1229 = vsel %vm1077, %v774, 0
        %1231 = vmatprep.subr.mxu0 0.0
        %1232 = vmatpush1.msra.mxu0 0.0
        %1233 = vmatprep.subr.mxu0 0.0
        %1234 = vmatpush1.msra.mxu0 0.0
        %1235 = vmatprep.subr.mxu0 0.0
        %1236 = vmatpush1.msra.mxu0 0.0
        %1237 = vmatprep.subr.mxu0 0.0
        %1238 = vmatpush1.msra.mxu0 0.0
        %1239 = vmatprep.subr.mxu0 0.0
        %1240 = vmatpush1.msra.mxu0 0.0
        %1241 = vmatprep.subr.mxu0 0.0
        %1242 = vmatpush1.msra.mxu0 0.0
        %1243 = vmatprep.subr.mxu0 0.0
        %1244 = vmatpush1.msra.mxu0 0.0
        %1245 = vmatprep.subr.mxu0 0.0
        %1246 = vmatpush1.msra.mxu0 0.0
        %1247 = vmatprep.subr.mxu0 0.0
        %1248 = vmatpush1.msra.mxu0 0.0
        %1249 = vmatprep.subr.mxu0 0.0
        %1250 = vmatpush1.msra.mxu0 0.0
        %1251 = vmatprep.subr.mxu0 0.0
        %1252 = vmatpush1.msra.mxu0 0.0
        %1253 = vmatprep.subr.mxu0 0.0
        %1254 = vmatpush1.msra.mxu0 0.0
        %1255 = vmatprep.subr.mxu0 0.0
        %1256 = vmatpush1.msra.mxu0 0.0
        %1257 = vmatprep.subr.mxu0 0.0
        %1258 = vmatpush1.msra.mxu0 0.0
        %1259 = vmatprep.subr.mxu0 0.0
        %1260 = vmatpush1.msra.mxu0 0.0
        %1261 = vmatprep.subr.mxu0 0.0
        %1262 = vmatpush1.msra.mxu0 %v547
        %1263 = vmatprep.subr.mxu0 0.0
        %1264 = vmatpush2.msra.mxu0 0.0
        %1265 = vmatprep.subr.mxu0 0.0
        %1266 = vmatpush2.msra.mxu0 0.0
        %1267 = vmatprep.subr.mxu0 0.0
        %1268 = vmatpush2.msra.mxu0 0.0
        %1269 = vmatprep.subr.mxu0 0.0
        %1270 = vmatpush2.msra.mxu0 0.0
        %1271 = vmatprep.subr.mxu0 0.0
        %1272 = vmatpush2.msra.mxu0 0.0
        %1273 = vmatprep.subr.mxu0 0.0
        %1274 = vmatpush2.msra.mxu0 0.0
        %1275 = vmatprep.subr.mxu0 0.0
        %1276 = vmatpush2.msra.mxu0 0.0
        %1277 = vmatprep.subr.mxu0 0.0
        %1278 = vmatpush2.msra.mxu0 0.0
        %1279 = vmatprep.subr.mxu0 0.0
        %1280 = vmatpush2.msra.mxu0 0.0
        %1281 = vmatprep.subr.mxu0 0.0
        %1282 = vmatpush2.msra.mxu0 0.0
        %1283 = vmatprep.subr.mxu0 0.0
        %1284 = vmatpush2.msra.mxu0 0.0
        %1285 = vmatprep.subr.mxu0 0.0
        %1286 = vmatpush2.msra.mxu0 0.0
        %1287 = vmatprep.subr.mxu0 0.0
        %1288 = vmatpush2.msra.mxu0 0.0
        %1289 = vmatprep.subr.mxu0 0.0
        %1290 = vmatpush2.msra.mxu0 0.0
        %1291 = vmatprep.subr.mxu0 0.0
        %1292 = vmatpush2.msra.mxu0 0.0
        %1293 = vmatprep.subr.mxu0 0.0
        %1294 = vmatpush2.msra.mxu0 0.0
        %1295 = vmatprep.mubr.f32.mxu0 0.0
        %1296 = vmatmul.mubr.f32.gmra.mxu0 %v1208
        %v1297 = vpop.f32.mrf.mxu0
        %v1298 = vadd.f32 %v1169, %v1297
        %v1299 = vpop.f32.mrf.mxu0
        %1300 = vmatprep.mubr.f32.mxu0 0.0
        %1301 = vmatmul.mubr.f32.gmra.mxu0 %v1211
        %v1302 = vpop.f32.mrf.mxu0
        %v1303 = vadd.f32 %v1174, %v1302
        %v1304 = vpop.f32.mrf.mxu0
        %1305 = vmatprep.mubr.f32.mxu0 0.0
        %1306 = vmatmul.mubr.f32.gmra.mxu0 %v1214
        %v1307 = vpop.f32.mrf.mxu0
        %v1308 = vadd.f32 %v1179, %v1307
        %v1309 = vpop.f32.mrf.mxu0
        %1310 = vmatprep.mubr.f32.mxu0 0.0
        %1311 = vmatmul.mubr.f32.gmra.mxu0 %v1217
        %v1312 = vpop.f32.mrf.mxu0
        %v1313 = vadd.f32 %v1184, %v1312
        %v1314 = vpop.f32.mrf.mxu0
        %1315 = vmatprep.mubr.f32.mxu0 0.0
        %1316 = vmatmul.mubr.f32.gmra.mxu0 %v1220
        %v1317 = vpop.f32.mrf.mxu0
        %v1318 = vadd.f32 %v1189, %v1317
        %v1319 = vpop.f32.mrf.mxu0
        %1320 = vmatprep.mubr.f32.mxu0 0.0
        %1321 = vmatmul.mubr.f32.gmra.mxu0 %v1223
        %v1322 = vpop.f32.mrf.mxu0
        %v1323 = vadd.f32 %v1194, %v1322
        %v1324 = vpop.f32.mrf.mxu0
        %1325 = vmatprep.mubr.f32.mxu0 0.0
        %1326 = vmatmul.mubr.f32.gmra.mxu0 %v1226
        %v1327 = vpop.f32.mrf.mxu0
        %v1328 = vadd.f32 %v1199, %v1327
        %v1329 = vpop.f32.mrf.mxu0
        %1330 = vmatprep.mubr.f32.mxu0 0.0
        %1331 = vmatmul.mubr.f32.gmra.mxu0 %v1229
        %v1332 = vpop.f32.mrf.mxu0
        %v1333 = vadd.f32 %v1204, %v1332
        %v1334 = vpop.f32.mrf.mxu0
        %1335 = vdwg.mxu0
        %v1337 = vsel %vm1077, %v1069, 0
        %v1340 = vsel %vm1077, %v1070, 0
        %v1343 = vsel %vm1077, %v1071, 0
        %v1346 = vsel %vm1077, %v1072, 0
        %v1349 = vsel %vm1077, %v1073, 0
        %v1352 = vsel %vm1077, %v1074, 0
        %v1355 = vsel %vm1077, %v1075, 0
        %v1358 = vsel %vm1077, %v1076, 0
        %1360 = vmatprep.subr.mxu0 0.0
        %1361 = vmatpush1.msra.mxu0 0.0
        %1362 = vmatprep.subr.mxu0 0.0
        %1363 = vmatpush1.msra.mxu0 0.0
        %1364 = vmatprep.subr.mxu0 0.0
        %1365 = vmatpush1.msra.mxu0 0.0
        %1366 = vmatprep.subr.mxu0 0.0
        %1367 = vmatpush1.msra.mxu0 0.0
        %1368 = vmatprep.subr.mxu0 0.0
        %1369 = vmatpush1.msra.mxu0 0.0
        %1370 = vmatprep.subr.mxu0 0.0
        %1371 = vmatpush1.msra.mxu0 0.0
        %1372 = vmatprep.subr.mxu0 0.0
        %1373 = vmatpush1.msra.mxu0 0.0
        %1374 = vmatprep.subr.mxu0 0.0
        %1375 = vmatpush1.msra.mxu0 0.0
        %1376 = vmatprep.subr.mxu0 0.0
        %1377 = vmatpush1.msra.mxu0 0.0
        %1378 = vmatprep.subr.mxu0 0.0
        %1379 = vmatpush1.msra.mxu0 0.0
        %1380 = vmatprep.subr.mxu0 0.0
        %1381 = vmatpush1.msra.mxu0 0.0
        %1382 = vmatprep.subr.mxu0 0.0
        %1383 = vmatpush1.msra.mxu0 0.0
        %1384 = vmatprep.subr.mxu0 0.0
        %1385 = vmatpush1.msra.mxu0 0.0
        %1386 = vmatprep.subr.mxu0 0.0
        %1387 = vmatpush1.msra.mxu0 0.0
        %1388 = vmatprep.subr.mxu0 0.0
        %1389 = vmatpush1.msra.mxu0 0.0
        %1390 = vmatprep.subr.mxu0 0.0
        %1391 = vmatpush1.msra.mxu0 %v549
        %1392 = vmatprep.subr.mxu0 0.0
        %1393 = vmatpush2.msra.mxu0 0.0
        %1394 = vmatprep.subr.mxu0 0.0
        %1395 = vmatpush2.msra.mxu0 0.0
        %1396 = vmatprep.subr.mxu0 0.0
        %1397 = vmatpush2.msra.mxu0 0.0
        %1398 = vmatprep.subr.mxu0 0.0
        %1399 = vmatpush2.msra.mxu0 0.0
        %1400 = vmatprep.subr.mxu0 0.0
        %1401 = vmatpush2.msra.mxu0 0.0
        %1402 = vmatprep.subr.mxu0 0.0
        %1403 = vmatpush2.msra.mxu0 0.0
        %1404 = vmatprep.subr.mxu0 0.0
        %1405 = vmatpush2.msra.mxu0 0.0
        %1406 = vmatprep.subr.mxu0 0.0
        %1407 = vmatpush2.msra.mxu0 0.0
        %1408 = vmatprep.subr.mxu0 0.0
        %1409 = vmatpush2.msra.mxu0 0.0
        %1410 = vmatprep.subr.mxu0 0.0
        %1411 = vmatpush2.msra.mxu0 0.0
        %1412 = vmatprep.subr.mxu0 0.0
        %1413 = vmatpush2.msra.mxu0 0.0
        %1414 = vmatprep.subr.mxu0 0.0
        %1415 = vmatpush2.msra.mxu0 0.0
        %1416 = vmatprep.subr.mxu0 0.0
        %1417 = vmatpush2.msra.mxu0 0.0
        %1418 = vmatprep.subr.mxu0 0.0
        %1419 = vmatpush2.msra.mxu0 0.0
        %1420 = vmatprep.subr.mxu0 0.0
        %1421 = vmatpush2.msra.mxu0 0.0
        %1422 = vmatprep.subr.mxu0 0.0
        %1423 = vmatpush2.msra.mxu0 0.0
        %1424 = vmatprep.mubr.f32.mxu0 0.0
        %1425 = vmatmul.mubr.f32.gmra.mxu0 %v1337
        %v1426 = vpop.f32.mrf.mxu0
        %v1427 = vadd.f32 0.0, %v1426
        %v1428 = vpop.f32.mrf.mxu0
        %1429 = vmatprep.mubr.f32.mxu0 0.0
        %1430 = vmatmul.mubr.f32.gmra.mxu0 %v1340
        %v1431 = vpop.f32.mrf.mxu0
        %v1432 = vadd.f32 0.0, %v1431
        %v1433 = vpop.f32.mrf.mxu0
        %1434 = vmatprep.mubr.f32.mxu0 0.0
        %1435 = vmatmul.mubr.f32.gmra.mxu0 %v1343
        %v1436 = vpop.f32.mrf.mxu0
        %v1437 = vadd.f32 0.0, %v1436
        %v1438 = vpop.f32.mrf.mxu0
        %1439 = vmatprep.mubr.f32.mxu0 0.0
        %1440 = vmatmul.mubr.f32.gmra.mxu0 %v1346
        %v1441 = vpop.f32.mrf.mxu0
        %v1442 = vadd.f32 0.0, %v1441
        %v1443 = vpop.f32.mrf.mxu0
        %1444 = vmatprep.mubr.f32.mxu0 0.0
        %1445 = vmatmul.mubr.f32.gmra.mxu0 %v1349
        %v1446 = vpop.f32.mrf.mxu0
        %v1447 = vadd.f32 0.0, %v1446
        %v1448 = vpop.f32.mrf.mxu0
        %1449 = vmatprep.mubr.f32.mxu0 0.0
        %1450 = vmatmul.mubr.f32.gmra.mxu0 %v1352
        %v1451 = vpop.f32.mrf.mxu0
        %v1452 = vadd.f32 0.0, %v1451
        %v1453 = vpop.f32.mrf.mxu0
        %1454 = vmatprep.mubr.f32.mxu0 0.0
        %1455 = vmatmul.mubr.f32.gmra.mxu0 %v1355
        %v1456 = vpop.f32.mrf.mxu0
        %v1457 = vadd.f32 0.0, %v1456
        %v1458 = vpop.f32.mrf.mxu0
        %1459 = vmatprep.mubr.f32.mxu0 0.0
        %1460 = vmatmul.mubr.f32.gmra.mxu0 %v1358
        %v1461 = vpop.f32.mrf.mxu0
        %v1462 = vadd.f32 0.0, %v1461
        %v1463 = vpop.f32.mrf.mxu0
        %1464 = vdwg.mxu0
        %v1465 = vadd.f32 %v1298, %v1427
        %v1466 = vadd.f32 %v1303, %v1432
        %v1467 = vadd.f32 %v1308, %v1437
        %v1468 = vadd.f32 %v1313, %v1442
        %v1469 = vadd.f32 %v1318, %v1447
        %v1470 = vadd.f32 %v1323, %v1452
        %v1471 = vadd.f32 %v1328, %v1457
        %v1472 = vadd.f32 %v1333, %v1462
        %v1474 = vlaneseq
        %v1475 = vshrl.u32 %v1474, 7
        %v1476 = vsub.s32 0, %v1475
        %v1477 = vrot.slane %v550, %v1476
        %v1479 = vadd.f32 %v1465, %v1477
        %v1480 = vadd.f32 %v1466, %v1477
        %v1481 = vadd.f32 %v1467, %v1477
        %v1482 = vadd.f32 %v1468, %v1477
        %v1483 = vadd.f32 %v1469, %v1477
        %v1484 = vadd.f32 %v1470, %v1477
        %v1485 = vadd.f32 %v1471, %v1477
        %v1486 = vadd.f32 %v1472, %v1477
        %1495 = vrot.lane.b32.xlu0 %v1479, 127
        %v1496 = vpop.permute.xlu0 %1495
        %1497 = vrot.lane.b32.xlu0 %v1480, 127
        %v1498 = vpop.permute.xlu0 %1497
        %1499 = vrot.lane.b32.xlu0 %v1481, 127
        %v1500 = vpop.permute.xlu0 %1499
        %1501 = vrot.lane.b32.xlu0 %v1482, 127
        %v1502 = vpop.permute.xlu0 %1501
        %1503 = vrot.lane.b32.xlu0 %v1483, 127
        %v1504 = vpop.permute.xlu0 %1503
        %1505 = vrot.lane.b32.xlu0 %v1484, 127
        %v1506 = vpop.permute.xlu0 %1505
        %1507 = vrot.lane.b32.xlu0 %v1485, 127
        %v1508 = vpop.permute.xlu0 %1507
        %1509 = vrot.lane.b32.xlu0 %v1486, 127
        %v1510 = vpop.permute.xlu0 %1509
        %v1519 = vmax.f32 %v1479, %v1496
        %v1520 = vmax.f32 %v1480, %v1498
        %v1521 = vmax.f32 %v1481, %v1500
        %v1522 = vmax.f32 %v1482, %v1502
        %v1523 = vmax.f32 %v1483, %v1504
        %v1524 = vmax.f32 %v1484, %v1506
        %v1525 = vmax.f32 %v1485, %v1508
        %v1526 = vmax.f32 %v1486, %v1510
        %1535 = vrot.lane.b32.xlu0 %v1519, 127
        %v1536 = vpop.permute.xlu0 %1535
        %1537 = vrot.lane.b32.xlu0 %v1520, 127
        %v1538 = vpop.permute.xlu0 %1537
        %1539 = vrot.lane.b32.xlu0 %v1521, 127
        %v1540 = vpop.permute.xlu0 %1539
        %1541 = vrot.lane.b32.xlu0 %v1522, 127
        %v1542 = vpop.permute.xlu0 %1541
        %1543 = vrot.lane.b32.xlu0 %v1523, 127
        %v1544 = vpop.permute.xlu0 %1543
        %1545 = vrot.lane.b32.xlu0 %v1524, 127
        %v1546 = vpop.permute.xlu0 %1545
        %1547 = vrot.lane.b32.xlu0 %v1525, 127
        %v1548 = vpop.permute.xlu0 %1547
        %1549 = vrot.lane.b32.xlu0 %v1526, 127
        %v1550 = vpop.permute.xlu0 %1549
        %v1559 = vmax.f32 %v1479, %v1536
        %v1560 = vmax.f32 %v1480, %v1538
        %v1561 = vmax.f32 %v1481, %v1540
        %v1562 = vmax.f32 %v1482, %v1542
        %v1563 = vmax.f32 %v1483, %v1544
        %v1564 = vmax.f32 %v1484, %v1546
        %v1565 = vmax.f32 %v1485, %v1548
        %v1566 = vmax.f32 %v1486, %v1550
        %v1567 = vsub.f32 %v1479, %v1559
        %v1568 = vsub.f32 %v1480, %v1560
        %v1569 = vsub.f32 %v1481, %v1561
        %v1570 = vsub.f32 %v1482, %v1562
        %v1571 = vsub.f32 %v1483, %v1563
        %v1572 = vsub.f32 %v1484, %v1564
        %v1573 = vsub.f32 %v1485, %v1565
        %v1574 = vsub.f32 %v1486, %v1566
        %v1575 = vmul.f32 %v1567, 1.442695
        %v1576 = vpow.pop %v1575
        %v1577 = vmul.f32 %v1568, 1.442695
        %v1578 = vpow.pop %v1577
        %v1579 = vmul.f32 %v1569, 1.442695
        %v1580 = vpow.pop %v1579
        %v1581 = vmul.f32 %v1570, 1.442695
        %v1582 = vpow.pop %v1581
        %v1583 = vmul.f32 %v1571, 1.442695
        %v1584 = vpow.pop %v1583
        %v1585 = vmul.f32 %v1572, 1.442695
        %v1586 = vpow.pop %v1585
        %v1587 = vmul.f32 %v1573, 1.442695
        %v1588 = vpow.pop %v1587
        %v1589 = vmul.f32 %v1574, 1.442695
        %v1590 = vpow.pop %v1589
        %1599 = vrot.lane.b32.xlu0 %v1559, 1
        %v1600 = vpop.permute.xlu0 %1599
        %1601 = vrot.lane.b32.xlu0 %v1560, 1
        %v1602 = vpop.permute.xlu0 %1601
        %1603 = vrot.lane.b32.xlu0 %v1561, 1
        %v1604 = vpop.permute.xlu0 %1603
        %1605 = vrot.lane.b32.xlu0 %v1562, 1
        %v1606 = vpop.permute.xlu0 %1605
        %1607 = vrot.lane.b32.xlu0 %v1563, 1
        %v1608 = vpop.permute.xlu0 %1607
        %1609 = vrot.lane.b32.xlu0 %v1564, 1
        %v1610 = vpop.permute.xlu0 %1609
        %1611 = vrot.lane.b32.xlu0 %v1565, 1
        %v1612 = vpop.permute.xlu0 %1611
        %1613 = vrot.lane.b32.xlu0 %v1566, 1
        %v1614 = vpop.permute.xlu0 %1613
        %v1623 = vsub.f32 %v1479, %v1600
        %v1624 = vsub.f32 %v1480, %v1602
        %v1625 = vsub.f32 %v1481, %v1604
        %v1626 = vsub.f32 %v1482, %v1606
        %v1627 = vsub.f32 %v1483, %v1608
        %v1628 = vsub.f32 %v1484, %v1610
        %v1629 = vsub.f32 %v1485, %v1612
        %v1630 = vsub.f32 %v1486, %v1614
        %v1631 = vmul.f32 %v1623, 1.442695
        %v1632 = vpow.pop %v1631
        %v1633 = vmul.f32 %v1624, 1.442695
        %v1634 = vpow.pop %v1633
        %v1635 = vmul.f32 %v1625, 1.442695
        %v1636 = vpow.pop %v1635
        %v1637 = vmul.f32 %v1626, 1.442695
        %v1638 = vpow.pop %v1637
        %v1639 = vmul.f32 %v1627, 1.442695
        %v1640 = vpow.pop %v1639
        %v1641 = vmul.f32 %v1628, 1.442695
        %v1642 = vpow.pop %v1641
        %v1643 = vmul.f32 %v1629, 1.442695
        %v1644 = vpow.pop %v1643
        %v1645 = vmul.f32 %v1630, 1.442695
        %v1646 = vpow.pop %v1645
        %1647 = vrot.lane.b32.xlu0 %v1559, 2
        %v1648 = vpop.permute.xlu0 %1647
        %1649 = vrot.lane.b32.xlu0 %v1560, 2
        %v1650 = vpop.permute.xlu0 %1649
        %1651 = vrot.lane.b32.xlu0 %v1561, 2
        %v1652 = vpop.permute.xlu0 %1651
        %1653 = vrot.lane.b32.xlu0 %v1562, 2
        %v1654 = vpop.permute.xlu0 %1653
        %1655 = vrot.lane.b32.xlu0 %v1563, 2
        %v1656 = vpop.permute.xlu0 %1655
        %1657 = vrot.lane.b32.xlu0 %v1564, 2
        %v1658 = vpop.permute.xlu0 %1657
        %1659 = vrot.lane.b32.xlu0 %v1565, 2
        %v1660 = vpop.permute.xlu0 %1659
        %1661 = vrot.lane.b32.xlu0 %v1566, 2
        %v1662 = vpop.permute.xlu0 %1661
        %v1671 = vsub.f32 %v1479, %v1648
        %v1672 = vsub.f32 %v1480, %v1650
        %v1673 = vsub.f32 %v1481, %v1652
        %v1674 = vsub.f32 %v1482, %v1654
        %v1675 = vsub.f32 %v1483, %v1656
        %v1676 = vsub.f32 %v1484, %v1658
        %v1677 = vsub.f32 %v1485, %v1660
        %v1678 = vsub.f32 %v1486, %v1662
        %v1679 = vmul.f32 %v1671, 1.442695
        %v1680 = vpow.pop %v1679
        %v1681 = vmul.f32 %v1672, 1.442695
        %v1682 = vpow.pop %v1681
        %v1683 = vmul.f32 %v1673, 1.442695
        %v1684 = vpow.pop %v1683
        %v1685 = vmul.f32 %v1674, 1.442695
        %v1686 = vpow.pop %v1685
        %v1687 = vmul.f32 %v1675, 1.442695
        %v1688 = vpow.pop %v1687
        %v1689 = vmul.f32 %v1676, 1.442695
        %v1690 = vpow.pop %v1689
        %v1691 = vmul.f32 %v1677, 1.442695
        %v1692 = vpow.pop %v1691
        %v1693 = vmul.f32 %v1678, 1.442695
        %v1694 = vpow.pop %v1693
        %1703 = vrot.lane.b32.xlu0 %v1632, 127
        %v1704 = vpop.permute.xlu0 %1703
        %1705 = vrot.lane.b32.xlu0 %v1634, 127
        %v1706 = vpop.permute.xlu0 %1705
        %1707 = vrot.lane.b32.xlu0 %v1636, 127
        %v1708 = vpop.permute.xlu0 %1707
        %1709 = vrot.lane.b32.xlu0 %v1638, 127
        %v1710 = vpop.permute.xlu0 %1709
        %1711 = vrot.lane.b32.xlu0 %v1640, 127
        %v1712 = vpop.permute.xlu0 %1711
        %1713 = vrot.lane.b32.xlu0 %v1642, 127
        %v1714 = vpop.permute.xlu0 %1713
        %1715 = vrot.lane.b32.xlu0 %v1644, 127
        %v1716 = vpop.permute.xlu0 %1715
        %1717 = vrot.lane.b32.xlu0 %v1646, 127
        %v1718 = vpop.permute.xlu0 %1717
        %v1727 = vadd.f32 %v1576, %v1704
        %v1728 = vadd.f32 %v1578, %v1706
        %v1729 = vadd.f32 %v1580, %v1708
        %v1730 = vadd.f32 %v1582, %v1710
        %v1731 = vadd.f32 %v1584, %v1712
        %v1732 = vadd.f32 %v1586, %v1714
        %v1733 = vadd.f32 %v1588, %v1716
        %v1734 = vadd.f32 %v1590, %v1718
        %1743 = vrot.lane.b32.xlu0 %v1680, 126
        %v1744 = vpop.permute.xlu0 %1743
        %1745 = vrot.lane.b32.xlu0 %v1682, 126
        %v1746 = vpop.permute.xlu0 %1745
        %1747 = vrot.lane.b32.xlu0 %v1684, 126
        %v1748 = vpop.permute.xlu0 %1747
        %1749 = vrot.lane.b32.xlu0 %v1686, 126
        %v1750 = vpop.permute.xlu0 %1749
        %1751 = vrot.lane.b32.xlu0 %v1688, 126
        %v1752 = vpop.permute.xlu0 %1751
        %1753 = vrot.lane.b32.xlu0 %v1690, 126
        %v1754 = vpop.permute.xlu0 %1753
        %1755 = vrot.lane.b32.xlu0 %v1692, 126
        %v1756 = vpop.permute.xlu0 %1755
        %1757 = vrot.lane.b32.xlu0 %v1694, 126
        %v1758 = vpop.permute.xlu0 %1757
        %v1767 = vadd.f32 %v1727, %v1744
        %v1768 = vadd.f32 %v1728, %v1746
        %v1769 = vadd.f32 %v1729, %v1748
        %v1770 = vadd.f32 %v1730, %v1750
        %v1771 = vadd.f32 %v1731, %v1752
        %v1772 = vadd.f32 %v1732, %v1754
        %v1773 = vadd.f32 %v1733, %v1756
        %v1774 = vadd.f32 %v1734, %v1758
        %v1775 = vrcp.pop %v1767
        %v1776 = vrcp.pop %v1768
        %v1777 = vrcp.pop %v1769
        %v1778 = vrcp.pop %v1770
        %v1779 = vrcp.pop %v1771
        %v1780 = vrcp.pop %v1772
        %v1781 = vrcp.pop %v1773
        %v1782 = vrcp.pop %v1774
        %v1783 = vmul.f32 %v1576, %v1775
        %v1784 = vmul.f32 %v1578, %v1776
        %v1785 = vmul.f32 %v1580, %v1777
        %v1786 = vmul.f32 %v1582, %v1778
        %v1787 = vmul.f32 %v1584, %v1779
        %v1788 = vmul.f32 %v1586, %v1780
        %v1789 = vmul.f32 %v1588, %v1781
        %v1790 = vmul.f32 %v1590, %v1782
        %v1791 = vpack.c.bf16 %v1784, %v1783
        %v1792 = vpack.c.bf16 %v1786, %v1785
        %v1793 = vpack.c.bf16 %v1788, %v1787
        %v1794 = vpack.c.bf16 %v1790, %v1789
        %1803 = vrot.lane.b32.xlu0 %v1775, 1
        %v1804 = vpop.permute.xlu0 %1803
        %1805 = vrot.lane.b32.xlu0 %v1776, 1
        %v1806 = vpop.permute.xlu0 %1805
        %1807 = vrot.lane.b32.xlu0 %v1777, 1
        %v1808 = vpop.permute.xlu0 %1807
        %1809 = vrot.lane.b32.xlu0 %v1778, 1
        %v1810 = vpop.permute.xlu0 %1809
        %1811 = vrot.lane.b32.xlu0 %v1779, 1
        %v1812 = vpop.permute.xlu0 %1811
        %1813 = vrot.lane.b32.xlu0 %v1780, 1
        %v1814 = vpop.permute.xlu0 %1813
        %1815 = vrot.lane.b32.xlu0 %v1781, 1
        %v1816 = vpop.permute.xlu0 %1815
        %1817 = vrot.lane.b32.xlu0 %v1782, 1
        %v1818 = vpop.permute.xlu0 %1817
        %v1827 = vmul.f32 %v1632, %v1804
        %v1828 = vmul.f32 %v1634, %v1806
        %v1829 = vmul.f32 %v1636, %v1808
        %v1830 = vmul.f32 %v1638, %v1810
        %v1831 = vmul.f32 %v1640, %v1812
        %v1832 = vmul.f32 %v1642, %v1814
        %v1833 = vmul.f32 %v1644, %v1816
        %v1834 = vmul.f32 %v1646, %v1818
        %v1835 = vpack.c.bf16 %v1828, %v1827
        %v1836 = vpack.c.bf16 %v1830, %v1829
        %v1837 = vpack.c.bf16 %v1832, %v1831
        %v1838 = vpack.c.bf16 %v1834, %v1833
        %1839 = vrot.lane.b32.xlu0 %v1775, 2
        %v1840 = vpop.permute.xlu0 %1839
        %1841 = vrot.lane.b32.xlu0 %v1776, 2
        %v1842 = vpop.permute.xlu0 %1841
        %1843 = vrot.lane.b32.xlu0 %v1777, 2
        %v1844 = vpop.permute.xlu0 %1843
        %1845 = vrot.lane.b32.xlu0 %v1778, 2
        %v1846 = vpop.permute.xlu0 %1845
        %1847 = vrot.lane.b32.xlu0 %v1779, 2
        %v1848 = vpop.permute.xlu0 %1847
        %1849 = vrot.lane.b32.xlu0 %v1780, 2
        %v1850 = vpop.permute.xlu0 %1849
        %1851 = vrot.lane.b32.xlu0 %v1781, 2
        %v1852 = vpop.permute.xlu0 %1851
        %1853 = vrot.lane.b32.xlu0 %v1782, 2
        %v1854 = vpop.permute.xlu0 %1853
        %v1863 = vmul.f32 %v1680, %v1840
        %v1864 = vmul.f32 %v1682, %v1842
        %v1865 = vmul.f32 %v1684, %v1844
        %v1866 = vmul.f32 %v1686, %v1846
        %v1867 = vmul.f32 %v1688, %v1848
        %v1868 = vmul.f32 %v1690, %v1850
        %v1869 = vmul.f32 %v1692, %v1852
        %v1870 = vmul.f32 %v1694, %v1854
        %v1871 = vpack.c.bf16 %v1864, %v1863
        %v1872 = vpack.c.bf16 %v1866, %v1865
        %v1873 = vpack.c.bf16 %v1868, %v1867
        %v1874 = vpack.c.bf16 %v1870, %v1869
        %1876 = vset.pattern.permute.xlu0 0
        %1877 = vperm.xlu0 %1876, %v1791
        %v1878 = vpop.permute.xlu0 %1877
        %1880 = vset.pattern.permute.xlu0 0
        %1881 = vperm.xlu0 %1880, %v1792
        %v1882 = vpop.permute.xlu0 %1881
        %1884 = vset.pattern.permute.xlu0 0
        %1885 = vperm.xlu0 %1884, %v1793
        %v1886 = vpop.permute.xlu0 %1885
        %1888 = vset.pattern.permute.xlu0 0
        %1889 = vperm.xlu0 %1888, %v1794
        %v1890 = vpop.permute.xlu0 %1889
        %v1896 = vunpack.c.l.s4 839922192
        %v1897 = vunpack.c.0.s8 %v1896
        %v1898 = vlaneseq
        %v1899 = vshrl.u32 %v1898, 7
        %v1900 = vsub.s32 %v1897, %v1899
        %v1901 = vrot.slane %v1878, %v1900
        %v1903 = vunpack.c.l.s4 1985246804
        %v1904 = vunpack.c.0.s8 %v1903
        %v1905 = vlaneseq
        %v1906 = vshrl.u32 %v1905, 7
        %v1907 = vsub.s32 %v1904, %v1906
        %v1908 = vrot.slane %v1878, %v1907
        %v1910 = vunpack.c.l.s4 839922192
        %v1911 = vunpack.c.0.s8 %v1910
        %v1912 = vlaneseq
        %v1913 = vshrl.u32 %v1912, 7
        %v1914 = vsub.s32 %v1911, %v1913
        %v1915 = vrot.slane %v1882, %v1914
        %v1917 = vunpack.c.l.s4 1985246804
        %v1918 = vunpack.c.0.s8 %v1917
        %v1919 = vlaneseq
        %v1920 = vshrl.u32 %v1919, 7
        %v1921 = vsub.s32 %v1918, %v1920
        %v1922 = vrot.slane %v1882, %v1921
        %v1924 = vunpack.c.l.s4 839922192
        %v1925 = vunpack.c.0.s8 %v1924
        %v1926 = vlaneseq
        %v1927 = vshrl.u32 %v1926, 7
        %v1928 = vsub.s32 %v1925, %v1927
        %v1929 = vrot.slane %v1886, %v1928
        %v1931 = vunpack.c.l.s4 1985246804
        %v1932 = vunpack.c.0.s8 %v1931
        %v1933 = vlaneseq
        %v1934 = vshrl.u32 %v1933, 7
        %v1935 = vsub.s32 %v1932, %v1934
        %v1936 = vrot.slane %v1886, %v1935
        %v1938 = vunpack.c.l.s4 839922192
        %v1939 = vunpack.c.0.s8 %v1938
        %v1940 = vlaneseq
        %v1941 = vshrl.u32 %v1940, 7
        %v1942 = vsub.s32 %v1939, %v1941
        %v1943 = vrot.slane %v1890, %v1942
        %v1945 = vunpack.c.l.s4 1985246804
        %v1946 = vunpack.c.0.s8 %v1945
        %v1947 = vlaneseq
        %v1948 = vshrl.u32 %v1947, 7
        %v1949 = vsub.s32 %v1946, %v1948
        %v1950 = vrot.slane %v1890, %v1949
        %v1959 = vmul.bf16 %v596, %v1901
        %v1960 = vmul.bf16 %v597, %v1908
        %v1961 = vmul.bf16 %v598, %v1915
        %v1962 = vmul.bf16 %v599, %v1922
        %v1963 = vmul.bf16 %v600, %v1929
        %v1964 = vmul.bf16 %v601, %v1936
        %v1965 = vmul.bf16 %v602, %v1943
        %v1966 = vmul.bf16 %v603, %v1950
        %1968 = vset.pattern.permute.xlu0 1
        %1969 = vperm.xlu0 %1968, %v1835
        %v1970 = vpop.permute.xlu0 %1969
        %1972 = vset.pattern.permute.xlu0 1
        %1973 = vperm.xlu0 %1972, %v1836
        %v1974 = vpop.permute.xlu0 %1973
        %1976 = vset.pattern.permute.xlu0 1
        %1977 = vperm.xlu0 %1976, %v1837
        %v1978 = vpop.permute.xlu0 %1977
        %1980 = vset.pattern.permute.xlu0 1
        %1981 = vperm.xlu0 %1980, %v1838
        %v1982 = vpop.permute.xlu0 %1981
        %v1988 = vunpack.c.l.s4 839922192
        %v1989 = vunpack.c.0.s8 %v1988
        %v1990 = vlaneseq
        %v1991 = vshrl.u32 %v1990, 7
        %v1992 = vsub.s32 %v1989, %v1991
        %v1993 = vrot.slane %v1970, %v1992
        %v1995 = vunpack.c.l.s4 1985246804
        %v1996 = vunpack.c.0.s8 %v1995
        %v1997 = vlaneseq
        %v1998 = vshrl.u32 %v1997, 7
        %v1999 = vsub.s32 %v1996, %v1998
        %v2000 = vrot.slane %v1970, %v1999
        %v2002 = vunpack.c.l.s4 839922192
        %v2003 = vunpack.c.0.s8 %v2002
        %v2004 = vlaneseq
        %v2005 = vshrl.u32 %v2004, 7
        %v2006 = vsub.s32 %v2003, %v2005
        %v2007 = vrot.slane %v1974, %v2006
        %v2009 = vunpack.c.l.s4 1985246804
        %v2010 = vunpack.c.0.s8 %v2009
        %v2011 = vlaneseq
        %v2012 = vshrl.u32 %v2011, 7
        %v2013 = vsub.s32 %v2010, %v2012
        %v2014 = vrot.slane %v1974, %v2013
        %v2016 = vunpack.c.l.s4 839922192
        %v2017 = vunpack.c.0.s8 %v2016
        %v2018 = vlaneseq
        %v2019 = vshrl.u32 %v2018, 7
        %v2020 = vsub.s32 %v2017, %v2019
        %v2021 = vrot.slane %v1978, %v2020
        %v2023 = vunpack.c.l.s4 1985246804
        %v2024 = vunpack.c.0.s8 %v2023
        %v2025 = vlaneseq
        %v2026 = vshrl.u32 %v2025, 7
        %v2027 = vsub.s32 %v2024, %v2026
        %v2028 = vrot.slane %v1978, %v2027
        %v2030 = vunpack.c.l.s4 839922192
        %v2031 = vunpack.c.0.s8 %v2030
        %v2032 = vlaneseq
        %v2033 = vshrl.u32 %v2032, 7
        %v2034 = vsub.s32 %v2031, %v2033
        %v2035 = vrot.slane %v1982, %v2034
        %v2037 = vunpack.c.l.s4 1985246804
        %v2038 = vunpack.c.0.s8 %v2037
        %v2039 = vlaneseq
        %v2040 = vshrl.u32 %v2039, 7
        %v2041 = vsub.s32 %v2038, %v2040
        %v2042 = vrot.slane %v1982, %v2041
        %v2051 = vmul.bf16 %v606, %v1993
        %v2052 = vmul.bf16 %v607, %v2000
        %v2053 = vmul.bf16 %v608, %v2007
        %v2054 = vmul.bf16 %v609, %v2014
        %v2055 = vmul.bf16 %v610, %v2021
        %v2056 = vmul.bf16 %v611, %v2028
        %v2057 = vmul.bf16 %v612, %v2035
        %v2058 = vmul.bf16 %v613, %v2042
        %v2059 = vadd.bf16 %v1959, %v2051
        %v2060 = vadd.bf16 %v1960, %v2052
        %v2061 = vadd.bf16 %v1961, %v2053
        %v2062 = vadd.bf16 %v1962, %v2054
        %v2063 = vadd.bf16 %v1963, %v2055
        %v2064 = vadd.bf16 %v1964, %v2056
        %v2065 = vadd.bf16 %v1965, %v2057
        %v2066 = vadd.bf16 %v1966, %v2058
        %2068 = vset.pattern.permute.xlu0 2
        %2069 = vperm.xlu0 %2068, %v1871
        %v2070 = vpop.permute.xlu0 %2069
        %2072 = vset.pattern.permute.xlu0 2
        %2073 = vperm.xlu0 %2072, %v1872
        %v2074 = vpop.permute.xlu0 %2073
        %2076 = vset.pattern.permute.xlu0 2
        %2077 = vperm.xlu0 %2076, %v1873
        %v2078 = vpop.permute.xlu0 %2077
        %2080 = vset.pattern.permute.xlu0 2
        %2081 = vperm.xlu0 %2080, %v1874
        %v2082 = vpop.permute.xlu0 %2081
        %v2088 = vunpack.c.l.s4 839922192
        %v2089 = vunpack.c.0.s8 %v2088
        %v2090 = vlaneseq
        %v2091 = vshrl.u32 %v2090, 7
        %v2092 = vsub.s32 %v2089, %v2091
        %v2093 = vrot.slane %v2070, %v2092
        %v2095 = vunpack.c.l.s4 1985246804
        %v2096 = vunpack.c.0.s8 %v2095
        %v2097 = vlaneseq
        %v2098 = vshrl.u32 %v2097, 7
        %v2099 = vsub.s32 %v2096, %v2098
        %v2100 = vrot.slane %v2070, %v2099
        %v2102 = vunpack.c.l.s4 839922192
        %v2103 = vunpack.c.0.s8 %v2102
        %v2104 = vlaneseq
        %v2105 = vshrl.u32 %v2104, 7
        %v2106 = vsub.s32 %v2103, %v2105
        %v2107 = vrot.slane %v2074, %v2106
        %v2109 = vunpack.c.l.s4 1985246804
        %v2110 = vunpack.c.0.s8 %v2109
        %v2111 = vlaneseq
        %v2112 = vshrl.u32 %v2111, 7
        %v2113 = vsub.s32 %v2110, %v2112
        %v2114 = vrot.slane %v2074, %v2113
        %v2116 = vunpack.c.l.s4 839922192
        %v2117 = vunpack.c.0.s8 %v2116
        %v2118 = vlaneseq
        %v2119 = vshrl.u32 %v2118, 7
        %v2120 = vsub.s32 %v2117, %v2119
        %v2121 = vrot.slane %v2078, %v2120
        %v2123 = vunpack.c.l.s4 1985246804
        %v2124 = vunpack.c.0.s8 %v2123
        %v2125 = vlaneseq
        %v2126 = vshrl.u32 %v2125, 7
        %v2127 = vsub.s32 %v2124, %v2126
        %v2128 = vrot.slane %v2078, %v2127
        %v2130 = vunpack.c.l.s4 839922192
        %v2131 = vunpack.c.0.s8 %v2130
        %v2132 = vlaneseq
        %v2133 = vshrl.u32 %v2132, 7
        %v2134 = vsub.s32 %v2131, %v2133
        %v2135 = vrot.slane %v2082, %v2134
        %v2137 = vunpack.c.l.s4 1985246804
        %v2138 = vunpack.c.0.s8 %v2137
        %v2139 = vlaneseq
        %v2140 = vshrl.u32 %v2139, 7
        %v2141 = vsub.s32 %v2138, %v2140
        %v2142 = vrot.slane %v2082, %v2141
        %v2151 = vmul.bf16 %v616, %v2093
        %v2152 = vmul.bf16 %v617, %v2100
        %v2153 = vmul.bf16 %v618, %v2107
        %v2154 = vmul.bf16 %v619, %v2114
        %v2155 = vmul.bf16 %v620, %v2121
        %v2156 = vmul.bf16 %v621, %v2128
        %v2157 = vmul.bf16 %v622, %v2135
        %v2158 = vmul.bf16 %v623, %v2142
        %v2159 = vadd.bf16 %v2059, %v2151
        %v2160 = vadd.bf16 %v2060, %v2152
        %v2161 = vadd.bf16 %v2061, %v2153
        %v2162 = vadd.bf16 %v2062, %v2154
        %v2163 = vadd.bf16 %v2063, %v2155
        %v2164 = vadd.bf16 %v2064, %v2156
        %v2165 = vadd.bf16 %v2065, %v2157
        %v2166 = vadd.bf16 %v2066, %v2158
        %s2167 = scalar_lea.vmem [#allocation2], 24
        %2168 = vst [vmem:[%s2167 + $0x8] sm:$0xf] %v2159
        %2169 = vst [vmem:[%s2167 + $0xc] sm:$0xf] %v2160
        %2170 = vst [vmem:[%s2167 + $0x20] sm:$0xf] %v2161
        %2171 = vst [vmem:[%s2167 + $0x24] sm:$0xf] %v2162
        %2172 = vst [vmem:[%s2167 + $0x38] sm:$0xf] %v2163
        %2173 = vst [vmem:[%s2167 + $0x3c] sm:$0xf] %v2164
        %2174 = vst [vmem:[%s2167 + $0x50] sm:$0xf] %v2165
        %2175 = vst [vmem:[%s2167 + $0x54] sm:$0xf] %v2166
        %p2176 = scmp.eq.s32.totalorder %s32, 0
        // Predicated region
        $region73: #{asff3_pallas.1} parent=71 // pred_check
          %p2177 = pneg %p2176
        $region74: #{asff3_pallas.1} parent=71 // pred_check_branch
          %2179 = sbr.rel (%p2177) target = $region76
        $region75: #{asff3_pallas.1} parent=71 // pred_region
          %2180 = vst [vmem:[#allocation2 + $0x8] sm:$0xf] 0
          %2181 = vst [vmem:[#allocation2 + $0xc] sm:$0xf] 0
        $region76: #{asff3_pallas.1} parent=71 // pred_fallthru
          _
        %p2182 = scmp.gt.s32.totalorder %s32, 0
        // Predicated region
        $region77: #{asff3_pallas.1} parent=71 // pred_check
          %p2183 = pneg %p2182
        $region78: #{asff3_pallas.1} parent=71 // pred_check_branch
          %2185 = sbr.rel (%p2183) target = $region80
        $region79: #{asff3_pallas.1} parent=71 // pred_region
          %s2186 = ssub.s32 %s495, 1
          %s2187 = smul.u32 %s2186, 2
          %s2188 = smul.addr %s2187, 4
          %s2189 = scalar_lea.vmem %s482, %s2188
          %v2190 = vld [vmem:[%s2189] sm:$0xf]
          %v2191 = vld [vmem:[%s2189 + $0x4] sm:$0xf]
          %s2192 = smul.addr %s2187, 4
          %s2193 = scalar_lea.vmem %s487, %s2192
          %v2194 = vld [vmem:[%s2193] sm:$0xf]
          %v2195 = vld [vmem:[%s2193 + $0x4] sm:$0xf]
          %s2196 = smul.addr %s2187, 4
          %s2197 = scalar_lea.vmem %s492, %s2196
          %v2198 = vld [vmem:[%s2197] sm:$0xf]
          %v2199 = vld [vmem:[%s2197 + $0x4] sm:$0xf]
          %v2202 = vunpack.c.l.b16 %v2190
          %v2203 = vunpack.c.l.b16 %v2191
          %v2204 = vpack.c.b16 %v2203, %v2202
          %2206 = vmatprep.subr.bf16.mxu0 0
          %2207 = vmatpush1.bf16.msra.mxu0 %v693
          %2208 = vmatprep.subr.bf16.mxu0 0
          %2209 = vmatpush1.bf16.msra.mxu0 %v692
          %2210 = vmatprep.subr.bf16.mxu0 0
          %2211 = vmatpush1.bf16.msra.mxu0 %v691
          %2212 = vmatprep.subr.bf16.mxu0 0
          %2213 = vmatpush1.bf16.msra.mxu0 %v690
          %2214 = vmatprep.subr.bf16.mxu0 0
          %2215 = vmatpush1.bf16.msra.mxu0 %v689
          %2216 = vmatprep.subr.bf16.mxu0 0
          %2217 = vmatpush1.bf16.msra.mxu0 %v688
          %2218 = vmatprep.subr.bf16.mxu0 0
          %2219 = vmatpush1.bf16.msra.mxu0 %v687
          %2220 = vmatprep.subr.bf16.mxu0 0
          %2221 = vmatpush1.bf16.msra.mxu0 %v686
          %2222 = vmatprep.subr.bf16.mxu0 0
          %2223 = vmatpush2.bf16.msra.mxu0 0
          %2224 = vmatprep.subr.bf16.mxu0 0
          %2225 = vmatpush2.bf16.msra.mxu0 0
          %2226 = vmatprep.subr.bf16.mxu0 0
          %2227 = vmatpush2.bf16.msra.mxu0 0
          %2228 = vmatprep.subr.bf16.mxu0 0
          %2229 = vmatpush2.bf16.msra.mxu0 0
          %2230 = vmatprep.subr.bf16.mxu0 0
          %2231 = vmatpush2.bf16.msra.mxu0 0
          %2232 = vmatprep.subr.bf16.mxu0 0
          %2233 = vmatpush2.bf16.msra.mxu0 0
          %2234 = vmatprep.subr.bf16.mxu0 0
          %2235 = vmatpush2.bf16.msra.mxu0 0
          %2236 = vmatprep.subr.bf16.mxu0 0
          %2237 = vmatpush2.bf16.msra.mxu0 0
          %2238 = vmatprep.mubr.bf16.mxu0 0
          %2239 = vmatmul.mubr.bf16.gmra.mxu0 %v2204
          %v2240 = vpop.f32.mrf.mxu0
          %v2241 = vadd.f32 %v628, %v2240
          %v2242 = vpop.f32.mrf.mxu0
          %v2243 = vpop.f32.mrf.mxu0
          %v2244 = vadd.f32 %v628, %v2243
          %v2245 = vpop.f32.mrf.mxu0
          %2246 = vdwg.mxu0
          %v2247 = vmax.f32 %v2241, 0.0
          %v2248 = vmax.f32 %v2244, 0.0
          %v2251 = vunpack.c.l.b16 %v2194
          %v2252 = vunpack.c.l.b16 %v2195
          %v2253 = vpack.c.b16 %v2252, %v2251
          %2255 = vmatprep.subr.bf16.mxu0 0
          %2256 = vmatpush1.bf16.msra.mxu0 %v844
          %2257 = vmatprep.subr.bf16.mxu0 0
          %2258 = vmatpush1.bf16.msra.mxu0 %v843
          %2259 = vmatprep.subr.bf16.mxu0 0
          %2260 = vmatpush1.bf16.msra.mxu0 %v842
          %2261 = vmatprep.subr.bf16.mxu0 0
          %2262 = vmatpush1.bf16.msra.mxu0 %v841
          %2263 = vmatprep.subr.bf16.mxu0 0
          %2264 = vmatpush1.bf16.msra.mxu0 %v840
          %2265 = vmatprep.subr.bf16.mxu0 0
          %2266 = vmatpush1.bf16.msra.mxu0 %v839
          %2267 = vmatprep.subr.bf16.mxu0 0
          %2268 = vmatpush1.bf16.msra.mxu0 %v838
          %2269 = vmatprep.subr.bf16.mxu0 0
          %2270 = vmatpush1.bf16.msra.mxu0 %v837
          %2271 = vmatprep.subr.bf16.mxu0 0
          %2272 = vmatpush2.bf16.msra.mxu0 0
          %2273 = vmatprep.subr.bf16.mxu0 0
          %2274 = vmatpush2.bf16.msra.mxu0 0
          %2275 = vmatprep.subr.bf16.mxu0 0
          %2276 = vmatpush2.bf16.msra.mxu0 0
          %2277 = vmatprep.subr.bf16.mxu0 0
          %2278 = vmatpush2.bf16.msra.mxu0 0
          %2279 = vmatprep.subr.bf16.mxu0 0
          %2280 = vmatpush2.bf16.msra.mxu0 0
          %2281 = vmatprep.subr.bf16.mxu0 0
          %2282 = vmatpush2.bf16.msra.mxu0 0
          %2283 = vmatprep.subr.bf16.mxu0 0
          %2284 = vmatpush2.bf16.msra.mxu0 0
          %2285 = vmatprep.subr.bf16.mxu0 0
          %2286 = vmatpush2.bf16.msra.mxu0 0
          %2287 = vmatprep.mubr.bf16.mxu0 0
          %2288 = vmatmul.mubr.bf16.gmra.mxu0 %v2253
          %v2289 = vpop.f32.mrf.mxu0
          %v2290 = vadd.f32 %v779, %v2289
          %v2291 = vpop.f32.mrf.mxu0
          %v2292 = vpop.f32.mrf.mxu0
          %v2293 = vadd.f32 %v779, %v2292
          %v2294 = vpop.f32.mrf.mxu0
          %2295 = vdwg.mxu0
          %v2296 = vmax.f32 %v2290, 0.0
          %v2297 = vmax.f32 %v2293, 0.0
          %v2300 = vunpack.c.l.b16 %v2198
          %v2301 = vunpack.c.l.b16 %v2199
          %v2302 = vpack.c.b16 %v2301, %v2300
          %2304 = vmatprep.subr.bf16.mxu0 0
          %2305 = vmatpush1.bf16.msra.mxu0 %v995
          %2306 = vmatprep.subr.bf16.mxu0 0
          %2307 = vmatpush1.bf16.msra.mxu0 %v994
          %2308 = vmatprep.subr.bf16.mxu0 0
          %2309 = vmatpush1.bf16.msra.mxu0 %v993
          %2310 = vmatprep.subr.bf16.mxu0 0
          %2311 = vmatpush1.bf16.msra.mxu0 %v992
          %2312 = vmatprep.subr.bf16.mxu0 0
          %2313 = vmatpush1.bf16.msra.mxu0 %v991
          %2314 = vmatprep.subr.bf16.mxu0 0
          %2315 = vmatpush1.bf16.msra.mxu0 %v990
          %2316 = vmatprep.subr.bf16.mxu0 0
          %2317 = vmatpush1.bf16.msra.mxu0 %v989
          %2318 = vmatprep.subr.bf16.mxu0 0
          %2319 = vmatpush1.bf16.msra.mxu0 %v988
          %2320 = vmatprep.subr.bf16.mxu0 0
          %2321 = vmatpush2.bf16.msra.mxu0 0
          %2322 = vmatprep.subr.bf16.mxu0 0
          %2323 = vmatpush2.bf16.msra.mxu0 0
          %2324 = vmatprep.subr.bf16.mxu0 0
          %2325 = vmatpush2.bf16.msra.mxu0 0
          %2326 = vmatprep.subr.bf16.mxu0 0
          %2327 = vmatpush2.bf16.msra.mxu0 0
          %2328 = vmatprep.subr.bf16.mxu0 0
          %2329 = vmatpush2.bf16.msra.mxu0 0
          %2330 = vmatprep.subr.bf16.mxu0 0
          %2331 = vmatpush2.bf16.msra.mxu0 0
          %2332 = vmatprep.subr.bf16.mxu0 0
          %2333 = vmatpush2.bf16.msra.mxu0 0
          %2334 = vmatprep.subr.bf16.mxu0 0
          %2335 = vmatpush2.bf16.msra.mxu0 0
          %2336 = vmatprep.mubr.bf16.mxu0 0
          %2337 = vmatmul.mubr.bf16.gmra.mxu0 %v2302
          %v2338 = vpop.f32.mrf.mxu0
          %v2339 = vadd.f32 %v930, %v2338
          %v2340 = vpop.f32.mrf.mxu0
          %v2341 = vpop.f32.mrf.mxu0
          %v2342 = vadd.f32 %v930, %v2341
          %v2343 = vpop.f32.mrf.mxu0
          %2344 = vdwg.mxu0
          %v2345 = vmax.f32 %v2339, 0.0
          %v2346 = vmax.f32 %v2342, 0.0
          %v2348 = vsel %vm1077, %v2296, 0
          %v2351 = vsel %vm1077, %v2297, 0
          %2353 = vmatprep.subr.mxu0 0.0
          %2354 = vmatpush1.msra.mxu0 0.0
          %2355 = vmatprep.subr.mxu0 0.0
          %2356 = vmatpush1.msra.mxu0 0.0
          %2357 = vmatprep.subr.mxu0 0.0
          %2358 = vmatpush1.msra.mxu0 0.0
          %2359 = vmatprep.subr.mxu0 0.0
          %2360 = vmatpush1.msra.mxu0 0.0
          %2361 = vmatprep.subr.mxu0 0.0
          %2362 = vmatpush1.msra.mxu0 0.0
          %2363 = vmatprep.subr.mxu0 0.0
          %2364 = vmatpush1.msra.mxu0 0.0
          %2365 = vmatprep.subr.mxu0 0.0
          %2366 = vmatpush1.msra.mxu0 0.0
          %2367 = vmatprep.subr.mxu0 0.0
          %2368 = vmatpush1.msra.mxu0 0.0
          %2369 = vmatprep.subr.mxu0 0.0
          %2370 = vmatpush1.msra.mxu0 0.0
          %2371 = vmatprep.subr.mxu0 0.0
          %2372 = vmatpush1.msra.mxu0 0.0
          %2373 = vmatprep.subr.mxu0 0.0
          %2374 = vmatpush1.msra.mxu0 0.0
          %2375 = vmatprep.subr.mxu0 0.0
          %2376 = vmatpush1.msra.mxu0 0.0
          %2377 = vmatprep.subr.mxu0 0.0
          %2378 = vmatpush1.msra.mxu0 0.0
          %2379 = vmatprep.subr.mxu0 0.0
          %2380 = vmatpush1.msra.mxu0 0.0
          %2381 = vmatprep.subr.mxu0 0.0
          %2382 = vmatpush1.msra.mxu0 0.0
          %2383 = vmatprep.subr.mxu0 0.0
          %2384 = vmatpush1.msra.mxu0 %v548
          %2385 = vmatprep.subr.mxu0 0.0
          %2386 = vmatpush2.msra.mxu0 0.0
          %2387 = vmatprep.subr.mxu0 0.0
          %2388 = vmatpush2.msra.mxu0 0.0
          %2389 = vmatprep.subr.mxu0 0.0
          %2390 = vmatpush2.msra.mxu0 0.0
          %2391 = vmatprep.subr.mxu0 0.0
          %2392 = vmatpush2.msra.mxu0 0.0
          %2393 = vmatprep.subr.mxu0 0.0
          %2394 = vmatpush2.msra.mxu0 0.0
          %2395 = vmatprep.subr.mxu0 0.0
          %2396 = vmatpush2.msra.mxu0 0.0
          %2397 = vmatprep.subr.mxu0 0.0
          %2398 = vmatpush2.msra.mxu0 0.0
          %2399 = vmatprep.subr.mxu0 0.0
          %2400 = vmatpush2.msra.mxu0 0.0
          %2401 = vmatprep.subr.mxu0 0.0
          %2402 = vmatpush2.msra.mxu0 0.0
          %2403 = vmatprep.subr.mxu0 0.0
          %2404 = vmatpush2.msra.mxu0 0.0
          %2405 = vmatprep.subr.mxu0 0.0
          %2406 = vmatpush2.msra.mxu0 0.0
          %2407 = vmatprep.subr.mxu0 0.0
          %2408 = vmatpush2.msra.mxu0 0.0
          %2409 = vmatprep.subr.mxu0 0.0
          %2410 = vmatpush2.msra.mxu0 0.0
          %2411 = vmatprep.subr.mxu0 0.0
          %2412 = vmatpush2.msra.mxu0 0.0
          %2413 = vmatprep.subr.mxu0 0.0
          %2414 = vmatpush2.msra.mxu0 0.0
          %2415 = vmatprep.subr.mxu0 0.0
          %2416 = vmatpush2.msra.mxu0 0.0
          %2417 = vmatprep.mubr.f32.mxu0 0.0
          %2418 = vmatmul.mubr.f32.gmra.mxu0 %v2348
          %v2419 = vpop.f32.mrf.mxu0
          %v2420 = vadd.f32 0.0, %v2419
          %v2421 = vpop.f32.mrf.mxu0
          %2422 = vmatprep.mubr.f32.mxu0 0.0
          %2423 = vmatmul.mubr.f32.gmra.mxu0 %v2351
          %v2424 = vpop.f32.mrf.mxu0
          %v2425 = vadd.f32 0.0, %v2424
          %v2426 = vpop.f32.mrf.mxu0
          %2427 = vdwg.mxu0
          %v2429 = vsel %vm1077, %v2247, 0
          %v2432 = vsel %vm1077, %v2248, 0
          %2434 = vmatprep.subr.mxu0 0.0
          %2435 = vmatpush1.msra.mxu0 0.0
          %2436 = vmatprep.subr.mxu0 0.0
          %2437 = vmatpush1.msra.mxu0 0.0
          %2438 = vmatprep.subr.mxu0 0.0
          %2439 = vmatpush1.msra.mxu0 0.0
          %2440 = vmatprep.subr.mxu0 0.0
          %2441 = vmatpush1.msra.mxu0 0.0
          %2442 = vmatprep.subr.mxu0 0.0
          %2443 = vmatpush1.msra.mxu0 0.0
          %2444 = vmatprep.subr.mxu0 0.0
          %2445 = vmatpush1.msra.mxu0 0.0
          %2446 = vmatprep.subr.mxu0 0.0
          %2447 = vmatpush1.msra.mxu0 0.0
          %2448 = vmatprep.subr.mxu0 0.0
          %2449 = vmatpush1.msra.mxu0 0.0
          %2450 = vmatprep.subr.mxu0 0.0
          %2451 = vmatpush1.msra.mxu0 0.0
          %2452 = vmatprep.subr.mxu0 0.0
          %2453 = vmatpush1.msra.mxu0 0.0
          %2454 = vmatprep.subr.mxu0 0.0
          %2455 = vmatpush1.msra.mxu0 0.0
          %2456 = vmatprep.subr.mxu0 0.0
          %2457 = vmatpush1.msra.mxu0 0.0
          %2458 = vmatprep.subr.mxu0 0.0
          %2459 = vmatpush1.msra.mxu0 0.0
          %2460 = vmatprep.subr.mxu0 0.0
          %2461 = vmatpush1.msra.mxu0 0.0
          %2462 = vmatprep.subr.mxu0 0.0
          %2463 = vmatpush1.msra.mxu0 0.0
          %2464 = vmatprep.subr.mxu0 0.0
          %2465 = vmatpush1.msra.mxu0 %v547
          %2466 = vmatprep.subr.mxu0 0.0
          %2467 = vmatpush2.msra.mxu0 0.0
          %2468 = vmatprep.subr.mxu0 0.0
          %2469 = vmatpush2.msra.mxu0 0.0
          %2470 = vmatprep.subr.mxu0 0.0
          %2471 = vmatpush2.msra.mxu0 0.0
          %2472 = vmatprep.subr.mxu0 0.0
          %2473 = vmatpush2.msra.mxu0 0.0
          %2474 = vmatprep.subr.mxu0 0.0
          %2475 = vmatpush2.msra.mxu0 0.0
          %2476 = vmatprep.subr.mxu0 0.0
          %2477 = vmatpush2.msra.mxu0 0.0
          %2478 = vmatprep.subr.mxu0 0.0
          %2479 = vmatpush2.msra.mxu0 0.0
          %2480 = vmatprep.subr.mxu0 0.0
          %2481 = vmatpush2.msra.mxu0 0.0
          %2482 = vmatprep.subr.mxu0 0.0
          %2483 = vmatpush2.msra.mxu0 0.0
          %2484 = vmatprep.subr.mxu0 0.0
          %2485 = vmatpush2.msra.mxu0 0.0
          %2486 = vmatprep.subr.mxu0 0.0
          %2487 = vmatpush2.msra.mxu0 0.0
          %2488 = vmatprep.subr.mxu0 0.0
          %2489 = vmatpush2.msra.mxu0 0.0
          %2490 = vmatprep.subr.mxu0 0.0
          %2491 = vmatpush2.msra.mxu0 0.0
          %2492 = vmatprep.subr.mxu0 0.0
          %2493 = vmatpush2.msra.mxu0 0.0
          %2494 = vmatprep.subr.mxu0 0.0
          %2495 = vmatpush2.msra.mxu0 0.0
          %2496 = vmatprep.subr.mxu0 0.0
          %2497 = vmatpush2.msra.mxu0 0.0
          %2498 = vmatprep.mubr.f32.mxu0 0.0
          %2499 = vmatmul.mubr.f32.gmra.mxu0 %v2429
          %v2500 = vpop.f32.mrf.mxu0
          %v2501 = vadd.f32 %v2420, %v2500
          %v2502 = vpop.f32.mrf.mxu0
          %2503 = vmatprep.mubr.f32.mxu0 0.0
          %2504 = vmatmul.mubr.f32.gmra.mxu0 %v2432
          %v2505 = vpop.f32.mrf.mxu0
          %v2506 = vadd.f32 %v2425, %v2505
          %v2507 = vpop.f32.mrf.mxu0
          %2508 = vdwg.mxu0
          %v2510 = vsel %vm1077, %v2345, 0
          %v2513 = vsel %vm1077, %v2346, 0
          %2515 = vmatprep.subr.mxu0 0.0
          %2516 = vmatpush1.msra.mxu0 0.0
          %2517 = vmatprep.subr.mxu0 0.0
          %2518 = vmatpush1.msra.mxu0 0.0
          %2519 = vmatprep.subr.mxu0 0.0
          %2520 = vmatpush1.msra.mxu0 0.0
          %2521 = vmatprep.subr.mxu0 0.0
          %2522 = vmatpush1.msra.mxu0 0.0
          %2523 = vmatprep.subr.mxu0 0.0
          %2524 = vmatpush1.msra.mxu0 0.0
          %2525 = vmatprep.subr.mxu0 0.0
          %2526 = vmatpush1.msra.mxu0 0.0
          %2527 = vmatprep.subr.mxu0 0.0
          %2528 = vmatpush1.msra.mxu0 0.0
          %2529 = vmatprep.subr.mxu0 0.0
          %2530 = vmatpush1.msra.mxu0 0.0
          %2531 = vmatprep.subr.mxu0 0.0
          %2532 = vmatpush1.msra.mxu0 0.0
          %2533 = vmatprep.subr.mxu0 0.0
          %2534 = vmatpush1.msra.mxu0 0.0
          %2535 = vmatprep.subr.mxu0 0.0
          %2536 = vmatpush1.msra.mxu0 0.0
          %2537 = vmatprep.subr.mxu0 0.0
          %2538 = vmatpush1.msra.mxu0 0.0
          %2539 = vmatprep.subr.mxu0 0.0
          %2540 = vmatpush1.msra.mxu0 0.0
          %2541 = vmatprep.subr.mxu0 0.0
          %2542 = vmatpush1.msra.mxu0 0.0
          %2543 = vmatprep.subr.mxu0 0.0
          %2544 = vmatpush1.msra.mxu0 0.0
          %2545 = vmatprep.subr.mxu0 0.0
          %2546 = vmatpush1.msra.mxu0 %v549
          %2547 = vmatprep.subr.mxu0 0.0
          %2548 = vmatpush2.msra.mxu0 0.0
          %2549 = vmatprep.subr.mxu0 0.0
          %2550 = vmatpush2.msra.mxu0 0.0
          %2551 = vmatprep.subr.mxu0 0.0
          %2552 = vmatpush2.msra.mxu0 0.0
          %2553 = vmatprep.subr.mxu0 0.0
          %2554 = vmatpush2.msra.mxu0 0.0
          %2555 = vmatprep.subr.mxu0 0.0
          %2556 = vmatpush2.msra.mxu0 0.0
          %2557 = vmatprep.subr.mxu0 0.0
          %2558 = vmatpush2.msra.mxu0 0.0
          %2559 = vmatprep.subr.mxu0 0.0
          %2560 = vmatpush2.msra.mxu0 0.0
          %2561 = vmatprep.subr.mxu0 0.0
          %2562 = vmatpush2.msra.mxu0 0.0
          %2563 = vmatprep.subr.mxu0 0.0
          %2564 = vmatpush2.msra.mxu0 0.0
          %2565 = vmatprep.subr.mxu0 0.0
          %2566 = vmatpush2.msra.mxu0 0.0
          %2567 = vmatprep.subr.mxu0 0.0
          %2568 = vmatpush2.msra.mxu0 0.0
          %2569 = vmatprep.subr.mxu0 0.0
          %2570 = vmatpush2.msra.mxu0 0.0
          %2571 = vmatprep.subr.mxu0 0.0
          %2572 = vmatpush2.msra.mxu0 0.0
          %2573 = vmatprep.subr.mxu0 0.0
          %2574 = vmatpush2.msra.mxu0 0.0
          %2575 = vmatprep.subr.mxu0 0.0
          %2576 = vmatpush2.msra.mxu0 0.0
          %2577 = vmatprep.subr.mxu0 0.0
          %2578 = vmatpush2.msra.mxu0 0.0
          %2579 = vmatprep.mubr.f32.mxu0 0.0
          %2580 = vmatmul.mubr.f32.gmra.mxu0 %v2510
          %v2581 = vpop.f32.mrf.mxu0
          %v2582 = vadd.f32 0.0, %v2581
          %v2583 = vpop.f32.mrf.mxu0
          %2584 = vmatprep.mubr.f32.mxu0 0.0
          %2585 = vmatmul.mubr.f32.gmra.mxu0 %v2513
          %v2586 = vpop.f32.mrf.mxu0
          %v2587 = vadd.f32 0.0, %v2586
          %v2588 = vpop.f32.mrf.mxu0
          %2589 = vdwg.mxu0
          %v2590 = vadd.f32 %v2501, %v2582
          %v2591 = vadd.f32 %v2506, %v2587
          %v2592 = vadd.f32 %v2590, %v1477
          %v2593 = vadd.f32 %v2591, %v1477
          %2596 = vrot.lane.b32.xlu0 %v2592, 127
          %v2597 = vpop.permute.xlu0 %2596
          %2598 = vrot.lane.b32.xlu0 %v2593, 127
          %v2599 = vpop.permute.xlu0 %2598
          %v2602 = vmax.f32 %v2592, %v2597
          %v2603 = vmax.f32 %v2593, %v2599
          %2606 = vrot.lane.b32.xlu0 %v2602, 127
          %v2607 = vpop.permute.xlu0 %2606
          %2608 = vrot.lane.b32.xlu0 %v2603, 127
          %v2609 = vpop.permute.xlu0 %2608
          %v2612 = vmax.f32 %v2592, %v2607
          %v2613 = vmax.f32 %v2593, %v2609
          %v2614 = vsub.f32 %v2592, %v2612
          %v2615 = vsub.f32 %v2593, %v2613
          %v2616 = vmul.f32 %v2614, 1.442695
          %v2617 = vpow.pop %v2616
          %v2618 = vmul.f32 %v2615, 1.442695
          %v2619 = vpow.pop %v2618
          %2622 = vrot.lane.b32.xlu0 %v2612, 1
          %v2623 = vpop.permute.xlu0 %2622
          %2624 = vrot.lane.b32.xlu0 %v2613, 1
          %v2625 = vpop.permute.xlu0 %2624
          %v2628 = vsub.f32 %v2592, %v2623
          %v2629 = vsub.f32 %v2593, %v2625
          %v2630 = vmul.f32 %v2628, 1.442695
          %v2631 = vpow.pop %v2630
          %v2632 = vmul.f32 %v2629, 1.442695
          %v2633 = vpow.pop %v2632
          %2634 = vrot.lane.b32.xlu0 %v2612, 2
          %v2635 = vpop.permute.xlu0 %2634
          %2636 = vrot.lane.b32.xlu0 %v2613, 2
          %v2637 = vpop.permute.xlu0 %2636
          %v2640 = vsub.f32 %v2592, %v2635
          %v2641 = vsub.f32 %v2593, %v2637
          %v2642 = vmul.f32 %v2640, 1.442695
          %v2643 = vpow.pop %v2642
          %v2644 = vmul.f32 %v2641, 1.442695
          %v2645 = vpow.pop %v2644
          %2648 = vrot.lane.b32.xlu0 %v2631, 127
          %v2649 = vpop.permute.xlu0 %2648
          %2650 = vrot.lane.b32.xlu0 %v2633, 127
          %v2651 = vpop.permute.xlu0 %2650
          %v2654 = vadd.f32 %v2617, %v2649
          %v2655 = vadd.f32 %v2619, %v2651
          %2658 = vrot.lane.b32.xlu0 %v2643, 126
          %v2659 = vpop.permute.xlu0 %2658
          %2660 = vrot.lane.b32.xlu0 %v2645, 126
          %v2661 = vpop.permute.xlu0 %2660
          %v2664 = vadd.f32 %v2654, %v2659
          %v2665 = vadd.f32 %v2655, %v2661
          %v2666 = vrcp.pop %v2664
          %v2667 = vrcp.pop %v2665
          %v2668 = vmul.f32 %v2617, %v2666
          %v2669 = vmul.f32 %v2619, %v2667
          %v2670 = vpack.c.bf16 %v2669, %v2668
          %2673 = vrot.lane.b32.xlu0 %v2666, 1
          %v2674 = vpop.permute.xlu0 %2673
          %2675 = vrot.lane.b32.xlu0 %v2667, 1
          %v2676 = vpop.permute.xlu0 %2675
          %v2679 = vmul.f32 %v2631, %v2674
          %v2680 = vmul.f32 %v2633, %v2676
          %v2681 = vpack.c.bf16 %v2680, %v2679
          %2682 = vrot.lane.b32.xlu0 %v2666, 2
          %v2683 = vpop.permute.xlu0 %2682
          %2684 = vrot.lane.b32.xlu0 %v2667, 2
          %v2685 = vpop.permute.xlu0 %2684
          %v2688 = vmul.f32 %v2643, %v2683
          %v2689 = vmul.f32 %v2645, %v2685
          %v2690 = vpack.c.bf16 %v2689, %v2688
          %2692 = vset.pattern.permute.xlu0 0
          %2693 = vperm.xlu0 %2692, %v2670
          %v2694 = vpop.permute.xlu0 %2693
          %v2697 = vunpack.c.l.s4 839922192
          %v2698 = vunpack.c.0.s8 %v2697
          %v2699 = vlaneseq
          %v2700 = vshrl.u32 %v2699, 7
          %v2701 = vsub.s32 %v2698, %v2700
          %v2702 = vrot.slane %v2694, %v2701
          %v2704 = vunpack.c.l.s4 1985246804
          %v2705 = vunpack.c.0.s8 %v2704
          %v2706 = vlaneseq
          %v2707 = vshrl.u32 %v2706, 7
          %v2708 = vsub.s32 %v2705, %v2707
          %v2709 = vrot.slane %v2694, %v2708
          %v2712 = vmul.bf16 %v2190, %v2702
          %v2713 = vmul.bf16 %v2191, %v2709
          %2715 = vset.pattern.permute.xlu0 1
          %2716 = vperm.xlu0 %2715, %v2681
          %v2717 = vpop.permute.xlu0 %2716
          %v2720 = vunpack.c.l.s4 839922192
          %v2721 = vunpack.c.0.s8 %v2720
          %v2722 = vlaneseq
          %v2723 = vshrl.u32 %v2722, 7
          %v2724 = vsub.s32 %v2721, %v2723
          %v2725 = vrot.slane %v2717, %v2724
          %v2727 = vunpack.c.l.s4 1985246804
          %v2728 = vunpack.c.0.s8 %v2727
          %v2729 = vlaneseq
          %v2730 = vshrl.u32 %v2729, 7
          %v2731 = vsub.s32 %v2728, %v2730
          %v2732 = vrot.slane %v2717, %v2731
          %v2735 = vmul.bf16 %v2194, %v2725
          %v2736 = vmul.bf16 %v2195, %v2732
          %v2737 = vadd.bf16 %v2712, %v2735
          %v2738 = vadd.bf16 %v2713, %v2736
          %2740 = vset.pattern.permute.xlu0 2
          %2741 = vperm.xlu0 %2740, %v2690
          %v2742 = vpop.permute.xlu0 %2741
          %v2745 = vunpack.c.l.s4 839922192
          %v2746 = vunpack.c.0.s8 %v2745
          %v2747 = vlaneseq
          %v2748 = vshrl.u32 %v2747, 7
          %v2749 = vsub.s32 %v2746, %v2748
          %v2750 = vrot.slane %v2742, %v2749
          %v2752 = vunpack.c.l.s4 1985246804
          %v2753 = vunpack.c.0.s8 %v2752
          %v2754 = vlaneseq
          %v2755 = vshrl.u32 %v2754, 7
          %v2756 = vsub.s32 %v2753, %v2755
          %v2757 = vrot.slane %v2742, %v2756
          %v2760 = vmul.bf16 %v2198, %v2750
          %v2761 = vmul.bf16 %v2199, %v2757
          %v2762 = vadd.bf16 %v2737, %v2760
          %v2763 = vadd.bf16 %v2738, %v2761
          %2764 = vst [vmem:[#allocation2 + $0x8] sm:$0xf] %v2762
          %2765 = vst [vmem:[#allocation2 + $0xc] sm:$0xf] %v2763
        $region80: #{asff3_pallas.1} parent=71 // pred_fallthru
          _
        %p2766 = scmp.eq.s32.totalorder %s32, 3
        // Predicated region
        $region81: #{asff3_pallas.1} parent=71 // pred_check
          %p2767 = pneg %p2766
        $region82: #{asff3_pallas.1} parent=71 // pred_check_branch
          %2769 = sbr.rel (%p2767) target = $region84
        $region83: #{asff3_pallas.1} parent=71 // pred_region
          %s2770 = scalar_lea.vmem [#allocation2], 120
          %2771 = vst [vmem:[%s2770 + $0x8] sm:$0xf] 0
          %2772 = vst [vmem:[%s2770 + $0xc] sm:$0xf] 0
        $region84: #{asff3_pallas.1} parent=71 // pred_fallthru
          _
        %p2773 = scmp.lt.s32.totalorder %s32, 3
        // Predicated region
        $region85: #{asff3_pallas.1} parent=71 // pred_check
          %p2774 = pneg %p2773
        $region86: #{asff3_pallas.1} parent=71 // pred_check_branch
          %2776 = sbr.rel (%p2774) target = $region88
        $region87: #{asff3_pallas.1} parent=71 // pred_region
          %s2777 = sadd.s32 %s495, 4
          %s2778 = smul.u32 %s2777, 2
          %s2779 = smul.addr %s2778, 4
          %s2780 = scalar_lea.vmem %s482, %s2779
          %v2781 = vld [vmem:[%s2780] sm:$0xf]
          %v2782 = vld [vmem:[%s2780 + $0x4] sm:$0xf]
          %s2783 = smul.addr %s2778, 4
          %s2784 = scalar_lea.vmem %s487, %s2783
          %v2785 = vld [vmem:[%s2784] sm:$0xf]
          %v2786 = vld [vmem:[%s2784 + $0x4] sm:$0xf]
          %s2787 = smul.addr %s2778, 4
          %s2788 = scalar_lea.vmem %s492, %s2787
          %v2789 = vld [vmem:[%s2788] sm:$0xf]
          %v2790 = vld [vmem:[%s2788 + $0x4] sm:$0xf]
          %v2793 = vunpack.c.l.b16 %v2781
          %v2794 = vunpack.c.l.b16 %v2782
          %v2795 = vpack.c.b16 %v2794, %v2793
          %2797 = vmatprep.subr.bf16.mxu0 0
          %2798 = vmatpush1.bf16.msra.mxu0 %v693
          %2799 = vmatprep.subr.bf16.mxu0 0
          %2800 = vmatpush1.bf16.msra.mxu0 %v692
          %2801 = vmatprep.subr.bf16.mxu0 0
          %2802 = vmatpush1.bf16.msra.mxu0 %v691
          %2803 = vmatprep.subr.bf16.mxu0 0
          %2804 = vmatpush1.bf16.msra.mxu0 %v690
          %2805 = vmatprep.subr.bf16.mxu0 0
          %2806 = vmatpush1.bf16.msra.mxu0 %v689
          %2807 = vmatprep.subr.bf16.mxu0 0
          %2808 = vmatpush1.bf16.msra.mxu0 %v688
          %2809 = vmatprep.subr.bf16.mxu0 0
          %2810 = vmatpush1.bf16.msra.mxu0 %v687
          %2811 = vmatprep.subr.bf16.mxu0 0
          %2812 = vmatpush1.bf16.msra.mxu0 %v686
          %2813 = vmatprep.subr.bf16.mxu0 0
          %2814 = vmatpush2.bf16.msra.mxu0 0
          %2815 = vmatprep.subr.bf16.mxu0 0
          %2816 = vmatpush2.bf16.msra.mxu0 0
          %2817 = vmatprep.subr.bf16.mxu0 0
          %2818 = vmatpush2.bf16.msra.mxu0 0
          %2819 = vmatprep.subr.bf16.mxu0 0
          %2820 = vmatpush2.bf16.msra.mxu0 0
          %2821 = vmatprep.subr.bf16.mxu0 0
          %2822 = vmatpush2.bf16.msra.mxu0 0
          %2823 = vmatprep.subr.bf16.mxu0 0
          %2824 = vmatpush2.bf16.msra.mxu0 0
          %2825 = vmatprep.subr.bf16.mxu0 0
          %2826 = vmatpush2.bf16.msra.mxu0 0
          %2827 = vmatprep.subr.bf16.mxu0 0
          %2828 = vmatpush2.bf16.msra.mxu0 0
          %2829 = vmatprep.mubr.bf16.mxu0 0
          %2830 = vmatmul.mubr.bf16.gmra.mxu0 %v2795
          %v2831 = vpop.f32.mrf.mxu0
          %v2832 = vadd.f32 %v628, %v2831
          %v2833 = vpop.f32.mrf.mxu0
          %v2834 = vpop.f32.mrf.mxu0
          %v2835 = vadd.f32 %v628, %v2834
          %v2836 = vpop.f32.mrf.mxu0
          %2837 = vdwg.mxu0
          %v2838 = vmax.f32 %v2832, 0.0
          %v2839 = vmax.f32 %v2835, 0.0
          %v2842 = vunpack.c.l.b16 %v2785
          %v2843 = vunpack.c.l.b16 %v2786
          %v2844 = vpack.c.b16 %v2843, %v2842
          %2846 = vmatprep.subr.bf16.mxu0 0
          %2847 = vmatpush1.bf16.msra.mxu0 %v844
          %2848 = vmatprep.subr.bf16.mxu0 0
          %2849 = vmatpush1.bf16.msra.mxu0 %v843
          %2850 = vmatprep.subr.bf16.mxu0 0
          %2851 = vmatpush1.bf16.msra.mxu0 %v842
          %2852 = vmatprep.subr.bf16.mxu0 0
          %2853 = vmatpush1.bf16.msra.mxu0 %v841
          %2854 = vmatprep.subr.bf16.mxu0 0
          %2855 = vmatpush1.bf16.msra.mxu0 %v840
          %2856 = vmatprep.subr.bf16.mxu0 0
          %2857 = vmatpush1.bf16.msra.mxu0 %v839
          %2858 = vmatprep.subr.bf16.mxu0 0
          %2859 = vmatpush1.bf16.msra.mxu0 %v838
          %2860 = vmatprep.subr.bf16.mxu0 0
          %2861 = vmatpush1.bf16.msra.mxu0 %v837
          %2862 = vmatprep.subr.bf16.mxu0 0
          %2863 = vmatpush2.bf16.msra.mxu0 0
          %2864 = vmatprep.subr.bf16.mxu0 0
          %2865 = vmatpush2.bf16.msra.mxu0 0
          %2866 = vmatprep.subr.bf16.mxu0 0
          %2867 = vmatpush2.bf16.msra.mxu0 0
          %2868 = vmatprep.subr.bf16.mxu0 0
          %2869 = vmatpush2.bf16.msra.mxu0 0
          %2870 = vmatprep.subr.bf16.mxu0 0
          %2871 = vmatpush2.bf16.msra.mxu0 0
          %2872 = vmatprep.subr.bf16.mxu0 0
          %2873 = vmatpush2.bf16.msra.mxu0 0
          %2874 = vmatprep.subr.bf16.mxu0 0
          %2875 = vmatpush2.bf16.msra.mxu0 0
          %2876 = vmatprep.subr.bf16.mxu0 0
          %2877 = vmatpush2.bf16.msra.mxu0 0
          %2878 = vmatprep.mubr.bf16.mxu0 0
          %2879 = vmatmul.mubr.bf16.gmra.mxu0 %v2844
          %v2880 = vpop.f32.mrf.mxu0
          %v2881 = vadd.f32 %v779, %v2880
          %v2882 = vpop.f32.mrf.mxu0
          %v2883 = vpop.f32.mrf.mxu0
          %v2884 = vadd.f32 %v779, %v2883
          %v2885 = vpop.f32.mrf.mxu0
          %2886 = vdwg.mxu0
          %v2887 = vmax.f32 %v2881, 0.0
          %v2888 = vmax.f32 %v2884, 0.0
          %v2891 = vunpack.c.l.b16 %v2789
          %v2892 = vunpack.c.l.b16 %v2790
          %v2893 = vpack.c.b16 %v2892, %v2891
          %2895 = vmatprep.subr.bf16.mxu0 0
          %2896 = vmatpush1.bf16.msra.mxu0 %v995
          %2897 = vmatprep.subr.bf16.mxu0 0
          %2898 = vmatpush1.bf16.msra.mxu0 %v994
          %2899 = vmatprep.subr.bf16.mxu0 0
          %2900 = vmatpush1.bf16.msra.mxu0 %v993
          %2901 = vmatprep.subr.bf16.mxu0 0
          %2902 = vmatpush1.bf16.msra.mxu0 %v992
          %2903 = vmatprep.subr.bf16.mxu0 0
          %2904 = vmatpush1.bf16.msra.mxu0 %v991
          %2905 = vmatprep.subr.bf16.mxu0 0
          %2906 = vmatpush1.bf16.msra.mxu0 %v990
          %2907 = vmatprep.subr.bf16.mxu0 0
          %2908 = vmatpush1.bf16.msra.mxu0 %v989
          %2909 = vmatprep.subr.bf16.mxu0 0
          %2910 = vmatpush1.bf16.msra.mxu0 %v988
          %2911 = vmatprep.subr.bf16.mxu0 0
          %2912 = vmatpush2.bf16.msra.mxu0 0
          %2913 = vmatprep.subr.bf16.mxu0 0
          %2914 = vmatpush2.bf16.msra.mxu0 0
          %2915 = vmatprep.subr.bf16.mxu0 0
          %2916 = vmatpush2.bf16.msra.mxu0 0
          %2917 = vmatprep.subr.bf16.mxu0 0
          %2918 = vmatpush2.bf16.msra.mxu0 0
          %2919 = vmatprep.subr.bf16.mxu0 0
          %2920 = vmatpush2.bf16.msra.mxu0 0
          %2921 = vmatprep.subr.bf16.mxu0 0
          %2922 = vmatpush2.bf16.msra.mxu0 0
          %2923 = vmatprep.subr.bf16.mxu0 0
          %2924 = vmatpush2.bf16.msra.mxu0 0
          %2925 = vmatprep.subr.bf16.mxu0 0
          %2926 = vmatpush2.bf16.msra.mxu0 0
          %2927 = vmatprep.mubr.bf16.mxu0 0
          %2928 = vmatmul.mubr.bf16.gmra.mxu0 %v2893
          %v2929 = vpop.f32.mrf.mxu0
          %v2930 = vadd.f32 %v930, %v2929
          %v2931 = vpop.f32.mrf.mxu0
          %v2932 = vpop.f32.mrf.mxu0
          %v2933 = vadd.f32 %v930, %v2932
          %v2934 = vpop.f32.mrf.mxu0
          %2935 = vdwg.mxu0
          %v2936 = vmax.f32 %v2930, 0.0
          %v2937 = vmax.f32 %v2933, 0.0
          %v2939 = vsel %vm1077, %v2887, 0
          %v2942 = vsel %vm1077, %v2888, 0
          %2944 = vmatprep.subr.mxu0 0.0
          %2945 = vmatpush1.msra.mxu0 0.0
          %2946 = vmatprep.subr.mxu0 0.0
          %2947 = vmatpush1.msra.mxu0 0.0
          %2948 = vmatprep.subr.mxu0 0.0
          %2949 = vmatpush1.msra.mxu0 0.0
          %2950 = vmatprep.subr.mxu0 0.0
          %2951 = vmatpush1.msra.mxu0 0.0
          %2952 = vmatprep.subr.mxu0 0.0
          %2953 = vmatpush1.msra.mxu0 0.0
          %2954 = vmatprep.subr.mxu0 0.0
          %2955 = vmatpush1.msra.mxu0 0.0
          %2956 = vmatprep.subr.mxu0 0.0
          %2957 = vmatpush1.msra.mxu0 0.0
          %2958 = vmatprep.subr.mxu0 0.0
          %2959 = vmatpush1.msra.mxu0 0.0
          %2960 = vmatprep.subr.mxu0 0.0
          %2961 = vmatpush1.msra.mxu0 0.0
          %2962 = vmatprep.subr.mxu0 0.0
          %2963 = vmatpush1.msra.mxu0 0.0
          %2964 = vmatprep.subr.mxu0 0.0
          %2965 = vmatpush1.msra.mxu0 0.0
          %2966 = vmatprep.subr.mxu0 0.0
          %2967 = vmatpush1.msra.mxu0 0.0
          %2968 = vmatprep.subr.mxu0 0.0
          %2969 = vmatpush1.msra.mxu0 0.0
          %2970 = vmatprep.subr.mxu0 0.0
          %2971 = vmatpush1.msra.mxu0 0.0
          %2972 = vmatprep.subr.mxu0 0.0
          %2973 = vmatpush1.msra.mxu0 0.0
          %2974 = vmatprep.subr.mxu0 0.0
          %2975 = vmatpush1.msra.mxu0 %v548
          %2976 = vmatprep.subr.mxu0 0.0
          %2977 = vmatpush2.msra.mxu0 0.0
          %2978 = vmatprep.subr.mxu0 0.0
          %2979 = vmatpush2.msra.mxu0 0.0
          %2980 = vmatprep.subr.mxu0 0.0
          %2981 = vmatpush2.msra.mxu0 0.0
          %2982 = vmatprep.subr.mxu0 0.0
          %2983 = vmatpush2.msra.mxu0 0.0
          %2984 = vmatprep.subr.mxu0 0.0
          %2985 = vmatpush2.msra.mxu0 0.0
          %2986 = vmatprep.subr.mxu0 0.0
          %2987 = vmatpush2.msra.mxu0 0.0
          %2988 = vmatprep.subr.mxu0 0.0
          %2989 = vmatpush2.msra.mxu0 0.0
          %2990 = vmatprep.subr.mxu0 0.0
          %2991 = vmatpush2.msra.mxu0 0.0
          %2992 = vmatprep.subr.mxu0 0.0
          %2993 = vmatpush2.msra.mxu0 0.0
          %2994 = vmatprep.subr.mxu0 0.0
          %2995 = vmatpush2.msra.mxu0 0.0
          %2996 = vmatprep.subr.mxu0 0.0
          %2997 = vmatpush2.msra.mxu0 0.0
          %2998 = vmatprep.subr.mxu0 0.0
          %2999 = vmatpush2.msra.mxu0 0.0
          %3000 = vmatprep.subr.mxu0 0.0
          %3001 = vmatpush2.msra.mxu0 0.0
          %3002 = vmatprep.subr.mxu0 0.0
          %3003 = vmatpush2.msra.mxu0 0.0
          %3004 = vmatprep.subr.mxu0 0.0
          %3005 = vmatpush2.msra.mxu0 0.0
          %3006 = vmatprep.subr.mxu0 0.0
          %3007 = vmatpush2.msra.mxu0 0.0
          %3008 = vmatprep.mubr.f32.mxu0 0.0
          %3009 = vmatmul.mubr.f32.gmra.mxu0 %v2939
          %v3010 = vpop.f32.mrf.mxu0
          %v3011 = vadd.f32 0.0, %v3010
          %v3012 = vpop.f32.mrf.mxu0
          %3013 = vmatprep.mubr.f32.mxu0 0.0
          %3014 = vmatmul.mubr.f32.gmra.mxu0 %v2942
          %v3015 = vpop.f32.mrf.mxu0
          %v3016 = vadd.f32 0.0, %v3015
          %v3017 = vpop.f32.mrf.mxu0
          %3018 = vdwg.mxu0
          %v3020 = vsel %vm1077, %v2838, 0
          %v3023 = vsel %vm1077, %v2839, 0
          %3025 = vmatprep.subr.mxu0 0.0
          %3026 = vmatpush1.msra.mxu0 0.0
          %3027 = vmatprep.subr.mxu0 0.0
          %3028 = vmatpush1.msra.mxu0 0.0
          %3029 = vmatprep.subr.mxu0 0.0
          %3030 = vmatpush1.msra.mxu0 0.0
          %3031 = vmatprep.subr.mxu0 0.0
          %3032 = vmatpush1.msra.mxu0 0.0
          %3033 = vmatprep.subr.mxu0 0.0
          %3034 = vmatpush1.msra.mxu0 0.0
          %3035 = vmatprep.subr.mxu0 0.0
          %3036 = vmatpush1.msra.mxu0 0.0
          %3037 = vmatprep.subr.mxu0 0.0
          %3038 = vmatpush1.msra.mxu0 0.0
          %3039 = vmatprep.subr.mxu0 0.0
          %3040 = vmatpush1.msra.mxu0 0.0
          %3041 = vmatprep.subr.mxu0 0.0
          %3042 = vmatpush1.msra.mxu0 0.0
          %3043 = vmatprep.subr.mxu0 0.0
          %3044 = vmatpush1.msra.mxu0 0.0
          %3045 = vmatprep.subr.mxu0 0.0
          %3046 = vmatpush1.msra.mxu0 0.0
          %3047 = vmatprep.subr.mxu0 0.0
          %3048 = vmatpush1.msra.mxu0 0.0
          %3049 = vmatprep.subr.mxu0 0.0
          %3050 = vmatpush1.msra.mxu0 0.0
          %3051 = vmatprep.subr.mxu0 0.0
          %3052 = vmatpush1.msra.mxu0 0.0
          %3053 = vmatprep.subr.mxu0 0.0
          %3054 = vmatpush1.msra.mxu0 0.0
          %3055 = vmatprep.subr.mxu0 0.0
          %3056 = vmatpush1.msra.mxu0 %v547
          %3057 = vmatprep.subr.mxu0 0.0
          %3058 = vmatpush2.msra.mxu0 0.0
          %3059 = vmatprep.subr.mxu0 0.0
          %3060 = vmatpush2.msra.mxu0 0.0
          %3061 = vmatprep.subr.mxu0 0.0
          %3062 = vmatpush2.msra.mxu0 0.0
          %3063 = vmatprep.subr.mxu0 0.0
          %3064 = vmatpush2.msra.mxu0 0.0
          %3065 = vmatprep.subr.mxu0 0.0
          %3066 = vmatpush2.msra.mxu0 0.0
          %3067 = vmatprep.subr.mxu0 0.0
          %3068 = vmatpush2.msra.mxu0 0.0
          %3069 = vmatprep.subr.mxu0 0.0
          %3070 = vmatpush2.msra.mxu0 0.0
          %3071 = vmatprep.subr.mxu0 0.0
          %3072 = vmatpush2.msra.mxu0 0.0
          %3073 = vmatprep.subr.mxu0 0.0
          %3074 = vmatpush2.msra.mxu0 0.0
          %3075 = vmatprep.subr.mxu0 0.0
          %3076 = vmatpush2.msra.mxu0 0.0
          %3077 = vmatprep.subr.mxu0 0.0
          %3078 = vmatpush2.msra.mxu0 0.0
          %3079 = vmatprep.subr.mxu0 0.0
          %3080 = vmatpush2.msra.mxu0 0.0
          %3081 = vmatprep.subr.mxu0 0.0
          %3082 = vmatpush2.msra.mxu0 0.0
          %3083 = vmatprep.subr.mxu0 0.0
          %3084 = vmatpush2.msra.mxu0 0.0
          %3085 = vmatprep.subr.mxu0 0.0
          %3086 = vmatpush2.msra.mxu0 0.0
          %3087 = vmatprep.subr.mxu0 0.0
          %3088 = vmatpush2.msra.mxu0 0.0
          %3089 = vmatprep.mubr.f32.mxu0 0.0
          %3090 = vmatmul.mubr.f32.gmra.mxu0 %v3020
          %v3091 = vpop.f32.mrf.mxu0
          %v3092 = vadd.f32 %v3011, %v3091
          %v3093 = vpop.f32.mrf.mxu0
          %3094 = vmatprep.mubr.f32.mxu0 0.0
          %3095 = vmatmul.mubr.f32.gmra.mxu0 %v3023
          %v3096 = vpop.f32.mrf.mxu0
          %v3097 = vadd.f32 %v3016, %v3096
          %v3098 = vpop.f32.mrf.mxu0
          %3099 = vdwg.mxu0
          %v3101 = vsel %vm1077, %v2936, 0
          %v3104 = vsel %vm1077, %v2937, 0
          %3106 = vmatprep.subr.mxu0 0.0
          %3107 = vmatpush1.msra.mxu0 0.0
          %3108 = vmatprep.subr.mxu0 0.0
          %3109 = vmatpush1.msra.mxu0 0.0
          %3110 = vmatprep.subr.mxu0 0.0
          %3111 = vmatpush1.msra.mxu0 0.0
          %3112 = vmatprep.subr.mxu0 0.0
          %3113 = vmatpush1.msra.mxu0 0.0
          %3114 = vmatprep.subr.mxu0 0.0
          %3115 = vmatpush1.msra.mxu0 0.0
          %3116 = vmatprep.subr.mxu0 0.0
          %3117 = vmatpush1.msra.mxu0 0.0
          %3118 = vmatprep.subr.mxu0 0.0
          %3119 = vmatpush1.msra.mxu0 0.0
          %3120 = vmatprep.subr.mxu0 0.0
          %3121 = vmatpush1.msra.mxu0 0.0
          %3122 = vmatprep.subr.mxu0 0.0
          %3123 = vmatpush1.msra.mxu0 0.0
          %3124 = vmatprep.subr.mxu0 0.0
          %3125 = vmatpush1.msra.mxu0 0.0
          %3126 = vmatprep.subr.mxu0 0.0
          %3127 = vmatpush1.msra.mxu0 0.0
          %3128 = vmatprep.subr.mxu0 0.0
          %3129 = vmatpush1.msra.mxu0 0.0
          %3130 = vmatprep.subr.mxu0 0.0
          %3131 = vmatpush1.msra.mxu0 0.0
          %3132 = vmatprep.subr.mxu0 0.0
          %3133 = vmatpush1.msra.mxu0 0.0
          %3134 = vmatprep.subr.mxu0 0.0
          %3135 = vmatpush1.msra.mxu0 0.0
          %3136 = vmatprep.subr.mxu0 0.0
          %3137 = vmatpush1.msra.mxu0 %v549
          %3138 = vmatprep.subr.mxu0 0.0
          %3139 = vmatpush2.msra.mxu0 0.0
          %3140 = vmatprep.subr.mxu0 0.0
          %3141 = vmatpush2.msra.mxu0 0.0
          %3142 = vmatprep.subr.mxu0 0.0
          %3143 = vmatpush2.msra.mxu0 0.0
          %3144 = vmatprep.subr.mxu0 0.0
          %3145 = vmatpush2.msra.mxu0 0.0
          %3146 = vmatprep.subr.mxu0 0.0
          %3147 = vmatpush2.msra.mxu0 0.0
          %3148 = vmatprep.subr.mxu0 0.0
          %3149 = vmatpush2.msra.mxu0 0.0
          %3150 = vmatprep.subr.mxu0 0.0
          %3151 = vmatpush2.msra.mxu0 0.0
          %3152 = vmatprep.subr.mxu0 0.0
          %3153 = vmatpush2.msra.mxu0 0.0
          %3154 = vmatprep.subr.mxu0 0.0
          %3155 = vmatpush2.msra.mxu0 0.0
          %3156 = vmatprep.subr.mxu0 0.0
          %3157 = vmatpush2.msra.mxu0 0.0
          %3158 = vmatprep.subr.mxu0 0.0
          %3159 = vmatpush2.msra.mxu0 0.0
          %3160 = vmatprep.subr.mxu0 0.0
          %3161 = vmatpush2.msra.mxu0 0.0
          %3162 = vmatprep.subr.mxu0 0.0
          %3163 = vmatpush2.msra.mxu0 0.0
          %3164 = vmatprep.subr.mxu0 0.0
          %3165 = vmatpush2.msra.mxu0 0.0
          %3166 = vmatprep.subr.mxu0 0.0
          %3167 = vmatpush2.msra.mxu0 0.0
          %3168 = vmatprep.subr.mxu0 0.0
          %3169 = vmatpush2.msra.mxu0 0.0
          %3170 = vmatprep.mubr.f32.mxu0 0.0
          %3171 = vmatmul.mubr.f32.gmra.mxu0 %v3101
          %v3172 = vpop.f32.mrf.mxu0
          %v3173 = vadd.f32 0.0, %v3172
          %v3174 = vpop.f32.mrf.mxu0
          %3175 = vmatprep.mubr.f32.mxu0 0.0
          %3176 = vmatmul.mubr.f32.gmra.mxu0 %v3104
          %v3177 = vpop.f32.mrf.mxu0
          %v3178 = vadd.f32 0.0, %v3177
          %v3179 = vpop.f32.mrf.mxu0
          %3180 = vdwg.mxu0
          %v3181 = vadd.f32 %v3092, %v3173
          %v3182 = vadd.f32 %v3097, %v3178
          %v3183 = vadd.f32 %v3181, %v1477
          %v3184 = vadd.f32 %v3182, %v1477
          %3187 = vrot.lane.b32.xlu0 %v3183, 127
          %v3188 = vpop.permute.xlu0 %3187
          %3189 = vrot.lane.b32.xlu0 %v3184, 127
          %v3190 = vpop.permute.xlu0 %3189
          %v3193 = vmax.f32 %v3183, %v3188
          %v3194 = vmax.f32 %v3184, %v3190
          %3197 = vrot.lane.b32.xlu0 %v3193, 127
          %v3198 = vpop.permute.xlu0 %3197
          %3199 = vrot.lane.b32.xlu0 %v3194, 127
          %v3200 = vpop.permute.xlu0 %3199
          %v3203 = vmax.f32 %v3183, %v3198
          %v3204 = vmax.f32 %v3184, %v3200
          %v3205 = vsub.f32 %v3183, %v3203
          %v3206 = vsub.f32 %v3184, %v3204
          %v3207 = vmul.f32 %v3205, 1.442695
          %v3208 = vpow.pop %v3207
          %v3209 = vmul.f32 %v3206, 1.442695
          %v3210 = vpow.pop %v3209
          %3213 = vrot.lane.b32.xlu0 %v3203, 1
          %v3214 = vpop.permute.xlu0 %3213
          %3215 = vrot.lane.b32.xlu0 %v3204, 1
          %v3216 = vpop.permute.xlu0 %3215
          %v3219 = vsub.f32 %v3183, %v3214
          %v3220 = vsub.f32 %v3184, %v3216
          %v3221 = vmul.f32 %v3219, 1.442695
          %v3222 = vpow.pop %v3221
          %v3223 = vmul.f32 %v3220, 1.442695
          %v3224 = vpow.pop %v3223
          %3225 = vrot.lane.b32.xlu0 %v3203, 2
          %v3226 = vpop.permute.xlu0 %3225
          %3227 = vrot.lane.b32.xlu0 %v3204, 2
          %v3228 = vpop.permute.xlu0 %3227
          %v3231 = vsub.f32 %v3183, %v3226
          %v3232 = vsub.f32 %v3184, %v3228
          %v3233 = vmul.f32 %v3231, 1.442695
          %v3234 = vpow.pop %v3233
          %v3235 = vmul.f32 %v3232, 1.442695
          %v3236 = vpow.pop %v3235
          %3239 = vrot.lane.b32.xlu0 %v3222, 127
          %v3240 = vpop.permute.xlu0 %3239
          %3241 = vrot.lane.b32.xlu0 %v3224, 127
          %v3242 = vpop.permute.xlu0 %3241
          %v3245 = vadd.f32 %v3208, %v3240
          %v3246 = vadd.f32 %v3210, %v3242
          %3249 = vrot.lane.b32.xlu0 %v3234, 126
          %v3250 = vpop.permute.xlu0 %3249
          %3251 = vrot.lane.b32.xlu0 %v3236, 126
          %v3252 = vpop.permute.xlu0 %3251
          %v3255 = vadd.f32 %v3245, %v3250
          %v3256 = vadd.f32 %v3246, %v3252
          %v3257 = vrcp.pop %v3255
          %v3258 = vrcp.pop %v3256
          %v3259 = vmul.f32 %v3208, %v3257
          %v3260 = vmul.f32 %v3210, %v3258
          %v3261 = vpack.c.bf16 %v3260, %v3259
          %3264 = vrot.lane.b32.xlu0 %v3257, 1
          %v3265 = vpop.permute.xlu0 %3264
          %3266 = vrot.lane.b32.xlu0 %v3258, 1
          %v3267 = vpop.permute.xlu0 %3266
          %v3270 = vmul.f32 %v3222, %v3265
          %v3271 = vmul.f32 %v3224, %v3267
          %v3272 = vpack.c.bf16 %v3271, %v3270
          %3273 = vrot.lane.b32.xlu0 %v3257, 2
          %v3274 = vpop.permute.xlu0 %3273
          %3275 = vrot.lane.b32.xlu0 %v3258, 2
          %v3276 = vpop.permute.xlu0 %3275
          %v3279 = vmul.f32 %v3234, %v3274
          %v3280 = vmul.f32 %v3236, %v3276
          %v3281 = vpack.c.bf16 %v3280, %v3279
          %3283 = vset.pattern.permute.xlu0 0
          %3284 = vperm.xlu0 %3283, %v3261
          %v3285 = vpop.permute.xlu0 %3284
          %v3288 = vunpack.c.l.s4 839922192
          %v3289 = vunpack.c.0.s8 %v3288
          %v3290 = vlaneseq
          %v3291 = vshrl.u32 %v3290, 7
          %v3292 = vsub.s32 %v3289, %v3291
          %v3293 = vrot.slane %v3285, %v3292
          %v3295 = vunpack.c.l.s4 1985246804
          %v3296 = vunpack.c.0.s8 %v3295
          %v3297 = vlaneseq
          %v3298 = vshrl.u32 %v3297, 7
          %v3299 = vsub.s32 %v3296, %v3298
          %v3300 = vrot.slane %v3285, %v3299
          %v3303 = vmul.bf16 %v2781, %v3293
          %v3304 = vmul.bf16 %v2782, %v3300
          %3306 = vset.pattern.permute.xlu0 1
          %3307 = vperm.xlu0 %3306, %v3272
          %v3308 = vpop.permute.xlu0 %3307
          %v3311 = vunpack.c.l.s4 839922192
          %v3312 = vunpack.c.0.s8 %v3311
          %v3313 = vlaneseq
          %v3314 = vshrl.u32 %v3313, 7
          %v3315 = vsub.s32 %v3312, %v3314
          %v3316 = vrot.slane %v3308, %v3315
          %v3318 = vunpack.c.l.s4 1985246804
          %v3319 = vunpack.c.0.s8 %v3318
          %v3320 = vlaneseq
          %v3321 = vshrl.u32 %v3320, 7
          %v3322 = vsub.s32 %v3319, %v3321
          %v3323 = vrot.slane %v3308, %v3322
          %v3326 = vmul.bf16 %v2785, %v3316
          %v3327 = vmul.bf16 %v2786, %v3323
          %v3328 = vadd.bf16 %v3303, %v3326
          %v3329 = vadd.bf16 %v3304, %v3327
          %3331 = vset.pattern.permute.xlu0 2
          %3332 = vperm.xlu0 %3331, %v3281
          %v3333 = vpop.permute.xlu0 %3332
          %v3336 = vunpack.c.l.s4 839922192
          %v3337 = vunpack.c.0.s8 %v3336
          %v3338 = vlaneseq
          %v3339 = vshrl.u32 %v3338, 7
          %v3340 = vsub.s32 %v3337, %v3339
          %v3341 = vrot.slane %v3333, %v3340
          %v3343 = vunpack.c.l.s4 1985246804
          %v3344 = vunpack.c.0.s8 %v3343
          %v3345 = vlaneseq
          %v3346 = vshrl.u32 %v3345, 7
          %v3347 = vsub.s32 %v3344, %v3346
          %v3348 = vrot.slane %v3333, %v3347
          %v3351 = vmul.bf16 %v2789, %v3341
          %v3352 = vmul.bf16 %v2790, %v3348
          %v3353 = vadd.bf16 %v3328, %v3351
          %v3354 = vadd.bf16 %v3329, %v3352
          %s3355 = scalar_lea.vmem [#allocation2], 120
          %3356 = vst [vmem:[%s3355 + $0x8] sm:$0xf] %v3353
          %3357 = vst [vmem:[%s3355 + $0xc] sm:$0xf] %v3354
        $region88: #{asff3_pallas.1} parent=71 // pred_fallthru
          _
        %v3358 = vld [vmem:[#allocation2 + $0x4] sm:$0x8]
        %v3359 = vld [vmem:[#allocation2 + $0x8] sm:$0xf]
        %v3360 = vld [vmem:[#allocation2 + $0xc] sm:$0xf]
        %v3361 = vld [vmem:[#allocation2 + $0x1c] sm:$0x8]
        %v3362 = vld [vmem:[#allocation2 + $0x20] sm:$0xf]
        %v3363 = vld [vmem:[#allocation2 + $0x24] sm:$0xf]
        %v3364 = vld [vmem:[#allocation2 + $0x34] sm:$0x8]
        %v3365 = vld [vmem:[#allocation2 + $0x38] sm:$0xf]
        %v3366 = vld [vmem:[#allocation2 + $0x3c] sm:$0xf]
        %v3367 = vld [vmem:[#allocation2 + $0x4c] sm:$0x8]
        %v3368 = vld [vmem:[#allocation2 + $0x50] sm:$0xf]
        %v3369 = vld [vmem:[#allocation2 + $0x54] sm:$0xf]
        %v3370 = vld [vmem:[#allocation2 + $0x64] sm:$0x8]
        %v3371 = vld [vmem:[#allocation2 + $0x68] sm:$0xf]
        %v3372 = vld [vmem:[#allocation2 + $0x6c] sm:$0xf]
        %v3373 = vld [vmem:[#allocation2 + $0x7c] sm:$0x8]
        %v3374 = vld [vmem:[#allocation2 + $0x80] sm:$0xf]
        %v3375 = vld [vmem:[#allocation2 + $0x84] sm:$0xf]
        %vm3376 = vsmask.f32 4368
        %vm3377 = vmor %vm573, %vm3376
        %v3379 = vshrl.u32 %v3358, 16
        %v3381 = vrot.slane %v3379, 7
        %v3382 = vrot.slane %v3381, 4
        %v3384 = vshrl.u32 %v3359, 16
        %v3386 = vrot.slane %v3384, 7
        %v3387 = vshll.u32 %v3359, 16
        %v3389 = vor.u32 %v3386, %v3387
        %v3390 = vsel %vm3377, %v3382, %v3389
        %v3391 = vrot.slane %v3386, 4
        %v3393 = vshrl.u32 %v3360, 16
        %v3395 = vrot.slane %v3393, 7
        %v3396 = vshll.u32 %v3360, 16
        %v3398 = vor.u32 %v3395, %v3396
        %v3399 = vsel %vm3377, %v3391, %v3398
        %v3401 = vshrl.u32 %v3361, 16
        %v3403 = vrot.slane %v3401, 7
        %v3404 = vrot.slane %v3403, 4
        %v3406 = vshrl.u32 %v3362, 16
        %v3408 = vrot.slane %v3406, 7
        %v3409 = vshll.u32 %v3362, 16
        %v3411 = vor.u32 %v3408, %v3409
        %v3412 = vsel %vm3377, %v3404, %v3411
        %v3413 = vrot.slane %v3408, 4
        %v3415 = vshrl.u32 %v3363, 16
        %v3417 = vrot.slane %v3415, 7
        %v3418 = vshll.u32 %v3363, 16
        %v3420 = vor.u32 %v3417, %v3418
        %v3421 = vsel %vm3377, %v3413, %v3420
        %v3423 = vshrl.u32 %v3364, 16
        %v3425 = vrot.slane %v3423, 7
        %v3426 = vrot.slane %v3425, 4
        %v3428 = vshrl.u32 %v3365, 16
        %v3430 = vrot.slane %v3428, 7
        %v3431 = vshll.u32 %v3365, 16
        %v3433 = vor.u32 %v3430, %v3431
        %v3434 = vsel %vm3377, %v3426, %v3433
        %v3435 = vrot.slane %v3430, 4
        %v3437 = vshrl.u32 %v3366, 16
        %v3439 = vrot.slane %v3437, 7
        %v3440 = vshll.u32 %v3366, 16
        %v3442 = vor.u32 %v3439, %v3440
        %v3443 = vsel %vm3377, %v3435, %v3442
        %v3445 = vshrl.u32 %v3367, 16
        %v3447 = vrot.slane %v3445, 7
        %v3448 = vrot.slane %v3447, 4
        %v3450 = vshrl.u32 %v3368, 16
        %v3452 = vrot.slane %v3450, 7
        %v3453 = vshll.u32 %v3368, 16
        %v3455 = vor.u32 %v3452, %v3453
        %v3456 = vsel %vm3377, %v3448, %v3455
        %v3457 = vrot.slane %v3452, 4
        %v3459 = vshrl.u32 %v3369, 16
        %v3461 = vrot.slane %v3459, 7
        %v3462 = vshll.u32 %v3369, 16
        %v3464 = vor.u32 %v3461, %v3462
        %v3465 = vsel %vm3377, %v3457, %v3464
        %v3466 = vld [vmem:[%s11] sm:$0xf]
        %v3467 = vld [vmem:[%s11 + $0x4] sm:$0xf]
        %v3468 = vld [vmem:[%s11 + $0x8] sm:$0xf]
        %v3469 = vld [vmem:[%s11 + $0xc] sm:$0xf]
        %v3470 = vld [vmem:[%s11 + $0x10] sm:$0xf]
        %v3471 = vld [vmem:[%s11 + $0x14] sm:$0xf]
        %v3472 = vld [vmem:[%s11 + $0x18] sm:$0xf]
        %v3473 = vld [vmem:[%s11 + $0x1c] sm:$0xf]
        %v3474 = vld [vmem:[%s11 + $0x20] sm:$0xf]
        %v3475 = vld [vmem:[%s11 + $0x24] sm:$0xf]
        %v3476 = vld [vmem:[%s11 + $0x28] sm:$0xf]
        %v3477 = vld [vmem:[%s11 + $0x2c] sm:$0xf]
        %v3478 = vld [vmem:[%s11 + $0x30] sm:$0xf]
        %v3479 = vld [vmem:[%s11 + $0x34] sm:$0xf]
        %v3480 = vld [vmem:[%s11 + $0x38] sm:$0xf]
        %v3481 = vld [vmem:[%s11 + $0x3c] sm:$0xf]
        %v3483 = vshrl.u32 %v3370, 16
        %v3485 = vrot.slane %v3483, 7
        %v3486 = vrot.slane %v3485, 4
        %v3488 = vshrl.u32 %v3371, 16
        %v3490 = vrot.slane %v3488, 7
        %v3491 = vshll.u32 %v3371, 16
        %v3493 = vor.u32 %v3490, %v3491
        %v3494 = vsel %vm3377, %v3486, %v3493
        %v3495 = vrot.slane %v3490, 4
        %v3497 = vshrl.u32 %v3372, 16
        %v3499 = vrot.slane %v3497, 7
        %v3500 = vshll.u32 %v3372, 16
        %v3502 = vor.u32 %v3499, %v3500
        %v3503 = vsel %vm3377, %v3495, %v3502
        %v3504 = vld [vmem:[%s11 + $0xc0] sm:$0xf]
        %v3505 = vld [vmem:[%s11 + $0xc4] sm:$0xf]
        %v3506 = vld [vmem:[%s11 + $0xc8] sm:$0xf]
        %v3507 = vld [vmem:[%s11 + $0xcc] sm:$0xf]
        %v3508 = vld [vmem:[%s11 + $0xd0] sm:$0xf]
        %v3509 = vld [vmem:[%s11 + $0xd4] sm:$0xf]
        %v3510 = vld [vmem:[%s11 + $0xd8] sm:$0xf]
        %v3511 = vld [vmem:[%s11 + $0xdc] sm:$0xf]
        %v3512 = vld [vmem:[%s11 + $0xe0] sm:$0xf]
        %v3513 = vld [vmem:[%s11 + $0xe4] sm:$0xf]
        %v3514 = vld [vmem:[%s11 + $0xe8] sm:$0xf]
        %v3515 = vld [vmem:[%s11 + $0xec] sm:$0xf]
        %v3516 = vld [vmem:[%s11 + $0xf0] sm:$0xf]
        %v3517 = vld [vmem:[%s11 + $0xf4] sm:$0xf]
        %v3518 = vld [vmem:[%s11 + $0xf8] sm:$0xf]
        %v3519 = vld [vmem:[%s11 + $0xfc] sm:$0xf]
        %v3520 = vunpack.c.l.b16 %v3412
        %v3521 = vunpack.c.l.b16 %v3421
        %v3522 = vunpack.c.l.b16 %v3434
        %v3523 = vunpack.c.l.b16 %v3443
        %v3524 = vunpack.c.l.b16 %v3456
        %v3525 = vunpack.c.l.b16 %v3465
        %v3526 = vunpack.c.l.b16 %v3494
        %v3527 = vunpack.c.l.b16 %v3503
        %v3528 = vpack.c.b16 %v3521, %v3520
        %v3529 = vpack.c.b16 %v3523, %v3522
        %v3530 = vpack.c.b16 %v3525, %v3524
        %v3531 = vpack.c.b16 %v3527, %v3526
        %v3552 = vunpack.c.l.b16 %v3504
        %v3553 = vunpack.c.l.b16 %v3505
        %v3554 = vunpack.c.l.b16 %v3506
        %v3555 = vunpack.c.l.b16 %v3507
        %v3556 = vunpack.c.l.b16 %v3508
        %v3557 = vunpack.c.l.b16 %v3509
        %v3558 = vunpack.c.l.b16 %v3510
        %v3559 = vunpack.c.l.b16 %v3511
        %v3560 = vunpack.c.l.b16 %v3512
        %v3561 = vunpack.c.l.b16 %v3513
        %v3562 = vunpack.c.l.b16 %v3514
        %v3563 = vunpack.c.l.b16 %v3515
        %v3564 = vunpack.c.l.b16 %v3516
        %v3565 = vunpack.c.l.b16 %v3517
        %v3566 = vunpack.c.l.b16 %v3518
        %v3567 = vunpack.c.l.b16 %v3519
        %v3568 = vpack.c.b16 %v3553, %v3552
        %v3569 = vpack.c.b16 %v3555, %v3554
        %v3570 = vpack.c.b16 %v3557, %v3556
        %v3571 = vpack.c.b16 %v3559, %v3558
        %v3572 = vpack.c.b16 %v3561, %v3560
        %v3573 = vpack.c.b16 %v3563, %v3562
        %v3574 = vpack.c.b16 %v3565, %v3564
        %v3575 = vpack.c.b16 %v3567, %v3566
        %3584 = vmatprep.subr.bf16.mxu0 0
        %3585 = vmatpush1.bf16.msra.mxu0 %v3575
        %3586 = vmatprep.subr.bf16.mxu0 0
        %3587 = vmatpush1.bf16.msra.mxu0 %v3574
        %3588 = vmatprep.subr.bf16.mxu0 0
        %3589 = vmatpush1.bf16.msra.mxu0 %v3573
        %3590 = vmatprep.subr.bf16.mxu0 0
        %3591 = vmatpush1.bf16.msra.mxu0 %v3572
        %3592 = vmatprep.subr.bf16.mxu0 0
        %3593 = vmatpush1.bf16.msra.mxu0 %v3571
        %3594 = vmatprep.subr.bf16.mxu0 0
        %3595 = vmatpush1.bf16.msra.mxu0 %v3570
        %3596 = vmatprep.subr.bf16.mxu0 0
        %3597 = vmatpush1.bf16.msra.mxu0 %v3569
        %3598 = vmatprep.subr.bf16.mxu0 0
        %3599 = vmatpush1.bf16.msra.mxu0 %v3568
        %3600 = vmatprep.subr.bf16.mxu0 0
        %3601 = vmatpush2.bf16.msra.mxu0 0
        %3602 = vmatprep.subr.bf16.mxu0 0
        %3603 = vmatpush2.bf16.msra.mxu0 0
        %3604 = vmatprep.subr.bf16.mxu0 0
        %3605 = vmatpush2.bf16.msra.mxu0 0
        %3606 = vmatprep.subr.bf16.mxu0 0
        %3607 = vmatpush2.bf16.msra.mxu0 0
        %3608 = vmatprep.subr.bf16.mxu0 0
        %3609 = vmatpush2.bf16.msra.mxu0 0
        %3610 = vmatprep.subr.bf16.mxu0 0
        %3611 = vmatpush2.bf16.msra.mxu0 0
        %3612 = vmatprep.subr.bf16.mxu0 0
        %3613 = vmatpush2.bf16.msra.mxu0 0
        %3614 = vmatprep.subr.bf16.mxu0 0
        %3615 = vmatpush2.bf16.msra.mxu0 0
        %3616 = vmatprep.mubr.bf16.mxu0 0
        %3617 = vmatmul.mubr.bf16.gmra.mxu0 %v3528
        %v3618 = vpop.f32.mrf.mxu0
        %v3619 = vadd.f32 0.0, %v3618
        %v3620 = vpop.f32.mrf.mxu0
        %v3621 = vpop.f32.mrf.mxu0
        %v3622 = vadd.f32 0.0, %v3621
        %v3623 = vpop.f32.mrf.mxu0
        %3624 = vmatprep.mubr.bf16.mxu0 0
        %3625 = vmatmul.mubr.bf16.gmra.mxu0 %v3529
        %v3626 = vpop.f32.mrf.mxu0
        %v3627 = vadd.f32 0.0, %v3626
        %v3628 = vpop.f32.mrf.mxu0
        %v3629 = vpop.f32.mrf.mxu0
        %v3630 = vadd.f32 0.0, %v3629
        %v3631 = vpop.f32.mrf.mxu0
        %3632 = vmatprep.mubr.bf16.mxu0 0
        %3633 = vmatmul.mubr.bf16.gmra.mxu0 %v3530
        %v3634 = vpop.f32.mrf.mxu0
        %v3635 = vadd.f32 0.0, %v3634
        %v3636 = vpop.f32.mrf.mxu0
        %v3637 = vpop.f32.mrf.mxu0
        %v3638 = vadd.f32 0.0, %v3637
        %v3639 = vpop.f32.mrf.mxu0
        %3640 = vmatprep.mubr.bf16.mxu0 0
        %3641 = vmatmul.mubr.bf16.gmra.mxu0 %v3531
        %v3642 = vpop.f32.mrf.mxu0
        %v3643 = vadd.f32 0.0, %v3642
        %v3644 = vpop.f32.mrf.mxu0
        %v3645 = vpop.f32.mrf.mxu0
        %v3646 = vadd.f32 0.0, %v3645
        %v3647 = vpop.f32.mrf.mxu0
        %3648 = vdwg.mxu0
        %v3649 = vunpack.c.l.b16 %v3390
        %v3650 = vunpack.c.l.b16 %v3399
        %v3651 = vpack.c.b16 %v3650, %v3649
        %v3669 = vunpack.c.l.b16 %v3466
        %v3670 = vunpack.c.l.b16 %v3467
        %v3671 = vunpack.c.l.b16 %v3468
        %v3672 = vunpack.c.l.b16 %v3469
        %v3673 = vunpack.c.l.b16 %v3470
        %v3674 = vunpack.c.l.b16 %v3471
        %v3675 = vunpack.c.l.b16 %v3472
        %v3676 = vunpack.c.l.b16 %v3473
        %v3677 = vunpack.c.l.b16 %v3474
        %v3678 = vunpack.c.l.b16 %v3475
        %v3679 = vunpack.c.l.b16 %v3476
        %v3680 = vunpack.c.l.b16 %v3477
        %v3681 = vunpack.c.l.b16 %v3478
        %v3682 = vunpack.c.l.b16 %v3479
        %v3683 = vunpack.c.l.b16 %v3480
        %v3684 = vunpack.c.l.b16 %v3481
        %v3685 = vpack.c.b16 %v3670, %v3669
        %v3686 = vpack.c.b16 %v3672, %v3671
        %v3687 = vpack.c.b16 %v3674, %v3673
        %v3688 = vpack.c.b16 %v3676, %v3675
        %v3689 = vpack.c.b16 %v3678, %v3677
        %v3690 = vpack.c.b16 %v3680, %v3679
        %v3691 = vpack.c.b16 %v3682, %v3681
        %v3692 = vpack.c.b16 %v3684, %v3683
        %3701 = vmatprep.subr.bf16.mxu0 0
        %3702 = vmatpush1.bf16.msra.mxu0 %v3692
        %3703 = vmatprep.subr.bf16.mxu0 0
        %3704 = vmatpush1.bf16.msra.mxu0 %v3691
        %3705 = vmatprep.subr.bf16.mxu0 0
        %3706 = vmatpush1.bf16.msra.mxu0 %v3690
        %3707 = vmatprep.subr.bf16.mxu0 0
        %3708 = vmatpush1.bf16.msra.mxu0 %v3689
        %3709 = vmatprep.subr.bf16.mxu0 0
        %3710 = vmatpush1.bf16.msra.mxu0 %v3688
        %3711 = vmatprep.subr.bf16.mxu0 0
        %3712 = vmatpush1.bf16.msra.mxu0 %v3687
        %3713 = vmatprep.subr.bf16.mxu0 0
        %3714 = vmatpush1.bf16.msra.mxu0 %v3686
        %3715 = vmatprep.subr.bf16.mxu0 0
        %3716 = vmatpush1.bf16.msra.mxu0 %v3685
        %3717 = vmatprep.subr.bf16.mxu0 0
        %3718 = vmatpush2.bf16.msra.mxu0 0
        %3719 = vmatprep.subr.bf16.mxu0 0
        %3720 = vmatpush2.bf16.msra.mxu0 0
        %3721 = vmatprep.subr.bf16.mxu0 0
        %3722 = vmatpush2.bf16.msra.mxu0 0
        %3723 = vmatprep.subr.bf16.mxu0 0
        %3724 = vmatpush2.bf16.msra.mxu0 0
        %3725 = vmatprep.subr.bf16.mxu0 0
        %3726 = vmatpush2.bf16.msra.mxu0 0
        %3727 = vmatprep.subr.bf16.mxu0 0
        %3728 = vmatpush2.bf16.msra.mxu0 0
        %3729 = vmatprep.subr.bf16.mxu0 0
        %3730 = vmatpush2.bf16.msra.mxu0 0
        %3731 = vmatprep.subr.bf16.mxu0 0
        %3732 = vmatpush2.bf16.msra.mxu0 0
        %3733 = vmatprep.mubr.bf16.mxu0 0
        %3734 = vmatmul.mubr.bf16.gmra.mxu0 %v3651
        %v3735 = vpop.f32.mrf.mxu0
        %v3736 = vadd.f32 %v3619, %v3735
        %v3737 = vpop.f32.mrf.mxu0
        %v3738 = vpop.f32.mrf.mxu0
        %v3739 = vadd.f32 %v3622, %v3738
        %v3740 = vpop.f32.mrf.mxu0
        %3741 = vmatprep.mubr.bf16.mxu0 0
        %3742 = vmatmul.mubr.bf16.gmra.mxu0 %v3528
        %v3743 = vpop.f32.mrf.mxu0
        %v3744 = vadd.f32 %v3627, %v3743
        %v3745 = vpop.f32.mrf.mxu0
        %v3746 = vpop.f32.mrf.mxu0
        %v3747 = vadd.f32 %v3630, %v3746
        %v3748 = vpop.f32.mrf.mxu0
        %3749 = vmatprep.mubr.bf16.mxu0 0
        %3750 = vmatmul.mubr.bf16.gmra.mxu0 %v3529
        %v3751 = vpop.f32.mrf.mxu0
        %v3752 = vadd.f32 %v3635, %v3751
        %v3753 = vpop.f32.mrf.mxu0
        %v3754 = vpop.f32.mrf.mxu0
        %v3755 = vadd.f32 %v3638, %v3754
        %v3756 = vpop.f32.mrf.mxu0
        %3757 = vmatprep.mubr.bf16.mxu0 0
        %3758 = vmatmul.mubr.bf16.gmra.mxu0 %v3530
        %v3759 = vpop.f32.mrf.mxu0
        %v3760 = vadd.f32 %v3643, %v3759
        %v3761 = vpop.f32.mrf.mxu0
        %v3762 = vpop.f32.mrf.mxu0
        %v3763 = vadd.f32 %v3646, %v3762
        %v3764 = vpop.f32.mrf.mxu0
        %3765 = vdwg.mxu0
        %v3767 = vshrl.u32 %v3373, 16
        %v3769 = vrot.slane %v3767, 7
        %v3770 = vrot.slane %v3769, 4
        %v3772 = vshrl.u32 %v3374, 16
        %v3774 = vrot.slane %v3772, 7
        %v3775 = vshll.u32 %v3374, 16
        %v3777 = vor.u32 %v3774, %v3775
        %v3778 = vsel %vm3377, %v3770, %v3777
        %v3779 = vrot.slane %v3774, 4
        %v3781 = vshrl.u32 %v3375, 16
        %v3783 = vrot.slane %v3781, 7
        %v3784 = vshll.u32 %v3375, 16
        %v3786 = vor.u32 %v3783, %v3784
        %v3787 = vsel %vm3377, %v3779, %v3786
        %v3788 = vld [vmem:[%s11 + $0x180] sm:$0xf]
        %v3789 = vld [vmem:[%s11 + $0x184] sm:$0xf]
        %v3790 = vld [vmem:[%s11 + $0x188] sm:$0xf]
        %v3791 = vld [vmem:[%s11 + $0x18c] sm:$0xf]
        %v3792 = vld [vmem:[%s11 + $0x190] sm:$0xf]
        %v3793 = vld [vmem:[%s11 + $0x194] sm:$0xf]
        %v3794 = vld [vmem:[%s11 + $0x198] sm:$0xf]
        %v3795 = vld [vmem:[%s11 + $0x19c] sm:$0xf]
        %v3796 = vld [vmem:[%s11 + $0x1a0] sm:$0xf]
        %v3797 = vld [vmem:[%s11 + $0x1a4] sm:$0xf]
        %v3798 = vld [vmem:[%s11 + $0x1a8] sm:$0xf]
        %v3799 = vld [vmem:[%s11 + $0x1ac] sm:$0xf]
        %v3800 = vld [vmem:[%s11 + $0x1b0] sm:$0xf]
        %v3801 = vld [vmem:[%s11 + $0x1b4] sm:$0xf]
        %v3802 = vld [vmem:[%s11 + $0x1b8] sm:$0xf]
        %v3803 = vld [vmem:[%s11 + $0x1bc] sm:$0xf]
        %v3804 = vunpack.c.l.b16 %v3778
        %v3805 = vunpack.c.l.b16 %v3787
        %v3806 = vpack.c.b16 %v3805, %v3804
        %v3824 = vunpack.c.l.b16 %v3788
        %v3825 = vunpack.c.l.b16 %v3789
        %v3826 = vunpack.c.l.b16 %v3790
        %v3827 = vunpack.c.l.b16 %v3791
        %v3828 = vunpack.c.l.b16 %v3792
        %v3829 = vunpack.c.l.b16 %v3793
        %v3830 = vunpack.c.l.b16 %v3794
        %v3831 = vunpack.c.l.b16 %v3795
        %v3832 = vunpack.c.l.b16 %v3796
        %v3833 = vunpack.c.l.b16 %v3797
        %v3834 = vunpack.c.l.b16 %v3798
        %v3835 = vunpack.c.l.b16 %v3799
        %v3836 = vunpack.c.l.b16 %v3800
        %v3837 = vunpack.c.l.b16 %v3801
        %v3838 = vunpack.c.l.b16 %v3802
        %v3839 = vunpack.c.l.b16 %v3803
        %v3840 = vpack.c.b16 %v3825, %v3824
        %v3841 = vpack.c.b16 %v3827, %v3826
        %v3842 = vpack.c.b16 %v3829, %v3828
        %v3843 = vpack.c.b16 %v3831, %v3830
        %v3844 = vpack.c.b16 %v3833, %v3832
        %v3845 = vpack.c.b16 %v3835, %v3834
        %v3846 = vpack.c.b16 %v3837, %v3836
        %v3847 = vpack.c.b16 %v3839, %v3838
        %3856 = vmatprep.subr.bf16.mxu0 0
        %3857 = vmatpush1.bf16.msra.mxu0 %v3847
        %3858 = vmatprep.subr.bf16.mxu0 0
        %3859 = vmatpush1.bf16.msra.mxu0 %v3846
        %3860 = vmatprep.subr.bf16.mxu0 0
        %3861 = vmatpush1.bf16.msra.mxu0 %v3845
        %3862 = vmatprep.subr.bf16.mxu0 0
        %3863 = vmatpush1.bf16.msra.mxu0 %v3844
        %3864 = vmatprep.subr.bf16.mxu0 0
        %3865 = vmatpush1.bf16.msra.mxu0 %v3843
        %3866 = vmatprep.subr.bf16.mxu0 0
        %3867 = vmatpush1.bf16.msra.mxu0 %v3842
        %3868 = vmatprep.subr.bf16.mxu0 0
        %3869 = vmatpush1.bf16.msra.mxu0 %v3841
        %3870 = vmatprep.subr.bf16.mxu0 0
        %3871 = vmatpush1.bf16.msra.mxu0 %v3840
        %3872 = vmatprep.subr.bf16.mxu0 0
        %3873 = vmatpush2.bf16.msra.mxu0 0
        %3874 = vmatprep.subr.bf16.mxu0 0
        %3875 = vmatpush2.bf16.msra.mxu0 0
        %3876 = vmatprep.subr.bf16.mxu0 0
        %3877 = vmatpush2.bf16.msra.mxu0 0
        %3878 = vmatprep.subr.bf16.mxu0 0
        %3879 = vmatpush2.bf16.msra.mxu0 0
        %3880 = vmatprep.subr.bf16.mxu0 0
        %3881 = vmatpush2.bf16.msra.mxu0 0
        %3882 = vmatprep.subr.bf16.mxu0 0
        %3883 = vmatpush2.bf16.msra.mxu0 0
        %3884 = vmatprep.subr.bf16.mxu0 0
        %3885 = vmatpush2.bf16.msra.mxu0 0
        %3886 = vmatprep.subr.bf16.mxu0 0
        %3887 = vmatpush2.bf16.msra.mxu0 0
        %3888 = vmatprep.mubr.bf16.mxu0 0
        %3889 = vmatmul.mubr.bf16.gmra.mxu0 %v3529
        %v3890 = vpop.f32.mrf.mxu0
        %v3891 = vadd.f32 0.0, %v3890
        %v3892 = vpop.f32.mrf.mxu0
        %v3893 = vpop.f32.mrf.mxu0
        %v3894 = vadd.f32 0.0, %v3893
        %v3895 = vpop.f32.mrf.mxu0
        %3896 = vmatprep.mubr.bf16.mxu0 0
        %3897 = vmatmul.mubr.bf16.gmra.mxu0 %v3530
        %v3898 = vpop.f32.mrf.mxu0
        %v3899 = vadd.f32 0.0, %v3898
        %v3900 = vpop.f32.mrf.mxu0
        %v3901 = vpop.f32.mrf.mxu0
        %v3902 = vadd.f32 0.0, %v3901
        %v3903 = vpop.f32.mrf.mxu0
        %3904 = vmatprep.mubr.bf16.mxu0 0
        %3905 = vmatmul.mubr.bf16.gmra.mxu0 %v3531
        %v3906 = vpop.f32.mrf.mxu0
        %v3907 = vadd.f32 0.0, %v3906
        %v3908 = vpop.f32.mrf.mxu0
        %v3909 = vpop.f32.mrf.mxu0
        %v3910 = vadd.f32 0.0, %v3909
        %v3911 = vpop.f32.mrf.mxu0
        %3912 = vmatprep.mubr.bf16.mxu0 0
        %3913 = vmatmul.mubr.bf16.gmra.mxu0 %v3806
        %v3914 = vpop.f32.mrf.mxu0
        %v3915 = vadd.f32 0.0, %v3914
        %v3916 = vpop.f32.mrf.mxu0
        %v3917 = vpop.f32.mrf.mxu0
        %v3918 = vadd.f32 0.0, %v3917
        %v3919 = vpop.f32.mrf.mxu0
        %3920 = vdwg.mxu0
        %v3921 = vadd.f32 %v3736, %v3891
        %v3922 = vadd.f32 %v3739, %v3894
        %v3923 = vadd.f32 %v3744, %v3899
        %v3924 = vadd.f32 %v3747, %v3902
        %v3925 = vadd.f32 %v3752, %v3907
        %v3926 = vadd.f32 %v3755, %v3910
        %v3927 = vadd.f32 %v3760, %v3915
        %v3928 = vadd.f32 %v3763, %v3918
        %v3929 = vld [vmem:[%s11 + $0x40] sm:$0xf]
        %v3930 = vld [vmem:[%s11 + $0x44] sm:$0xf]
        %v3931 = vld [vmem:[%s11 + $0x48] sm:$0xf]
        %v3932 = vld [vmem:[%s11 + $0x4c] sm:$0xf]
        %v3933 = vld [vmem:[%s11 + $0x50] sm:$0xf]
        %v3934 = vld [vmem:[%s11 + $0x54] sm:$0xf]
        %v3935 = vld [vmem:[%s11 + $0x58] sm:$0xf]
        %v3936 = vld [vmem:[%s11 + $0x5c] sm:$0xf]
        %v3937 = vld [vmem:[%s11 + $0x60] sm:$0xf]
        %v3938 = vld [vmem:[%s11 + $0x64] sm:$0xf]
        %v3939 = vld [vmem:[%s11 + $0x68] sm:$0xf]
        %v3940 = vld [vmem:[%s11 + $0x6c] sm:$0xf]
        %v3941 = vld [vmem:[%s11 + $0x70] sm:$0xf]
        %v3942 = vld [vmem:[%s11 + $0x74] sm:$0xf]
        %v3943 = vld [vmem:[%s11 + $0x78] sm:$0xf]
        %v3944 = vld [vmem:[%s11 + $0x7c] sm:$0xf]
        %v3953 = vunpack.c.l.b16 %v3359
        %v3954 = vunpack.c.l.b16 %v3360
        %v3955 = vunpack.c.l.b16 %v3362
        %v3956 = vunpack.c.l.b16 %v3363
        %v3957 = vunpack.c.l.b16 %v3365
        %v3958 = vunpack.c.l.b16 %v3366
        %v3959 = vunpack.c.l.b16 %v3368
        %v3960 = vunpack.c.l.b16 %v3369
        %v3961 = vpack.c.b16 %v3954, %v3953
        %v3962 = vpack.c.b16 %v3956, %v3955
        %v3963 = vpack.c.b16 %v3958, %v3957
        %v3964 = vpack.c.b16 %v3960, %v3959
        %v3985 = vunpack.c.l.b16 %v3929
        %v3986 = vunpack.c.l.b16 %v3930
        %v3987 = vunpack.c.l.b16 %v3931
        %v3988 = vunpack.c.l.b16 %v3932
        %v3989 = vunpack.c.l.b16 %v3933
        %v3990 = vunpack.c.l.b16 %v3934
        %v3991 = vunpack.c.l.b16 %v3935
        %v3992 = vunpack.c.l.b16 %v3936
        %v3993 = vunpack.c.l.b16 %v3937
        %v3994 = vunpack.c.l.b16 %v3938
        %v3995 = vunpack.c.l.b16 %v3939
        %v3996 = vunpack.c.l.b16 %v3940
        %v3997 = vunpack.c.l.b16 %v3941
        %v3998 = vunpack.c.l.b16 %v3942
        %v3999 = vunpack.c.l.b16 %v3943
        %v4000 = vunpack.c.l.b16 %v3944
        %v4001 = vpack.c.b16 %v3986, %v3985
        %v4002 = vpack.c.b16 %v3988, %v3987
        %v4003 = vpack.c.b16 %v3990, %v3989
        %v4004 = vpack.c.b16 %v3992, %v3991
        %v4005 = vpack.c.b16 %v3994, %v3993
        %v4006 = vpack.c.b16 %v3996, %v3995
        %v4007 = vpack.c.b16 %v3998, %v3997
        %v4008 = vpack.c.b16 %v4000, %v3999
        %4017 = vmatprep.subr.bf16.mxu0 0
        %4018 = vmatpush1.bf16.msra.mxu0 %v4008
        %4019 = vmatprep.subr.bf16.mxu0 0
        %4020 = vmatpush1.bf16.msra.mxu0 %v4007
        %4021 = vmatprep.subr.bf16.mxu0 0
        %4022 = vmatpush1.bf16.msra.mxu0 %v4006
        %4023 = vmatprep.subr.bf16.mxu0 0
        %4024 = vmatpush1.bf16.msra.mxu0 %v4005
        %4025 = vmatprep.subr.bf16.mxu0 0
        %4026 = vmatpush1.bf16.msra.mxu0 %v4004
        %4027 = vmatprep.subr.bf16.mxu0 0
        %4028 = vmatpush1.bf16.msra.mxu0 %v4003
        %4029 = vmatprep.subr.bf16.mxu0 0
        %4030 = vmatpush1.bf16.msra.mxu0 %v4002
        %4031 = vmatprep.subr.bf16.mxu0 0
        %4032 = vmatpush1.bf16.msra.mxu0 %v4001
        %4033 = vmatprep.subr.bf16.mxu0 0
        %4034 = vmatpush2.bf16.msra.mxu0 0
        %4035 = vmatprep.subr.bf16.mxu0 0
        %4036 = vmatpush2.bf16.msra.mxu0 0
        %4037 = vmatprep.subr.bf16.mxu0 0
        %4038 = vmatpush2.bf16.msra.mxu0 0
        %4039 = vmatprep.subr.bf16.mxu0 0
        %4040 = vmatpush2.bf16.msra.mxu0 0
        %4041 = vmatprep.subr.bf16.mxu0 0
        %4042 = vmatpush2.bf16.msra.mxu0 0
        %4043 = vmatprep.subr.bf16.mxu0 0
        %4044 = vmatpush2.bf16.msra.mxu0 0
        %4045 = vmatprep.subr.bf16.mxu0 0
        %4046 = vmatpush2.bf16.msra.mxu0 0
        %4047 = vmatprep.subr.bf16.mxu0 0
        %4048 = vmatpush2.bf16.msra.mxu0 0
        %4049 = vmatprep.mubr.bf16.mxu0 0
        %4050 = vmatmul.mubr.bf16.gmra.mxu0 %v3961
        %v4051 = vpop.f32.mrf.mxu0
        %v4052 = vadd.f32 0.0, %v4051
        %v4053 = vpop.f32.mrf.mxu0
        %v4054 = vpop.f32.mrf.mxu0
        %v4055 = vadd.f32 0.0, %v4054
        %v4056 = vpop.f32.mrf.mxu0
        %4057 = vmatprep.mubr.bf16.mxu0 0
        %4058 = vmatmul.mubr.bf16.gmra.mxu0 %v3962
        %v4059 = vpop.f32.mrf.mxu0
        %v4060 = vadd.f32 0.0, %v4059
        %v4061 = vpop.f32.mrf.mxu0
        %v4062 = vpop.f32.mrf.mxu0
        %v4063 = vadd.f32 0.0, %v4062
        %v4064 = vpop.f32.mrf.mxu0
        %4065 = vmatprep.mubr.bf16.mxu0 0
        %4066 = vmatmul.mubr.bf16.gmra.mxu0 %v3963
        %v4067 = vpop.f32.mrf.mxu0
        %v4068 = vadd.f32 0.0, %v4067
        %v4069 = vpop.f32.mrf.mxu0
        %v4070 = vpop.f32.mrf.mxu0
        %v4071 = vadd.f32 0.0, %v4070
        %v4072 = vpop.f32.mrf.mxu0
        %4073 = vmatprep.mubr.bf16.mxu0 0
        %4074 = vmatmul.mubr.bf16.gmra.mxu0 %v3964
        %v4075 = vpop.f32.mrf.mxu0
        %v4076 = vadd.f32 0.0, %v4075
        %v4077 = vpop.f32.mrf.mxu0
        %v4078 = vpop.f32.mrf.mxu0
        %v4079 = vadd.f32 0.0, %v4078
        %v4080 = vpop.f32.mrf.mxu0
        %4081 = vdwg.mxu0
        %v4082 = vadd.f32 %v3921, %v4052
        %v4083 = vadd.f32 %v3922, %v4055
        %v4084 = vadd.f32 %v3923, %v4060
        %v4085 = vadd.f32 %v3924, %v4063
        %v4086 = vadd.f32 %v3925, %v4068
        %v4087 = vadd.f32 %v3926, %v4071
        %v4088 = vadd.f32 %v3927, %v4076
        %v4089 = vadd.f32 %v3928, %v4079
        %v4090 = vld [vmem:[%s11 + $0x100] sm:$0xf]
        %v4091 = vld [vmem:[%s11 + $0x104] sm:$0xf]
        %v4092 = vld [vmem:[%s11 + $0x108] sm:$0xf]
        %v4093 = vld [vmem:[%s11 + $0x10c] sm:$0xf]
        %v4094 = vld [vmem:[%s11 + $0x110] sm:$0xf]
        %v4095 = vld [vmem:[%s11 + $0x114] sm:$0xf]
        %v4096 = vld [vmem:[%s11 + $0x118] sm:$0xf]
        %v4097 = vld [vmem:[%s11 + $0x11c] sm:$0xf]
        %v4098 = vld [vmem:[%s11 + $0x120] sm:$0xf]
        %v4099 = vld [vmem:[%s11 + $0x124] sm:$0xf]
        %v4100 = vld [vmem:[%s11 + $0x128] sm:$0xf]
        %v4101 = vld [vmem:[%s11 + $0x12c] sm:$0xf]
        %v4102 = vld [vmem:[%s11 + $0x130] sm:$0xf]
        %v4103 = vld [vmem:[%s11 + $0x134] sm:$0xf]
        %v4104 = vld [vmem:[%s11 + $0x138] sm:$0xf]
        %v4105 = vld [vmem:[%s11 + $0x13c] sm:$0xf]
        %v4108 = vunpack.c.l.b16 %v3371
        %v4109 = vunpack.c.l.b16 %v3372
        %v4110 = vpack.c.b16 %v4109, %v4108
        %v4128 = vunpack.c.l.b16 %v4090
        %v4129 = vunpack.c.l.b16 %v4091
        %v4130 = vunpack.c.l.b16 %v4092
        %v4131 = vunpack.c.l.b16 %v4093
        %v4132 = vunpack.c.l.b16 %v4094
        %v4133 = vunpack.c.l.b16 %v4095
        %v4134 = vunpack.c.l.b16 %v4096
        %v4135 = vunpack.c.l.b16 %v4097
        %v4136 = vunpack.c.l.b16 %v4098
        %v4137 = vunpack.c.l.b16 %v4099
        %v4138 = vunpack.c.l.b16 %v4100
        %v4139 = vunpack.c.l.b16 %v4101
        %v4140 = vunpack.c.l.b16 %v4102
        %v4141 = vunpack.c.l.b16 %v4103
        %v4142 = vunpack.c.l.b16 %v4104
        %v4143 = vunpack.c.l.b16 %v4105
        %v4144 = vpack.c.b16 %v4129, %v4128
        %v4145 = vpack.c.b16 %v4131, %v4130
        %v4146 = vpack.c.b16 %v4133, %v4132
        %v4147 = vpack.c.b16 %v4135, %v4134
        %v4148 = vpack.c.b16 %v4137, %v4136
        %v4149 = vpack.c.b16 %v4139, %v4138
        %v4150 = vpack.c.b16 %v4141, %v4140
        %v4151 = vpack.c.b16 %v4143, %v4142
        %4160 = vmatprep.subr.bf16.mxu0 0
        %4161 = vmatpush1.bf16.msra.mxu0 %v4151
        %4162 = vmatprep.subr.bf16.mxu0 0
        %4163 = vmatpush1.bf16.msra.mxu0 %v4150
        %4164 = vmatprep.subr.bf16.mxu0 0
        %4165 = vmatpush1.bf16.msra.mxu0 %v4149
        %4166 = vmatprep.subr.bf16.mxu0 0
        %4167 = vmatpush1.bf16.msra.mxu0 %v4148
        %4168 = vmatprep.subr.bf16.mxu0 0
        %4169 = vmatpush1.bf16.msra.mxu0 %v4147
        %4170 = vmatprep.subr.bf16.mxu0 0
        %4171 = vmatpush1.bf16.msra.mxu0 %v4146
        %4172 = vmatprep.subr.bf16.mxu0 0
        %4173 = vmatpush1.bf16.msra.mxu0 %v4145
        %4174 = vmatprep.subr.bf16.mxu0 0
        %4175 = vmatpush1.bf16.msra.mxu0 %v4144
        %4176 = vmatprep.subr.bf16.mxu0 0
        %4177 = vmatpush2.bf16.msra.mxu0 0
        %4178 = vmatprep.subr.bf16.mxu0 0
        %4179 = vmatpush2.bf16.msra.mxu0 0
        %4180 = vmatprep.subr.bf16.mxu0 0
        %4181 = vmatpush2.bf16.msra.mxu0 0
        %4182 = vmatprep.subr.bf16.mxu0 0
        %4183 = vmatpush2.bf16.msra.mxu0 0
        %4184 = vmatprep.subr.bf16.mxu0 0
        %4185 = vmatpush2.bf16.msra.mxu0 0
        %4186 = vmatprep.subr.bf16.mxu0 0
        %4187 = vmatpush2.bf16.msra.mxu0 0
        %4188 = vmatprep.subr.bf16.mxu0 0
        %4189 = vmatpush2.bf16.msra.mxu0 0
        %4190 = vmatprep.subr.bf16.mxu0 0
        %4191 = vmatpush2.bf16.msra.mxu0 0
        %4192 = vmatprep.mubr.bf16.mxu0 0
        %4193 = vmatmul.mubr.bf16.gmra.mxu0 %v3962
        %v4194 = vpop.f32.mrf.mxu0
        %v4195 = vadd.f32 0.0, %v4194
        %v4196 = vpop.f32.mrf.mxu0
        %v4197 = vpop.f32.mrf.mxu0
        %v4198 = vadd.f32 0.0, %v4197
        %v4199 = vpop.f32.mrf.mxu0
        %4200 = vmatprep.mubr.bf16.mxu0 0
        %4201 = vmatmul.mubr.bf16.gmra.mxu0 %v3963
        %v4202 = vpop.f32.mrf.mxu0
        %v4203 = vadd.f32 0.0, %v4202
        %v4204 = vpop.f32.mrf.mxu0
        %v4205 = vpop.f32.mrf.mxu0
        %v4206 = vadd.f32 0.0, %v4205
        %v4207 = vpop.f32.mrf.mxu0
        %4208 = vmatprep.mubr.bf16.mxu0 0
        %4209 = vmatmul.mubr.bf16.gmra.mxu0 %v3964
        %v4210 = vpop.f32.mrf.mxu0
        %v4211 = vadd.f32 0.0, %v4210
        %v4212 = vpop.f32.mrf.mxu0
        %v4213 = vpop.f32.mrf.mxu0
        %v4214 = vadd.f32 0.0, %v4213
        %v4215 = vpop.f32.mrf.mxu0
        %4216 = vmatprep.mubr.bf16.mxu0 0
        %4217 = vmatmul.mubr.bf16.gmra.mxu0 %v4110
        %v4218 = vpop.f32.mrf.mxu0
        %v4219 = vadd.f32 0.0, %v4218
        %v4220 = vpop.f32.mrf.mxu0
        %v4221 = vpop.f32.mrf.mxu0
        %v4222 = vadd.f32 0.0, %v4221
        %v4223 = vpop.f32.mrf.mxu0
        %4224 = vdwg.mxu0
        %v4225 = vadd.f32 %v4082, %v4195
        %v4226 = vadd.f32 %v4083, %v4198
        %v4227 = vadd.f32 %v4084, %v4203
        %v4228 = vadd.f32 %v4085, %v4206
        %v4229 = vadd.f32 %v4086, %v4211
        %v4230 = vadd.f32 %v4087, %v4214
        %v4231 = vadd.f32 %v4088, %v4219
        %v4232 = vadd.f32 %v4089, %v4222
        %v4233 = vld [vmem:[%s11 + $0x1c0] sm:$0xf]
        %v4234 = vld [vmem:[%s11 + $0x1c4] sm:$0xf]
        %v4235 = vld [vmem:[%s11 + $0x1c8] sm:$0xf]
        %v4236 = vld [vmem:[%s11 + $0x1cc] sm:$0xf]
        %v4237 = vld [vmem:[%s11 + $0x1d0] sm:$0xf]
        %v4238 = vld [vmem:[%s11 + $0x1d4] sm:$0xf]
        %v4239 = vld [vmem:[%s11 + $0x1d8] sm:$0xf]
        %v4240 = vld [vmem:[%s11 + $0x1dc] sm:$0xf]
        %v4241 = vld [vmem:[%s11 + $0x1e0] sm:$0xf]
        %v4242 = vld [vmem:[%s11 + $0x1e4] sm:$0xf]
        %v4243 = vld [vmem:[%s11 + $0x1e8] sm:$0xf]
        %v4244 = vld [vmem:[%s11 + $0x1ec] sm:$0xf]
        %v4245 = vld [vmem:[%s11 + $0x1f0] sm:$0xf]
        %v4246 = vld [vmem:[%s11 + $0x1f4] sm:$0xf]
        %v4247 = vld [vmem:[%s11 + $0x1f8] sm:$0xf]
        %v4248 = vld [vmem:[%s11 + $0x1fc] sm:$0xf]
        %v4251 = vunpack.c.l.b16 %v3374
        %v4252 = vunpack.c.l.b16 %v3375
        %v4253 = vpack.c.b16 %v4252, %v4251
        %v4271 = vunpack.c.l.b16 %v4233
        %v4272 = vunpack.c.l.b16 %v4234
        %v4273 = vunpack.c.l.b16 %v4235
        %v4274 = vunpack.c.l.b16 %v4236
        %v4275 = vunpack.c.l.b16 %v4237
        %v4276 = vunpack.c.l.b16 %v4238
        %v4277 = vunpack.c.l.b16 %v4239
        %v4278 = vunpack.c.l.b16 %v4240
        %v4279 = vunpack.c.l.b16 %v4241
        %v4280 = vunpack.c.l.b16 %v4242
        %v4281 = vunpack.c.l.b16 %v4243
        %v4282 = vunpack.c.l.b16 %v4244
        %v4283 = vunpack.c.l.b16 %v4245
        %v4284 = vunpack.c.l.b16 %v4246
        %v4285 = vunpack.c.l.b16 %v4247
        %v4286 = vunpack.c.l.b16 %v4248
        %v4287 = vpack.c.b16 %v4272, %v4271
        %v4288 = vpack.c.b16 %v4274, %v4273
        %v4289 = vpack.c.b16 %v4276, %v4275
        %v4290 = vpack.c.b16 %v4278, %v4277
        %v4291 = vpack.c.b16 %v4280, %v4279
        %v4292 = vpack.c.b16 %v4282, %v4281
        %v4293 = vpack.c.b16 %v4284, %v4283
        %v4294 = vpack.c.b16 %v4286, %v4285
        %4303 = vmatprep.subr.bf16.mxu0 0
        %4304 = vmatpush1.bf16.msra.mxu0 %v4294
        %4305 = vmatprep.subr.bf16.mxu0 0
        %4306 = vmatpush1.bf16.msra.mxu0 %v4293
        %4307 = vmatprep.subr.bf16.mxu0 0
        %4308 = vmatpush1.bf16.msra.mxu0 %v4292
        %4309 = vmatprep.subr.bf16.mxu0 0
        %4310 = vmatpush1.bf16.msra.mxu0 %v4291
        %4311 = vmatprep.subr.bf16.mxu0 0
        %4312 = vmatpush1.bf16.msra.mxu0 %v4290
        %4313 = vmatprep.subr.bf16.mxu0 0
        %4314 = vmatpush1.bf16.msra.mxu0 %v4289
        %4315 = vmatprep.subr.bf16.mxu0 0
        %4316 = vmatpush1.bf16.msra.mxu0 %v4288
        %4317 = vmatprep.subr.bf16.mxu0 0
        %4318 = vmatpush1.bf16.msra.mxu0 %v4287
        %4319 = vmatprep.subr.bf16.mxu0 0
        %4320 = vmatpush2.bf16.msra.mxu0 0
        %4321 = vmatprep.subr.bf16.mxu0 0
        %4322 = vmatpush2.bf16.msra.mxu0 0
        %4323 = vmatprep.subr.bf16.mxu0 0
        %4324 = vmatpush2.bf16.msra.mxu0 0
        %4325 = vmatprep.subr.bf16.mxu0 0
        %4326 = vmatpush2.bf16.msra.mxu0 0
        %4327 = vmatprep.subr.bf16.mxu0 0
        %4328 = vmatpush2.bf16.msra.mxu0 0
        %4329 = vmatprep.subr.bf16.mxu0 0
        %4330 = vmatpush2.bf16.msra.mxu0 0
        %4331 = vmatprep.subr.bf16.mxu0 0
        %4332 = vmatpush2.bf16.msra.mxu0 0
        %4333 = vmatprep.subr.bf16.mxu0 0
        %4334 = vmatpush2.bf16.msra.mxu0 0
        %4335 = vmatprep.mubr.bf16.mxu0 0
        %4336 = vmatmul.mubr.bf16.gmra.mxu0 %v3963
        %v4337 = vpop.f32.mrf.mxu0
        %v4338 = vadd.f32 0.0, %v4337
        %v4339 = vpop.f32.mrf.mxu0
        %v4340 = vpop.f32.mrf.mxu0
        %v4341 = vadd.f32 0.0, %v4340
        %v4342 = vpop.f32.mrf.mxu0
        %4343 = vmatprep.mubr.bf16.mxu0 0
        %4344 = vmatmul.mubr.bf16.gmra.mxu0 %v3964
        %v4345 = vpop.f32.mrf.mxu0
        %v4346 = vadd.f32 0.0, %v4345
        %v4347 = vpop.f32.mrf.mxu0
        %v4348 = vpop.f32.mrf.mxu0
        %v4349 = vadd.f32 0.0, %v4348
        %v4350 = vpop.f32.mrf.mxu0
        %4351 = vmatprep.mubr.bf16.mxu0 0
        %4352 = vmatmul.mubr.bf16.gmra.mxu0 %v4110
        %v4353 = vpop.f32.mrf.mxu0
        %v4354 = vadd.f32 0.0, %v4353
        %v4355 = vpop.f32.mrf.mxu0
        %v4356 = vpop.f32.mrf.mxu0
        %v4357 = vadd.f32 0.0, %v4356
        %v4358 = vpop.f32.mrf.mxu0
        %4359 = vmatprep.mubr.bf16.mxu0 0
        %4360 = vmatmul.mubr.bf16.gmra.mxu0 %v4253
        %v4361 = vpop.f32.mrf.mxu0
        %v4362 = vadd.f32 0.0, %v4361
        %v4363 = vpop.f32.mrf.mxu0
        %v4364 = vpop.f32.mrf.mxu0
        %v4365 = vadd.f32 0.0, %v4364
        %v4366 = vpop.f32.mrf.mxu0
        %4367 = vdwg.mxu0
        %v4368 = vadd.f32 %v4225, %v4338
        %v4369 = vadd.f32 %v4226, %v4341
        %v4370 = vadd.f32 %v4227, %v4346
        %v4371 = vadd.f32 %v4228, %v4349
        %v4372 = vadd.f32 %v4229, %v4354
        %v4373 = vadd.f32 %v4230, %v4357
        %v4374 = vadd.f32 %v4231, %v4362
        %v4375 = vadd.f32 %v4232, %v4365
        %v4376 = vld [vmem:[#allocation2 + $0x8] sm:$0xf]
        %v4377 = vld [vmem:[#allocation2 + $0xc] sm:$0xf]
        %v4378 = vld [vmem:[#allocation2 + $0x10] sm:$0x1]
        %v4379 = vld [vmem:[#allocation2 + $0x20] sm:$0xf]
        %v4380 = vld [vmem:[#allocation2 + $0x24] sm:$0xf]
        %v4381 = vld [vmem:[#allocation2 + $0x28] sm:$0x1]
        %v4382 = vld [vmem:[#allocation2 + $0x38] sm:$0xf]
        %v4383 = vld [vmem:[#allocation2 + $0x3c] sm:$0xf]
        %v4384 = vld [vmem:[#allocation2 + $0x40] sm:$0x1]
        %v4385 = vld [vmem:[#allocation2 + $0x50] sm:$0xf]
        %v4386 = vld [vmem:[#allocation2 + $0x54] sm:$0xf]
        %v4387 = vld [vmem:[#allocation2 + $0x58] sm:$0x1]
        %v4388 = vld [vmem:[#allocation2 + $0x68] sm:$0xf]
        %v4389 = vld [vmem:[#allocation2 + $0x6c] sm:$0xf]
        %v4390 = vld [vmem:[#allocation2 + $0x70] sm:$0x1]
        %v4391 = vld [vmem:[#allocation2 + $0x80] sm:$0xf]
        %v4392 = vld [vmem:[#allocation2 + $0x84] sm:$0xf]
        %v4393 = vld [vmem:[#allocation2 + $0x88] sm:$0x1]
        %vm4394 = vsmask.f32 3328
        %vm4395 = vsmask.f32 7440
        %vm4396 = vmor %vm4394, %vm4395
        %v4398 = vshrl.u32 %v4376, 16
        %v4400 = vrot.slane %v4398, 4
        %v4401 = vshll.u32 %v4376, 16
        %v4403 = vrot.slane %v4401, 5
        %v4404 = vor.u32 %v4400, %v4403
        %v4405 = vrot.slane %v4404, 4
        %v4407 = vshll.u32 %v4377, 16
        %v4409 = vrot.slane %v4407, 5
        %v4410 = vsel %vm4396, %v4405, %v4409
        %v4411 = vshrl.u32 %v4377, 16
        %v4413 = vrot.slane %v4411, 4
        %v4414 = vor.u32 %v4413, %v4409
        %v4415 = vrot.slane %v4414, 4
        %v4417 = vshll.u32 %v4378, 16
        %v4419 = vrot.slane %v4417, 5
        %v4420 = vsel %vm4396, %v4415, %v4419
        %v4422 = vshrl.u32 %v4379, 16
        %v4424 = vrot.slane %v4422, 4
        %v4425 = vshll.u32 %v4379, 16
        %v4427 = vrot.slane %v4425, 5
        %v4428 = vor.u32 %v4424, %v4427
        %v4429 = vrot.slane %v4428, 4
        %v4431 = vshll.u32 %v4380, 16
        %v4433 = vrot.slane %v4431, 5
        %v4434 = vsel %vm4396, %v4429, %v4433
        %v4435 = vshrl.u32 %v4380, 16
        %v4437 = vrot.slane %v4435, 4
        %v4438 = vor.u32 %v4437, %v4433
        %v4439 = vrot.slane %v4438, 4
        %v4441 = vshll.u32 %v4381, 16
        %v4443 = vrot.slane %v4441, 5
        %v4444 = vsel %vm4396, %v4439, %v4443
        %v4446 = vshrl.u32 %v4382, 16
        %v4448 = vrot.slane %v4446, 4
        %v4449 = vshll.u32 %v4382, 16
        %v4451 = vrot.slane %v4449, 5
        %v4452 = vor.u32 %v4448, %v4451
        %v4453 = vrot.slane %v4452, 4
        %v4455 = vshll.u32 %v4383, 16
        %v4457 = vrot.slane %v4455, 5
        %v4458 = vsel %vm4396, %v4453, %v4457
        %v4459 = vshrl.u32 %v4383, 16
        %v4461 = vrot.slane %v4459, 4
        %v4462 = vor.u32 %v4461, %v4457
        %v4463 = vrot.slane %v4462, 4
        %v4465 = vshll.u32 %v4384, 16
        %v4467 = vrot.slane %v4465, 5
        %v4468 = vsel %vm4396, %v4463, %v4467
        %v4470 = vshrl.u32 %v4385, 16
        %v4472 = vrot.slane %v4470, 4
        %v4473 = vshll.u32 %v4385, 16
        %v4475 = vrot.slane %v4473, 5
        %v4476 = vor.u32 %v4472, %v4475
        %v4477 = vrot.slane %v4476, 4
        %v4479 = vshll.u32 %v4386, 16
        %v4481 = vrot.slane %v4479, 5
        %v4482 = vsel %vm4396, %v4477, %v4481
        %v4483 = vshrl.u32 %v4386, 16
        %v4485 = vrot.slane %v4483, 4
        %v4486 = vor.u32 %v4485, %v4481
        %v4487 = vrot.slane %v4486, 4
        %v4489 = vshll.u32 %v4387, 16
        %v4491 = vrot.slane %v4489, 5
        %v4492 = vsel %vm4396, %v4487, %v4491
        %v4493 = vld [vmem:[%s11 + $0x80] sm:$0xf]
        %v4494 = vld [vmem:[%s11 + $0x84] sm:$0xf]
        %v4495 = vld [vmem:[%s11 + $0x88] sm:$0xf]
        %v4496 = vld [vmem:[%s11 + $0x8c] sm:$0xf]
        %v4497 = vld [vmem:[%s11 + $0x90] sm:$0xf]
        %v4498 = vld [vmem:[%s11 + $0x94] sm:$0xf]
        %v4499 = vld [vmem:[%s11 + $0x98] sm:$0xf]
        %v4500 = vld [vmem:[%s11 + $0x9c] sm:$0xf]
        %v4501 = vld [vmem:[%s11 + $0xa0] sm:$0xf]
        %v4502 = vld [vmem:[%s11 + $0xa4] sm:$0xf]
        %v4503 = vld [vmem:[%s11 + $0xa8] sm:$0xf]
        %v4504 = vld [vmem:[%s11 + $0xac] sm:$0xf]
        %v4505 = vld [vmem:[%s11 + $0xb0] sm:$0xf]
        %v4506 = vld [vmem:[%s11 + $0xb4] sm:$0xf]
        %v4507 = vld [vmem:[%s11 + $0xb8] sm:$0xf]
        %v4508 = vld [vmem:[%s11 + $0xbc] sm:$0xf]
        %v4509 = vunpack.c.l.b16 %v4410
        %v4510 = vunpack.c.l.b16 %v4420
        %v4511 = vunpack.c.l.b16 %v4434
        %v4512 = vunpack.c.l.b16 %v4444
        %v4513 = vunpack.c.l.b16 %v4458
        %v4514 = vunpack.c.l.b16 %v4468
        %v4515 = vunpack.c.l.b16 %v4482
        %v4516 = vunpack.c.l.b16 %v4492
        %v4517 = vpack.c.b16 %v4510, %v4509
        %v4518 = vpack.c.b16 %v4512, %v4511
        %v4519 = vpack.c.b16 %v4514, %v4513
        %v4520 = vpack.c.b16 %v4516, %v4515
        %v4541 = vunpack.c.l.b16 %v4493
        %v4542 = vunpack.c.l.b16 %v4494
        %v4543 = vunpack.c.l.b16 %v4495
        %v4544 = vunpack.c.l.b16 %v4496
        %v4545 = vunpack.c.l.b16 %v4497
        %v4546 = vunpack.c.l.b16 %v4498
        %v4547 = vunpack.c.l.b16 %v4499
        %v4548 = vunpack.c.l.b16 %v4500
        %v4549 = vunpack.c.l.b16 %v4501
        %v4550 = vunpack.c.l.b16 %v4502
        %v4551 = vunpack.c.l.b16 %v4503
        %v4552 = vunpack.c.l.b16 %v4504
        %v4553 = vunpack.c.l.b16 %v4505
        %v4554 = vunpack.c.l.b16 %v4506
        %v4555 = vunpack.c.l.b16 %v4507
        %v4556 = vunpack.c.l.b16 %v4508
        %v4557 = vpack.c.b16 %v4542, %v4541
        %v4558 = vpack.c.b16 %v4544, %v4543
        %v4559 = vpack.c.b16 %v4546, %v4545
        %v4560 = vpack.c.b16 %v4548, %v4547
        %v4561 = vpack.c.b16 %v4550, %v4549
        %v4562 = vpack.c.b16 %v4552, %v4551
        %v4563 = vpack.c.b16 %v4554, %v4553
        %v4564 = vpack.c.b16 %v4556, %v4555
        %4573 = vmatprep.subr.bf16.mxu0 0
        %4574 = vmatpush1.bf16.msra.mxu0 %v4564
        %4575 = vmatprep.subr.bf16.mxu0 0
        %4576 = vmatpush1.bf16.msra.mxu0 %v4563
        %4577 = vmatprep.subr.bf16.mxu0 0
        %4578 = vmatpush1.bf16.msra.mxu0 %v4562
        %4579 = vmatprep.subr.bf16.mxu0 0
        %4580 = vmatpush1.bf16.msra.mxu0 %v4561
        %4581 = vmatprep.subr.bf16.mxu0 0
        %4582 = vmatpush1.bf16.msra.mxu0 %v4560
        %4583 = vmatprep.subr.bf16.mxu0 0
        %4584 = vmatpush1.bf16.msra.mxu0 %v4559
        %4585 = vmatprep.subr.bf16.mxu0 0
        %4586 = vmatpush1.bf16.msra.mxu0 %v4558
        %4587 = vmatprep.subr.bf16.mxu0 0
        %4588 = vmatpush1.bf16.msra.mxu0 %v4557
        %4589 = vmatprep.subr.bf16.mxu0 0
        %4590 = vmatpush2.bf16.msra.mxu0 0
        %4591 = vmatprep.subr.bf16.mxu0 0
        %4592 = vmatpush2.bf16.msra.mxu0 0
        %4593 = vmatprep.subr.bf16.mxu0 0
        %4594 = vmatpush2.bf16.msra.mxu0 0
        %4595 = vmatprep.subr.bf16.mxu0 0
        %4596 = vmatpush2.bf16.msra.mxu0 0
        %4597 = vmatprep.subr.bf16.mxu0 0
        %4598 = vmatpush2.bf16.msra.mxu0 0
        %4599 = vmatprep.subr.bf16.mxu0 0
        %4600 = vmatpush2.bf16.msra.mxu0 0
        %4601 = vmatprep.subr.bf16.mxu0 0
        %4602 = vmatpush2.bf16.msra.mxu0 0
        %4603 = vmatprep.subr.bf16.mxu0 0
        %4604 = vmatpush2.bf16.msra.mxu0 0
        %4605 = vmatprep.mubr.bf16.mxu0 0
        %4606 = vmatmul.mubr.bf16.gmra.mxu0 %v4517
        %v4607 = vpop.f32.mrf.mxu0
        %v4608 = vadd.f32 0.0, %v4607
        %v4609 = vpop.f32.mrf.mxu0
        %v4610 = vpop.f32.mrf.mxu0
        %v4611 = vadd.f32 0.0, %v4610
        %v4612 = vpop.f32.mrf.mxu0
        %4613 = vmatprep.mubr.bf16.mxu0 0
        %4614 = vmatmul.mubr.bf16.gmra.mxu0 %v4518
        %v4615 = vpop.f32.mrf.mxu0
        %v4616 = vadd.f32 0.0, %v4615
        %v4617 = vpop.f32.mrf.mxu0
        %v4618 = vpop.f32.mrf.mxu0
        %v4619 = vadd.f32 0.0, %v4618
        %v4620 = vpop.f32.mrf.mxu0
        %4621 = vmatprep.mubr.bf16.mxu0 0
        %4622 = vmatmul.mubr.bf16.gmra.mxu0 %v4519
        %v4623 = vpop.f32.mrf.mxu0
        %v4624 = vadd.f32 0.0, %v4623
        %v4625 = vpop.f32.mrf.mxu0
        %v4626 = vpop.f32.mrf.mxu0
        %v4627 = vadd.f32 0.0, %v4626
        %v4628 = vpop.f32.mrf.mxu0
        %4629 = vmatprep.mubr.bf16.mxu0 0
        %4630 = vmatmul.mubr.bf16.gmra.mxu0 %v4520
        %v4631 = vpop.f32.mrf.mxu0
        %v4632 = vadd.f32 0.0, %v4631
        %v4633 = vpop.f32.mrf.mxu0
        %v4634 = vpop.f32.mrf.mxu0
        %v4635 = vadd.f32 0.0, %v4634
        %v4636 = vpop.f32.mrf.mxu0
        %4637 = vdwg.mxu0
        %v4638 = vadd.f32 %v4368, %v4608
        %v4639 = vadd.f32 %v4369, %v4611
        %v4640 = vadd.f32 %v4370, %v4616
        %v4641 = vadd.f32 %v4371, %v4619
        %v4642 = vadd.f32 %v4372, %v4624
        %v4643 = vadd.f32 %v4373, %v4627
        %v4644 = vadd.f32 %v4374, %v4632
        %v4645 = vadd.f32 %v4375, %v4635
        %v4647 = vshrl.u32 %v4388, 16
        %v4649 = vrot.slane %v4647, 4
        %v4650 = vshll.u32 %v4388, 16
        %v4652 = vrot.slane %v4650, 5
        %v4653 = vor.u32 %v4649, %v4652
        %v4654 = vrot.slane %v4653, 4
        %v4656 = vshll.u32 %v4389, 16
        %v4658 = vrot.slane %v4656, 5
        %v4659 = vsel %vm4396, %v4654, %v4658
        %v4660 = vshrl.u32 %v4389, 16
        %v4662 = vrot.slane %v4660, 4
        %v4663 = vor.u32 %v4662, %v4658
        %v4664 = vrot.slane %v4663, 4
        %v4666 = vshll.u32 %v4390, 16
        %v4668 = vrot.slane %v4666, 5
        %v4669 = vsel %vm4396, %v4664, %v4668
        %v4670 = vld [vmem:[%s11 + $0x140] sm:$0xf]
        %v4671 = vld [vmem:[%s11 + $0x144] sm:$0xf]
        %v4672 = vld [vmem:[%s11 + $0x148] sm:$0xf]
        %v4673 = vld [vmem:[%s11 + $0x14c] sm:$0xf]
        %v4674 = vld [vmem:[%s11 + $0x150] sm:$0xf]
        %v4675 = vld [vmem:[%s11 + $0x154] sm:$0xf]
        %v4676 = vld [vmem:[%s11 + $0x158] sm:$0xf]
        %v4677 = vld [vmem:[%s11 + $0x15c] sm:$0xf]
        %v4678 = vld [vmem:[%s11 + $0x160] sm:$0xf]
        %v4679 = vld [vmem:[%s11 + $0x164] sm:$0xf]
        %v4680 = vld [vmem:[%s11 + $0x168] sm:$0xf]
        %v4681 = vld [vmem:[%s11 + $0x16c] sm:$0xf]
        %v4682 = vld [vmem:[%s11 + $0x170] sm:$0xf]
        %v4683 = vld [vmem:[%s11 + $0x174] sm:$0xf]
        %v4684 = vld [vmem:[%s11 + $0x178] sm:$0xf]
        %v4685 = vld [vmem:[%s11 + $0x17c] sm:$0xf]
        %v4686 = vunpack.c.l.b16 %v4659
        %v4687 = vunpack.c.l.b16 %v4669
        %v4688 = vpack.c.b16 %v4687, %v4686
        %v4706 = vunpack.c.l.b16 %v4670
        %v4707 = vunpack.c.l.b16 %v4671
        %v4708 = vunpack.c.l.b16 %v4672
        %v4709 = vunpack.c.l.b16 %v4673
        %v4710 = vunpack.c.l.b16 %v4674
        %v4711 = vunpack.c.l.b16 %v4675
        %v4712 = vunpack.c.l.b16 %v4676
        %v4713 = vunpack.c.l.b16 %v4677
        %v4714 = vunpack.c.l.b16 %v4678
        %v4715 = vunpack.c.l.b16 %v4679
        %v4716 = vunpack.c.l.b16 %v4680
        %v4717 = vunpack.c.l.b16 %v4681
        %v4718 = vunpack.c.l.b16 %v4682
        %v4719 = vunpack.c.l.b16 %v4683
        %v4720 = vunpack.c.l.b16 %v4684
        %v4721 = vunpack.c.l.b16 %v4685
        %v4722 = vpack.c.b16 %v4707, %v4706
        %v4723 = vpack.c.b16 %v4709, %v4708
        %v4724 = vpack.c.b16 %v4711, %v4710
        %v4725 = vpack.c.b16 %v4713, %v4712
        %v4726 = vpack.c.b16 %v4715, %v4714
        %v4727 = vpack.c.b16 %v4717, %v4716
        %v4728 = vpack.c.b16 %v4719, %v4718
        %v4729 = vpack.c.b16 %v4721, %v4720
        %4738 = vmatprep.subr.bf16.mxu0 0
        %4739 = vmatpush1.bf16.msra.mxu0 %v4729
        %4740 = vmatprep.subr.bf16.mxu0 0
        %4741 = vmatpush1.bf16.msra.mxu0 %v4728
        %4742 = vmatprep.subr.bf16.mxu0 0
        %4743 = vmatpush1.bf16.msra.mxu0 %v4727
        %4744 = vmatprep.subr.bf16.mxu0 0
        %4745 = vmatpush1.bf16.msra.mxu0 %v4726
        %4746 = vmatprep.subr.bf16.mxu0 0
        %4747 = vmatpush1.bf16.msra.mxu0 %v4725
        %4748 = vmatprep.subr.bf16.mxu0 0
        %4749 = vmatpush1.bf16.msra.mxu0 %v4724
        %4750 = vmatprep.subr.bf16.mxu0 0
        %4751 = vmatpush1.bf16.msra.mxu0 %v4723
        %4752 = vmatprep.subr.bf16.mxu0 0
        %4753 = vmatpush1.bf16.msra.mxu0 %v4722
        %4754 = vmatprep.subr.bf16.mxu0 0
        %4755 = vmatpush2.bf16.msra.mxu0 0
        %4756 = vmatprep.subr.bf16.mxu0 0
        %4757 = vmatpush2.bf16.msra.mxu0 0
        %4758 = vmatprep.subr.bf16.mxu0 0
        %4759 = vmatpush2.bf16.msra.mxu0 0
        %4760 = vmatprep.subr.bf16.mxu0 0
        %4761 = vmatpush2.bf16.msra.mxu0 0
        %4762 = vmatprep.subr.bf16.mxu0 0
        %4763 = vmatpush2.bf16.msra.mxu0 0
        %4764 = vmatprep.subr.bf16.mxu0 0
        %4765 = vmatpush2.bf16.msra.mxu0 0
        %4766 = vmatprep.subr.bf16.mxu0 0
        %4767 = vmatpush2.bf16.msra.mxu0 0
        %4768 = vmatprep.subr.bf16.mxu0 0
        %4769 = vmatpush2.bf16.msra.mxu0 0
        %4770 = vmatprep.mubr.bf16.mxu0 0
        %4771 = vmatmul.mubr.bf16.gmra.mxu0 %v4518
        %v4772 = vpop.f32.mrf.mxu0
        %v4773 = vadd.f32 0.0, %v4772
        %v4774 = vpop.f32.mrf.mxu0
        %v4775 = vpop.f32.mrf.mxu0
        %v4776 = vadd.f32 0.0, %v4775
        %v4777 = vpop.f32.mrf.mxu0
        %4778 = vmatprep.mubr.bf16.mxu0 0
        %4779 = vmatmul.mubr.bf16.gmra.mxu0 %v4519
        %v4780 = vpop.f32.mrf.mxu0
        %v4781 = vadd.f32 0.0, %v4780
        %v4782 = vpop.f32.mrf.mxu0
        %v4783 = vpop.f32.mrf.mxu0
        %v4784 = vadd.f32 0.0, %v4783
        %v4785 = vpop.f32.mrf.mxu0
        %4786 = vmatprep.mubr.bf16.mxu0 0
        %4787 = vmatmul.mubr.bf16.gmra.mxu0 %v4520
        %v4788 = vpop.f32.mrf.mxu0
        %v4789 = vadd.f32 0.0, %v4788
        %v4790 = vpop.f32.mrf.mxu0
        %v4791 = vpop.f32.mrf.mxu0
        %v4792 = vadd.f32 0.0, %v4791
        %v4793 = vpop.f32.mrf.mxu0
        %4794 = vmatprep.mubr.bf16.mxu0 0
        %4795 = vmatmul.mubr.bf16.gmra.mxu0 %v4688
        %v4796 = vpop.f32.mrf.mxu0
        %v4797 = vadd.f32 0.0, %v4796
        %v4798 = vpop.f32.mrf.mxu0
        %v4799 = vpop.f32.mrf.mxu0
        %v4800 = vadd.f32 0.0, %v4799
        %v4801 = vpop.f32.mrf.mxu0
        %4802 = vdwg.mxu0
        %v4803 = vadd.f32 %v4638, %v4773
        %v4804 = vadd.f32 %v4639, %v4776
        %v4805 = vadd.f32 %v4640, %v4781
        %v4806 = vadd.f32 %v4641, %v4784
        %v4807 = vadd.f32 %v4642, %v4789
        %v4808 = vadd.f32 %v4643, %v4792
        %v4809 = vadd.f32 %v4644, %v4797
        %v4810 = vadd.f32 %v4645, %v4800
        %v4812 = vshrl.u32 %v4391, 16
        %v4814 = vrot.slane %v4812, 4
        %v4815 = vshll.u32 %v4391, 16
        %v4817 = vrot.slane %v4815, 5
        %v4818 = vor.u32 %v4814, %v4817
        %v4819 = vrot.slane %v4818, 4
        %v4821 = vshll.u32 %v4392, 16
        %v4823 = vrot.slane %v4821, 5
        %v4824 = vsel %vm4396, %v4819, %v4823
        %v4825 = vshrl.u32 %v4392, 16
        %v4827 = vrot.slane %v4825, 4
        %v4828 = vor.u32 %v4827, %v4823
        %v4829 = vrot.slane %v4828, 4
        %v4831 = vshll.u32 %v4393, 16
        %v4833 = vrot.slane %v4831, 5
        %v4834 = vsel %vm4396, %v4829, %v4833
        %v4835 = vld [vmem:[%s11 + $0x200] sm:$0xf]
        %v4836 = vld [vmem:[%s11 + $0x204] sm:$0xf]
        %v4837 = vld [vmem:[%s11 + $0x208] sm:$0xf]
        %v4838 = vld [vmem:[%s11 + $0x20c] sm:$0xf]
        %v4839 = vld [vmem:[%s11 + $0x210] sm:$0xf]
        %v4840 = vld [vmem:[%s11 + $0x214] sm:$0xf]
        %v4841 = vld [vmem:[%s11 + $0x218] sm:$0xf]
        %v4842 = vld [vmem:[%s11 + $0x21c] sm:$0xf]
        %v4843 = vld [vmem:[%s11 + $0x220] sm:$0xf]
        %v4844 = vld [vmem:[%s11 + $0x224] sm:$0xf]
        %v4845 = vld [vmem:[%s11 + $0x228] sm:$0xf]
        %v4846 = vld [vmem:[%s11 + $0x22c] sm:$0xf]
        %v4847 = vld [vmem:[%s11 + $0x230] sm:$0xf]
        %v4848 = vld [vmem:[%s11 + $0x234] sm:$0xf]
        %v4849 = vld [vmem:[%s11 + $0x238] sm:$0xf]
        %v4850 = vld [vmem:[%s11 + $0x23c] sm:$0xf]
        %v4851 = vunpack.c.l.b16 %v4824
        %v4852 = vunpack.c.l.b16 %v4834
        %v4853 = vpack.c.b16 %v4852, %v4851
        %v4871 = vunpack.c.l.b16 %v4835
        %v4872 = vunpack.c.l.b16 %v4836
        %v4873 = vunpack.c.l.b16 %v4837
        %v4874 = vunpack.c.l.b16 %v4838
        %v4875 = vunpack.c.l.b16 %v4839
        %v4876 = vunpack.c.l.b16 %v4840
        %v4877 = vunpack.c.l.b16 %v4841
        %v4878 = vunpack.c.l.b16 %v4842
        %v4879 = vunpack.c.l.b16 %v4843
        %v4880 = vunpack.c.l.b16 %v4844
        %v4881 = vunpack.c.l.b16 %v4845
        %v4882 = vunpack.c.l.b16 %v4846
        %v4883 = vunpack.c.l.b16 %v4847
        %v4884 = vunpack.c.l.b16 %v4848
        %v4885 = vunpack.c.l.b16 %v4849
        %v4886 = vunpack.c.l.b16 %v4850
        %v4887 = vpack.c.b16 %v4872, %v4871
        %v4888 = vpack.c.b16 %v4874, %v4873
        %v4889 = vpack.c.b16 %v4876, %v4875
        %v4890 = vpack.c.b16 %v4878, %v4877
        %v4891 = vpack.c.b16 %v4880, %v4879
        %v4892 = vpack.c.b16 %v4882, %v4881
        %v4893 = vpack.c.b16 %v4884, %v4883
        %v4894 = vpack.c.b16 %v4886, %v4885
        %4903 = vmatprep.subr.bf16.mxu0 0
        %4904 = vmatpush1.bf16.msra.mxu0 %v4894
        %4905 = vmatprep.subr.bf16.mxu0 0
        %4906 = vmatpush1.bf16.msra.mxu0 %v4893
        %4907 = vmatprep.subr.bf16.mxu0 0
        %4908 = vmatpush1.bf16.msra.mxu0 %v4892
        %4909 = vmatprep.subr.bf16.mxu0 0
        %4910 = vmatpush1.bf16.msra.mxu0 %v4891
        %4911 = vmatprep.subr.bf16.mxu0 0
        %4912 = vmatpush1.bf16.msra.mxu0 %v4890
        %4913 = vmatprep.subr.bf16.mxu0 0
        %4914 = vmatpush1.bf16.msra.mxu0 %v4889
        %4915 = vmatprep.subr.bf16.mxu0 0
        %4916 = vmatpush1.bf16.msra.mxu0 %v4888
        %4917 = vmatprep.subr.bf16.mxu0 0
        %4918 = vmatpush1.bf16.msra.mxu0 %v4887
        %4919 = vmatprep.subr.bf16.mxu0 0
        %4920 = vmatpush2.bf16.msra.mxu0 0
        %4921 = vmatprep.subr.bf16.mxu0 0
        %4922 = vmatpush2.bf16.msra.mxu0 0
        %4923 = vmatprep.subr.bf16.mxu0 0
        %4924 = vmatpush2.bf16.msra.mxu0 0
        %4925 = vmatprep.subr.bf16.mxu0 0
        %4926 = vmatpush2.bf16.msra.mxu0 0
        %4927 = vmatprep.subr.bf16.mxu0 0
        %4928 = vmatpush2.bf16.msra.mxu0 0
        %4929 = vmatprep.subr.bf16.mxu0 0
        %4930 = vmatpush2.bf16.msra.mxu0 0
        %4931 = vmatprep.subr.bf16.mxu0 0
        %4932 = vmatpush2.bf16.msra.mxu0 0
        %4933 = vmatprep.subr.bf16.mxu0 0
        %4934 = vmatpush2.bf16.msra.mxu0 0
        %4935 = vmatprep.mubr.bf16.mxu0 0
        %4936 = vmatmul.mubr.bf16.gmra.mxu0 %v4519
        %v4937 = vpop.f32.mrf.mxu0
        %v4938 = vadd.f32 0.0, %v4937
        %v4939 = vpop.f32.mrf.mxu0
        %v4940 = vpop.f32.mrf.mxu0
        %v4941 = vadd.f32 0.0, %v4940
        %v4942 = vpop.f32.mrf.mxu0
        %4943 = vmatprep.mubr.bf16.mxu0 0
        %4944 = vmatmul.mubr.bf16.gmra.mxu0 %v4520
        %v4945 = vpop.f32.mrf.mxu0
        %v4946 = vadd.f32 0.0, %v4945
        %v4947 = vpop.f32.mrf.mxu0
        %v4948 = vpop.f32.mrf.mxu0
        %v4949 = vadd.f32 0.0, %v4948
        %v4950 = vpop.f32.mrf.mxu0
        %4951 = vmatprep.mubr.bf16.mxu0 0
        %4952 = vmatmul.mubr.bf16.gmra.mxu0 %v4688
        %v4953 = vpop.f32.mrf.mxu0
        %v4954 = vadd.f32 0.0, %v4953
        %v4955 = vpop.f32.mrf.mxu0
        %v4956 = vpop.f32.mrf.mxu0
        %v4957 = vadd.f32 0.0, %v4956
        %v4958 = vpop.f32.mrf.mxu0
        %4959 = vmatprep.mubr.bf16.mxu0 0
        %4960 = vmatmul.mubr.bf16.gmra.mxu0 %v4853
        %v4961 = vpop.f32.mrf.mxu0
        %v4962 = vadd.f32 0.0, %v4961
        %v4963 = vpop.f32.mrf.mxu0
        %v4964 = vpop.f32.mrf.mxu0
        %v4965 = vadd.f32 0.0, %v4964
        %v4966 = vpop.f32.mrf.mxu0
        %4967 = vdwg.mxu0
        %v4968 = vadd.f32 %v4803, %v4938
        %v4969 = vadd.f32 %v4804, %v4941
        %v4970 = vadd.f32 %v4805, %v4946
        %v4971 = vadd.f32 %v4806, %v4949
        %v4972 = vadd.f32 %v4807, %v4954
        %v4973 = vadd.f32 %v4808, %v4957
        %v4974 = vadd.f32 %v4809, %v4962
        %v4975 = vadd.f32 %v4810, %v4965
        %v4976 = vld [vmem:[%s12] sm:$0x1]
        %v4978 = vlaneseq
        %v4979 = vshrl.u32 %v4978, 7
        %v4980 = vsub.s32 0, %v4979
        %v4981 = vrot.slane %v4976, %v4980
        %v4983 = vadd.f32 %v4968, %v4981
        %v4984 = vadd.f32 %v4969, %v4981
        %v4985 = vadd.f32 %v4970, %v4981
        %v4986 = vadd.f32 %v4971, %v4981
        %v4987 = vadd.f32 %v4972, %v4981
        %v4988 = vadd.f32 %v4973, %v4981
        %v4989 = vadd.f32 %v4974, %v4981
        %v4990 = vadd.f32 %v4975, %v4981
        %v4991 = vmax.f32 %v4983, 0.0
        %v4992 = vmax.f32 %v4984, 0.0
        %v4993 = vmax.f32 %v4985, 0.0
        %v4994 = vmax.f32 %v4986, 0.0
        %v4995 = vmax.f32 %v4987, 0.0
        %v4996 = vmax.f32 %v4988, 0.0
        %v4997 = vmax.f32 %v4989, 0.0
        %v4998 = vmax.f32 %v4990, 0.0
        %4999 = vst [vmem:[%s477] sm:$0xff] %v4991
        %5000 = vst [vmem:[%s477 + $0x8] sm:$0xff] %v4992
        %5001 = vst [vmem:[%s477 + $0x10] sm:$0xff] %v4993
        %5002 = vst [vmem:[%s477 + $0x18] sm:$0xff] %v4994
        %5003 = vst [vmem:[%s477 + $0x20] sm:$0xff] %v4995
        %5004 = vst [vmem:[%s477 + $0x28] sm:$0xff] %v4996
        %5005 = vst [vmem:[%s477 + $0x30] sm:$0xff] %v4997
        %5006 = vst [vmem:[%s477 + $0x38] sm:$0xff] %v4998
        %s5007 = sand.u32 %s337, 1
        %s5008 = scalar_lea.sflag [#allocation4], %s5007
        %s5009 = sand.u32 %s337, 1
        %s5010 = smul.addr %s5009, 64
        %s5011 = scalar_lea.vmem [#allocation3], %s5010
        // Predicated region
        $region89: #{asff3_pallas.1} parent=71 // pred_check
          %p5012 = pneg %p347
        $region90: #{asff3_pallas.1} parent=71 // pred_check_branch
          %5014 = sbr.rel (%p5012) target = $region92
        $region91: #{asff3_pallas.1} parent=71 // pred_region
          %s5015 = smul.u32 4, %s32
          %s5017 = ssub.s32 1024, 1024
          %5018 = vsyncadd %s5008, %s5017
          %s5019 = smul.addr %s5015, 2
          %s5020 = smul.addr %s31, 32
          %s5021 = sadd.s32 %s5019, %s5020
          %s5022 = smul.addr %s5021, 128
          %s5023 = scalar_lea.hbm %s13, %s5022
          %s5024 = sshll.u32 %s5011, 4
          %s5025 = int_to_ptr.vmem [resolvable:$true] %s5024
          %5030 = dma.vmem_to_hbm [thread:$0]  %s5025, 1024, %s5023, %s5008, 128, 128, 8
        $region92: #{asff3_pallas.1} parent=71 // pred_fallthru
          _
      $region72: #{asff3_pallas.1} parent=5 // pred_fallthru
        _
      %p5031 = scmp.le.s32.totalorder 2, %s22
      // Predicated region
      $region93: #{asff3_pallas.1} parent=5 // pred_check
        %p5032 = pneg %p5031
      $region94: #{asff3_pallas.1} parent=5 // pred_check_branch
        %5034 = sbr.rel (%p5032) target = $region96
      $region95: #{asff3_pallas.1} parent=5 // pred_region
        %s5035 = ssub.s32 %s22, 2
        // Predicated region
        $region97: #{asff3_pallas.1} parent=95 // pred_check
          %p5036 = pneg %p353
        $region98: #{asff3_pallas.1} parent=95 // pred_check_branch
          %5038 = sbr.rel (%p5036) target = $region100
        $region99: #{asff3_pallas.1} parent=95 // pred_region
          %s5039 = sand.u32 %s338, 1
          %s5040 = scalar_lea.sflag [#allocation4], %s5039
          %s5041 = sand.u32 %s338, 1
          %s5042 = smul.addr %s5041, 64
          %s5043 = scalar_lea.vmem [#allocation3], %s5042
          %5044 = dma.done %s5040, 1024
        $region100: #{asff3_pallas.1} parent=95 // pred_fallthru
          _
      $region96: #{asff3_pallas.1} parent=5 // pred_fallthru
        _
    $region6: #{asff3_pallas.1} parent=1 // loop_footer
      %s26 = sadd.s32 1, %s22
    $region7: #{asff3_pallas.1} parent=1 // loop_footer_branch
      %21 = sbr.rel target = $region3
    $region8: #{asff3_pallas.1} parent=1 // loop_exit
      _
    %5045 = vsyncpa [#allocation4], 1
    %s5046 = scalar_lea.sflag [#allocation4], 1
    %5047 = vsyncpa %s5046, 1

</llo_original>
